<compile_context>
chip_gen: v6e
topology: v6e:2x2x1
jax: 0.10.0
libtpu: 0.0.40
codegen_flags: <defaults>
</compile_context>

<pallas_src>
import math

import jax
import jax.numpy as jnp
from jax.experimental import pallas as pl
from jax.experimental.pallas import tpu as pltpu


MATMUL_INPUT_DTYPE = jnp.bfloat16   # bf16 MXU inputs + bf16 kernel boundaries, f32 accum.


def _round_up(x, m):
    return ((x + m - 1) // m) * m


def _detect_vmem_bytes():
    try:
        return int(pltpu.get_tpu_info().vmem_capacity_bytes)
    except Exception:               # interpret mode / older jax / non-TPU fallback
        return 64 * 1024 * 1024


_VMEM_BYTES = _detect_vmem_bytes()
_BIG_VMEM = _VMEM_BYTES >= 96 * 1024 * 1024        # v5e / v6e (128 MiB per core)
VMEM_LIMIT = (96 if _BIG_VMEM else 32) * 1024 * 1024
MATMUL_TM = 512 if _BIG_VMEM else 256              # bigger row tiles where VMEM is plentiful
LN_TR = 512 if _BIG_VMEM else 256
ATTN_T_BLK = 256                                   # feeds the 2x256^2 MXU on v6e/v7x


# --------------------------------------------------------------------------- matmul


def _matmul_kernel(act):
    def kernel(a_ref, b_ref, bias_ref, o_ref, acc_ref):
        @pl.when(pl.program_id(2) == 0)
        def _init():
            acc_ref[...] = jnp.zeros_like(acc_ref)

        acc_ref[...] += jnp.dot(a_ref[...], b_ref[...],
                                preferred_element_type=jnp.float32)

        @pl.when(pl.program_id(2) == pl.num_programs(2) - 1)
        def _finalize():
            out = acc_ref[...] + bias_ref[...]          # f32 epilogue
            if act == "relu":
                out = jnp.maximum(out, 0.0)
            elif act == "glu":
                half = out.shape[-1] // 2               # paired linear|gate tile
                out = out[:, :half] * jax.nn.sigmoid(out[:, half:])
            o_ref[...] = out.astype(o_ref.dtype)

    return kernel


def matmul_bias(a, b, bias, act="none", tm=None, tn=256, tk=512):
    """o = act(a @ b + bias). a:(M,K) b:(K,N) bias:(N,). act in {none, relu, glu}.

    Tiled Pallas matmul: f32 VMEM accumulator, bf16 MXU inputs, fused bias +
    ReLU/GLU epilogue, bf16 lane-dense output.  For GLU the weight columns are
    interleaved tile-by-tile (linear|gate pairs) so the N grid axis stays parallel.
    """
    if tm is None:
        tm = MATMUL_TM
    M, K = a.shape
    K2, N = b.shape
    assert K == K2
    a = a.astype(MATMUL_INPUT_DTYPE)
    b = b.astype(MATMUL_INPUT_DTYPE)
    bias = bias.astype(jnp.float32)

    if act == "glu":
        n_out = N // 2
        tn_half = min(max(tn // 2, 128), _round_up(n_out, 128))
        n_half_pad = _round_up(n_out, tn_half)
        gh = n_half_pad // tn_half
        lin = jnp.pad(b[:, :n_out], ((0, 0), (0, n_half_pad - n_out)))
        gate = jnp.pad(b[:, n_out:], ((0, 0), (0, n_half_pad - n_out)))
        bl = jnp.pad(bias[:n_out], (0, n_half_pad - n_out))
        bg = jnp.pad(bias[n_out:], (0, n_half_pad - n_out))
        # Interleave linear / gate column tiles so every N block holds a matched pair.
        b = jnp.concatenate(
            [lin.reshape(K, gh, tn_half), gate.reshape(K, gh, tn_half)], axis=2
        ).reshape(K, gh * 2 * tn_half)
        bias = jnp.concatenate(
            [bl.reshape(gh, tn_half), bg.reshape(gh, tn_half)], axis=1
        ).reshape(gh * 2 * tn_half)
        tn_b = 2 * tn_half
        tn_out = tn_half
    else:
        n_out = N
        n_pad = _round_up(N, 128)
        b = jnp.pad(b, ((0, 0), (0, n_pad - N)))
        bias = jnp.pad(bias, (0, n_pad - N))
        tn_out = min(tn, n_pad)
        tn_b = tn_out

    tm_e = min(tm, _round_up(M, 8))
    tk_e = min(tk, _round_up(K, 128))
    M_pad = _round_up(M, tm_e)
    K_pad = _round_up(K, tk_e)
    N_b = b.shape[1]
    N_pad = _round_up(N_b, tn_b)

    a_p = jnp.pad(a, ((0, M_pad - M), (0, K_pad - K)))
    b_p = jnp.pad(b, ((0, K_pad - K), (0, N_pad - N_b)))
    bias_p = jnp.pad(bias, (0, N_pad - N_b)).reshape(1, N_pad)

    gm, gn, gk = M_pad // tm_e, N_pad // tn_b, K_pad // tk_e
    out_cols = gn * tn_out

    cost = pl.CostEstimate(
        flops=2 * M_pad * K_pad * N_pad,
        transcendentals=M_pad * N_pad if act == "glu" else 0,
        bytes_accessed=2 * (M_pad * K_pad + K_pad * N_pad) + 2 * M_pad * out_cols)

    out = pl.pallas_call(
        _matmul_kernel(act),
        grid=(gm, gn, gk),
        in_specs=[
            pl.BlockSpec((tm_e, tk_e), lambda i, j, k: (i, k)),
            pl.BlockSpec((tk_e, tn_b), lambda i, j, k: (k, j)),
            pl.BlockSpec((1, tn_b), lambda i, j, k: (0, j)),
        ],
        out_specs=pl.BlockSpec((tm_e, tn_out), lambda i, j, k: (i, j)),
        out_shape=jax.ShapeDtypeStruct((M_pad, out_cols), MATMUL_INPUT_DTYPE),
        scratch_shapes=[pltpu.VMEM((tm_e, tn_b), jnp.float32)],
        compiler_params=pltpu.CompilerParams(
            dimension_semantics=("parallel", "parallel", "arbitrary"),
            vmem_limit_bytes=VMEM_LIMIT),
        cost_estimate=cost,
    )(a_p, b_p, bias_p)
    return out[:M, :n_out]


# ------------------------------------------------------------- fused add + layernorm


def _add_layernorm_kernel(eps):
    def kernel(x_ref, y_ref, w_ref, b_ref, o_ref):
        x = x_ref[...].astype(jnp.float32) + y_ref[...].astype(jnp.float32)
        mean = jnp.mean(x, axis=-1, keepdims=True)
        xc = x - mean
        var = jnp.mean(xc * xc, axis=-1, keepdims=True)
        out = xc * jax.lax.rsqrt(var + eps) * w_ref[...] + b_ref[...]
        o_ref[...] = out.astype(o_ref.dtype)

    return kernel


def add_layernorm(x, y, w, b, eps=1e-5, tr=None):
    """LayerNorm(x + y) over the last dim. x, y: (M, C) (bf16 in, bf16 out, f32 math)."""
    if tr is None:
        tr = LN_TR
    M, C = x.shape
    tr_e = min(tr, _round_up(M, 8))
    M_pad = _round_up(M, tr_e)
    xp = jnp.pad(x.astype(MATMUL_INPUT_DTYPE), ((0, M_pad - M), (0, 0)))
    yp = jnp.pad(y.astype(MATMUL_INPUT_DTYPE), ((0, M_pad - M), (0, 0)))
    out = pl.pallas_call(
        _add_layernorm_kernel(eps),
        grid=(M_pad // tr_e,),
        in_specs=[
            pl.BlockSpec((tr_e, C), lambda i: (i, 0)),
            pl.BlockSpec((tr_e, C), lambda i: (i, 0)),
            pl.BlockSpec((1, C), lambda i: (0, 0)),
            pl.BlockSpec((1, C), lambda i: (0, 0)),
        ],
        out_specs=pl.BlockSpec((tr_e, C), lambda i: (i, 0)),
        out_shape=jax.ShapeDtypeStruct((M_pad, C), MATMUL_INPUT_DTYPE),
        compiler_params=pltpu.CompilerParams(
            dimension_semantics=("parallel",),
            vmem_limit_bytes=VMEM_LIMIT),
    )(xp, yp, w.reshape(1, C).astype(jnp.float32), b.reshape(1, C).astype(jnp.float32))
    return out[:M]


# --------------------------------------------------------------- flash attention


def _flash_attn_kernel(scale, t_real):
    def kernel(q_ref, k_ref, v_ref, o_ref, m_sc, l_sc, acc_sc):
        qi = pl.program_id(1)
        ki = pl.program_id(2)
        tq = q_ref.shape[1]
        tkv = k_ref.shape[1]

        @pl.when(ki == 0)
        def _init():
            m_sc[...] = jnp.full_like(m_sc, -jnp.inf)
            l_sc[...] = jnp.zeros_like(l_sc)
            acc_sc[...] = jnp.zeros_like(acc_sc)

        # Causal tile skip: only KV tiles that intersect the lower triangle do work.
        @pl.when(ki * tkv <= qi * tq + tq - 1)
        def _compute():
            q = q_ref[...]
            k = k_ref[...]
            # QK^T via dot_general (contract last dims, batch over heads) — no .T
            s = jax.lax.dot_general(
                q, k, (((2,), (2,)), ((0,), (0,))),
                preferred_element_type=jnp.float32) * scale

            # Single 2-D causal + kv-length mask, broadcast over the head axis.
            row = qi * tq + jax.lax.broadcasted_iota(jnp.int32, (tq, tkv), 0)
            col = ki * tkv + jax.lax.broadcasted_iota(jnp.int32, (tq, tkv), 1)
            mask = (col <= row) & (col < t_real)
            s = jnp.where(mask[None, :, :], s, -1e30)

            m_prev = m_sc[...]
            m_new = jnp.maximum(m_prev, jnp.max(s, axis=-1, keepdims=True))
            alpha = jnp.exp(m_prev - m_new)
            p = jnp.exp(s - m_new)
            l_sc[...] = alpha * l_sc[...] + jnp.sum(p, axis=-1, keepdims=True)
            acc_sc[...] = alpha * acc_sc[...] + jax.lax.dot_general(
                p.astype(v_ref.dtype), v_ref[...], (((2,), (1,)), ((0,), (0,))),
                preferred_element_type=jnp.float32)
            m_sc[...] = m_new

        @pl.when(ki == pl.num_programs(2) - 1)
        def _finalize():
            o_ref[...] = (acc_sc[...] / l_sc[...]).astype(o_ref.dtype)

    return kernel


def attention(q, k, v, scale, hb=8, t_blk=None):
    """Causal attention. q, k, v: (B*H, T, Dh) bf16 -> (B*H, T, Dh) bf16."""
    if t_blk is None:
        t_blk = ATTN_T_BLK
    BH, T, Dh = q.shape
    # TODO(synk): pack 128/Dh small heads along the lane axis instead of zero-padding Dh.
    Dh_pad = _round_up(Dh, 128)
    hb_e = min(hb, BH)
    while BH % hb_e:                 # head-block size must divide B*H (perf-only fallback)
        hb_e -= 1
    t_blk_e = min(t_blk, _round_up(T, 8))
    T_pad = _round_up(T, t_blk_e)

    def prep(x):
        return jnp.pad(x.astype(MATMUL_INPUT_DTYPE),
                       ((0, 0), (0, T_pad - T), (0, Dh_pad - Dh)))

    q_p, k_p, v_p = prep(q), prep(k), prep(v)
    grid = (BH // hb_e, T_pad // t_blk_e, T_pad // t_blk_e)

    q_blk = pl.BlockSpec((hb_e, t_blk_e, Dh_pad), lambda h, qi, ki: (h, qi, 0))
    kv_blk = pl.BlockSpec((hb_e, t_blk_e, Dh_pad), lambda h, qi, ki: (h, ki, 0))

    cost = pl.CostEstimate(
        flops=2 * BH * T_pad * T_pad * Dh_pad,          # ~causal half of dense
        transcendentals=BH * T_pad * T_pad // 2,
        bytes_accessed=4 * 2 * BH * T_pad * Dh_pad)

    out = pl.pallas_call(
        _flash_attn_kernel(scale, T),
        grid=grid,
        in_specs=[q_blk, kv_blk, kv_blk],
        out_specs=q_blk,
        out_shape=jax.ShapeDtypeStruct((BH, T_pad, Dh_pad), MATMUL_INPUT_DTYPE),
        scratch_shapes=[
            pltpu.VMEM((hb_e, t_blk_e, 1), jnp.float32),
            pltpu.VMEM((hb_e, t_blk_e, 1), jnp.float32),
            pltpu.VMEM((hb_e, t_blk_e, Dh_pad), jnp.float32),
        ],
        compiler_params=pltpu.CompilerParams(
            dimension_semantics=("parallel", "parallel", "arbitrary"),
            vmem_limit_bytes=VMEM_LIMIT),
        cost_estimate=cost,
    )(q_p, k_p, v_p)
    return out[:, :T, :Dh]


# ------------------------------------------------------------------------ conv glue
# Activations are kept in (B, T, C) layout (bf16) throughout.


def conv1d_ntc(x, w_mat, b, K, stride, act="none"):
    """x: (B, T, Cin); w_mat: (K*Cin, N) matmul layout (rows ordered (k, cin))."""
    B, T, Cin = x.shape
    S = stride
    if K == 1 and S == 1:
        L = T
        patches = x.reshape(B * T, Cin)
    else:
        L = (T - K) // S + 1
        if K % S == 0 and T == (L - 1) * S + K:
            # stride-grouped im2col: reshape + G shifted slices, no gather/transpose
            # TODO(synk): fold the K taps into the matmul K grid axis via an A-side
            #             index_map instead of materializing `patches` in HBM.
            G = K // S
            xb = x.reshape(B, T // S, S * Cin)
            patches = jnp.concatenate([xb[:, j:j + L, :] for j in range(G)], axis=-1)
            patches = patches.reshape(B * L, K * Cin)
        else:
            idx = jnp.arange(L) * S
            win = x[:, idx[:, None] + jnp.arange(K)[None, :], :]   # (B, L, K, Cin)
            patches = win.reshape(B * L, K * Cin)
    out = matmul_bias(patches, w_mat, b, act=act)
    return out.reshape(B, L, -1)


def conv_transpose1d_ntc(x, wt_mat, b, K, stride):
    """x: (B, L, Cin); wt_mat: (Cin, K*Cout) matmul layout (cols ordered (k, cout))."""
    B, L, Cin = x.shape
    KCout = wt_mat.shape[1]
    Cout = KCout // K
    S = stride
    T_out = (L - 1) * S + K
    z = matmul_bias(x.reshape(B * L, Cin), wt_mat, jnp.zeros((KCout,), jnp.float32))
    z = z.reshape(B, L, K, Cout)

    # TODO(synk): fuse the overlap-add into a Pallas kernel (input_output_aliases)
    #             instead of G full-tensor shifted adds in XLA.
    if K % S == 0:
        G = K // S
        zg = z.reshape(B, L, G, S, Cout).astype(jnp.float32)
        nblk = L + G - 1
        out = jnp.zeros((B, nblk, S, Cout), jnp.float32)
        for j in range(G):
            out = out + jnp.pad(zg[:, :, j], ((0, 0), (j, nblk - L - j), (0, 0), (0, 0)))
        out = out.reshape(B, nblk * S, Cout)[:, :T_out, :]
    else:
        out = jnp.zeros((B, T_out, Cout), jnp.float32)
        for k in range(K):
            out = out.at[:, k:k + (L - 1) * S + 1:S, :].add(
                z[:, :, k, :].astype(jnp.float32))
    out = out + b[None, None, :].astype(jnp.float32)
    return out.astype(MATMUL_INPUT_DTYPE)


# ----------------------------------------------------------------------- transformer


def make_positional_encoding(d_model, max_len=512):
    position = jnp.arange(max_len, dtype=jnp.float32)[:, None]
    div_term = jnp.exp(
        jnp.arange(0, d_model, 2, dtype=jnp.float32) * (-math.log(10000.0) / d_model))
    arg = position * div_term
    pe = jnp.stack([jnp.sin(arg), jnp.cos(arg)], axis=-1).reshape(max_len, d_model)
    return pe  # (max_len, d_model)


def transformer_encoder_layer(x2, p, nhead, T, B, C):
    """x2: (B*T, C) bf16, rows ordered (b, t). Post-norm TransformerEncoderLayer, eval."""
    H = nhead
    Dh = C // H

    qkv = matmul_bias(x2, p["in_proj_wT"], p["in_proj_b"])      # (B*T, 3C) bf16
    qkv = qkv.reshape(B, T, 3, H, Dh)

    # TODO(synk): fold head split/merge transposes into attention BlockSpec index maps.
    def heads(i):
        return qkv[:, :, i].transpose(0, 2, 1, 3).reshape(B * H, T, Dh)

    scale = 1.0 / math.sqrt(Dh)
    attn = attention(heads(0), heads(1), heads(2), scale)
    attn = attn.reshape(B, H, T, Dh).transpose(0, 2, 1, 3).reshape(B * T, C)
    attn = matmul_bias(attn, p["out_proj_wT"], p["out_proj_b"])

    x2 = add_layernorm(x2, attn, p["ln1_w"], p["ln1_b"])

    ff = matmul_bias(x2, p["ff1_wT"], p["ff1_b"], act="relu")
    ff = matmul_bias(ff, p["ff2_wT"], p["ff2_b"])
    x2 = add_layernorm(x2, ff, p["ln2_w"], p["ln2_b"])
    return x2


def transformer_forward(x, tparams, nhead):
    """x: (B, T, C) bf16. Positional encoding + stacked encoder layers (eval mode)."""
    B, T, C = x.shape
    x = (x + tparams["pe"][:T][None, :, :]).astype(MATMUL_INPUT_DTYPE)  # dropout=identity
    x2 = x.reshape(B * T, C)
    for layer in tparams["layers"]:
        x2 = transformer_encoder_layer(x2, layer, nhead, T, B, C)
    # dim_output == d_model -> no final linear
    return x2.reshape(B, T, C)


# ----------------------------------------------------------------------------- model


def valid_length(length, cfg):
    resample, depth = cfg["resample"], cfg["depth"]
    K, S = cfg["kernel_size"], cfg["stride"]
    length = math.ceil(length * resample)
    for _ in range(depth):
        length = math.ceil((length - K) / S) + 1
        length = max(length, 1)
    for _ in range(depth):
        length = (length - 1) * S + K
    length = int(math.ceil(length / resample))
    return int(length)


def init_params(key, cfg):
    """Random weights in PyTorch layouts (Conv1d / ConvTranspose1d / Linear)."""
    keys = iter(jax.random.split(key, 256))

    def nrm(shape, scale):
        return scale * jax.random.normal(next(keys), shape, dtype=jnp.float32)

    chin, chout, hidden = cfg["chin"], cfg["chout"], cfg["hidden"]
    K, depth = cfg["kernel_size"], cfg["depth"]
    growth, max_hidden = cfg["growth"], cfg["max_hidden"]

    encoder, decoder = [], []
    for _index in range(depth):
        encoder.append(
            {
                "w1": nrm((hidden, chin, K), 1.0 / math.sqrt(chin * K)),
                "b1": nrm((hidden,), 0.01),
                "w2": nrm((2 * hidden, hidden, 1), 1.0 / math.sqrt(hidden)),
                "b2": nrm((2 * hidden,), 0.01),
            }
        )
        decoder.insert(
            0,
            {
                "w1": nrm((2 * hidden, hidden, 1), 1.0 / math.sqrt(hidden)),
                "b1": nrm((2 * hidden,), 0.01),
                "wt": nrm((hidden, chout, K), 1.0 / math.sqrt(hidden * K)),
                "bt": nrm((chout,), 0.01),
            },
        )
        chout = hidden
        chin = hidden
        hidden = min(int(growth * hidden), max_hidden)

    d_model = chin
    dff = 4 * d_model
    layers = []
    for _ in range(cfg["num_layers"]):
        layers.append(
            {
                "in_proj_w": nrm((3 * d_model, d_model), 1.0 / math.sqrt(d_model)),
                "in_proj_b": nrm((3 * d_model,), 0.01),
                "out_proj_w": nrm((d_model, d_model), 1.0 / math.sqrt(d_model)),
                "out_proj_b": nrm((d_model,), 0.01),
                "ff1_w": nrm((dff, d_model), 1.0 / math.sqrt(d_model)),
                "ff1_b": nrm((dff,), 0.01),
                "ff2_w": nrm((d_model, dff), 1.0 / math.sqrt(dff)),
                "ff2_b": nrm((d_model,), 0.01),
                "ln1_w": jnp.ones((d_model,), jnp.float32),
                "ln1_b": jnp.zeros((d_model,), jnp.float32),
                "ln2_w": jnp.ones((d_model,), jnp.float32),
                "ln2_b": jnp.zeros((d_model,), jnp.float32),
            }
        )
    transformer = {"pe": make_positional_encoding(d_model), "layers": layers}
    return {"encoder": encoder, "decoder": decoder, "transformer": transformer}


def prepare_params(params):
    """One-time (outside jit) weight prep: transpose to matmul layouts + bf16 cast."""

    def conv_mat(w):        # (Cout, Cin, K) -> (K*Cin, Cout)
        return w.transpose(2, 1, 0).reshape(-1, w.shape[0]).astype(MATMUL_INPUT_DTYPE)

    def convT_mat(w):       # (Cin, Cout, K) -> (Cin, K*Cout)
        return w.transpose(0, 2, 1).reshape(w.shape[0], -1).astype(MATMUL_INPUT_DTYPE)

    def lin_mat(w):         # (Cout, Cin) -> (Cin, Cout)
        return w.T.astype(MATMUL_INPUT_DTYPE)

    enc = [
        {"w1": conv_mat(e["w1"]), "b1": e["b1"].astype(jnp.float32),
         "w2": conv_mat(e["w2"]), "b2": e["b2"].astype(jnp.float32)}
        for e in params["encoder"]
    ]
    dec = [
        {"w1": conv_mat(d["w1"]), "b1": d["b1"].astype(jnp.float32),
         "wt": convT_mat(d["wt"]), "bt": d["bt"].astype(jnp.float32)}
        for d in params["decoder"]
    ]
    layers = [
        {"in_proj_wT": lin_mat(l["in_proj_w"]), "in_proj_b": l["in_proj_b"],
         "out_proj_wT": lin_mat(l["out_proj_w"]), "out_proj_b": l["out_proj_b"],
         "ff1_wT": lin_mat(l["ff1_w"]), "ff1_b": l["ff1_b"],
         "ff2_wT": lin_mat(l["ff2_w"]), "ff2_b": l["ff2_b"],
         "ln1_w": l["ln1_w"], "ln1_b": l["ln1_b"],
         "ln2_w": l["ln2_w"], "ln2_b": l["ln2_b"]}
        for l in params["transformer"]["layers"]
    ]
    transformer = {"pe": params["transformer"]["pe"].astype(MATMUL_INPUT_DTYPE),
                   "layers": layers}
    return {"encoder": enc, "decoder": dec, "transformer": transformer}


def tdemucs_forward(params, mix, cfg):
    if cfg["resample"] != 1:
        # TODO(synk): sinc-based upsample2/downsample2 not defined in provided source.
        raise NotImplementedError("resample != 1 is not supported")
    K, S = cfg["kernel_size"], cfg["stride"]

    if mix.ndim == 2:
        mix = mix[:, None, :]
    if cfg["normalize"]:
        mono = jnp.mean(mix, axis=1, keepdims=True)
        std = jnp.std(mono, axis=-1, keepdims=True, ddof=1)   # torch unbiased std
        mix = mix / (cfg["floor"] + std)
    else:
        std = 1.0

    length = mix.shape[-1]
    vlen = valid_length(length, cfg)
    x = jnp.pad(mix, ((0, 0), (0, 0), (0, vlen - length)))

    x = x.transpose(0, 2, 1).astype(MATMUL_INPUT_DTYPE)   # NCT -> NTC, bf16 boundary

    skips = []
    for enc in params["encoder"]:
        x = conv1d_ntc(x, enc["w1"], enc["b1"], K, S, act="relu")
        x = conv1d_ntc(x, enc["w2"], enc["b2"], 1, 1, act="glu")
        skips.append(x)

    x = transformer_forward(x, params["transformer"], cfg["nhead"])

    n_dec = len(params["decoder"])
    for li, dec in enumerate(params["decoder"]):
        skip = skips.pop(-1)
        x = x + skip[:, : x.shape[1], :]
        x = conv1d_ntc(x, dec["w1"], dec["b1"], 1, 1, act="glu")
        x = conv_transpose1d_ntc(x, dec["wt"], dec["bt"], K, S)
        if li != n_dec - 1:                 # static Python branch (ReLU on all but last)
            x = jnp.maximum(x, 0)

    x = x[:, :length, :].transpose(0, 2, 1).astype(jnp.float32)  # NTC -> NCT
    return std * x


# ----------------------------------------------------------------------------- main


if __name__ == "__main__":
    cfg = dict(
        chin=1,
        chout=1,
        hidden=8,
        depth=2,
        kernel_size=8,
        stride=4,
        resample=1,
        growth=2,
        max_hidden=10000,
        normalize=True,
        floor=0.001,
        nhead=4,       # TransformerModel(chin, 4, 4, chin*4, chin)
        num_layers=4,
    )

    key = jax.random.PRNGKey(0)
    pkey, xkey = jax.random.split(key)
    raw_params = init_params(pkey, cfg)
    params = prepare_params(raw_params)      # hoisted, one-time weight prep

    B, T = 2, 64
    mix = jax.random.normal(xkey, (B, cfg["chin"], T), dtype=jnp.float32)

    fwd = jax.jit(lambda p, m: tdemucs_forward(p, m, cfg))
    out = fwd(params, mix)
    out = jax.block_until_ready(out)

    assert out.shape == (B, cfg["chout"], T), out.shape
    assert bool(jnp.all(jnp.isfinite(out)))
    print("KERNEL_OK")
</pallas_src>

<mosaic_0001>
module attributes {stable_mosaic.version = 11 : i64} {
  func.func @kernel(%arg0: i32, %arg1: i32, %arg2: i32, %arg3: memref<32x128xbf16, #tpu.memory_space<vmem>>, %arg4: memref<128x128xbf16, #tpu.memory_space<vmem>>, %arg5: memref<1x128xf32, #tpu.memory_space<vmem>>, %arg6: memref<32x128xbf16, #tpu.memory_space<vmem>>, %arg7: memref<32x128xf32, #tpu.memory_space<vmem>>) attributes {dimension_semantics = [#tpu.dimension_semantics<parallel>, #tpu.dimension_semantics<parallel>, #tpu.dimension_semantics<arbitrary>], iteration_bounds = array<i64: 1, 1, 1>, scalar_prefetch = 0 : i64, scratch_operands = 1 : i64, tpu.core_type = #tpu.core_type<tc>, window_params = [{transform_indices = @transform_0, window_bounds = array<i64: 32, 128>}, {transform_indices = @transform_1, window_bounds = array<i64: 128, 128>}, {transform_indices = @transform_2, window_bounds = array<i64: 1, 128>}, {transform_indices = @transform_3, window_bounds = array<i64: 32, 128>}]} {
    %c0_i32 = arith.constant 0 : i32
    %0 = arith.cmpi eq, %arg2, %c0_i32 : i32
    %1 = arith.extui %0 : i1 to i32
    %c0_i32_0 = arith.constant 0 : i32
    %2 = arith.cmpi ne, %1, %c0_i32_0 : i32
    scf.if %2 {
      %cst_10 = arith.constant 0.000000e+00 : f32
      %12 = vector.broadcast %cst_10 : f32 to vector<32x128xf32>
      %c0_11 = arith.constant 0 : index
      %c0_12 = arith.constant 0 : index
      %13 = vector.load %arg7[%c0_11, %c0_12] : memref<32x128xf32, #tpu.memory_space<vmem>>, vector<32x128xf32>
      tpu.vector_store %arg7[%c0_11, %c0_12], %12 {strides = array<i32>} : memref<32x128xf32, #tpu.memory_space<vmem>>, vector<32x128xf32>,
    } else {
    }
    %c0 = arith.constant 0 : index
    %c0_1 = arith.constant 0 : index
    %3 = vector.load %arg7[%c0, %c0_1] : memref<32x128xf32, #tpu.memory_space<vmem>>, vector<32x128xf32>
    %c0_2 = arith.constant 0 : index
    %c0_3 = arith.constant 0 : index
    %4 = vector.load %arg3[%c0_2, %c0_3] : memref<32x128xbf16, #tpu.memory_space<vmem>>, vector<32x128xbf16>
    %c0_4 = arith.constant 0 : index
    %c0_5 = arith.constant 0 : index
    %5 = vector.load %arg4[%c0_4, %c0_5] : memref<128x128xbf16, #tpu.memory_space<vmem>>, vector<128x128xbf16>
    %cst = arith.constant dense<0.000000e+00> : vector<32x128xf32>
    %6 = tpu.matmul %4, %5, %cst {dimension_numbers = #tpu.dot_dimension_numbers<[1], [0], [0], [1], [0, 0, 1, 1], [], []>} : vector<32x128xbf16>, vector<128x128xbf16>, vector<32x128xf32> -> vector<32x128xf32>
    %7 = arith.addf %3, %6 : vector<32x128xf32>
    %c0_6 = arith.constant 0 : index
    %c0_7 = arith.constant 0 : index
    %8 = vector.load %arg7[%c0_6, %c0_7] : memref<32x128xf32, #tpu.memory_space<vmem>>, vector<32x128xf32>
    tpu.vector_store %arg7[%c0_6, %c0_7], %7 {strides = array<i32>} : memref<32x128xf32, #tpu.memory_space<vmem>>, vector<32x128xf32>,
    %c0_i32_8 = arith.constant 0 : i32
    %9 = arith.cmpi eq, %arg2, %c0_i32_8 : i32
    %10 = arith.extui %9 : i1 to i32
    %c0_i32_9 = arith.constant 0 : i32
    %11 = arith.cmpi ne, %10, %c0_i32_9 : i32
    scf.if %11 {
      %c0_10 = arith.constant 0 : index
      %c0_11 = arith.constant 0 : index
      %12 = vector.load %arg7[%c0_10, %c0_11] : memref<32x128xf32, #tpu.memory_space<vmem>>, vector<32x128xf32>
      %c0_12 = arith.constant 0 : index
      %c0_13 = arith.constant 0 : index
      %13 = vector.load %arg5[%c0_12, %c0_13] : memref<1x128xf32, #tpu.memory_space<vmem>>, vector<1x128xf32>
      %14 = vector.broadcast %13 : vector<1x128xf32> to vector<32x128xf32>
      %15 = arith.addf %12, %14 : vector<32x128xf32>
      %cst_14 = arith.constant 0.000000e+00 : f32
      %16 = vector.broadcast %cst_14 : f32 to vector<32x128xf32>
      %17 = arith.maximumf %15, %16 : vector<32x128xf32>
      %18 = arith.truncf %17 : vector<32x128xf32> to vector<32x128xbf16>
      %c0_15 = arith.constant 0 : index
      %c0_16 = arith.constant 0 : index
      %19 = vector.load %arg6[%c0_15, %c0_16] : memref<32x128xbf16, #tpu.memory_space<vmem>>, vector<32x128xbf16>
      tpu.vector_store %arg6[%c0_15, %c0_16], %18 {strides = array<i32>} : memref<32x128xbf16, #tpu.memory_space<vmem>>, vector<32x128xbf16>,
    } else {
    }
    return
  }
  func.func @transform_0(%arg0: i32, %arg1: i32, %arg2: i32) -> (i32, i32) {
    %c0_i32 = arith.constant 0 : i32
    return %arg0, %arg2 : i32, i32
  }
  func.func @transform_1(%arg0: i32, %arg1: i32, %arg2: i32) -> (i32, i32) {
    %c0_i32 = arith.constant 0 : i32
    return %arg2, %arg1 : i32, i32
  }
  func.func @transform_2(%arg0: i32, %arg1: i32, %arg2: i32) -> (i32, i32) {
    %c0_i32 = arith.constant 0 : i32
    %c0_i32_0 = arith.constant 0 : i32
    return %c0_i32, %arg1 : i32, i32
  }
  func.func @transform_3(%arg0: i32, %arg1: i32, %arg2: i32) -> (i32, i32) {
    %c0_i32 = arith.constant 0 : i32
    return %arg0, %arg1 : i32, i32
  }
}

module attributes {stable_mosaic.version = 11 : i64} {
  func.func @kernel(%arg0: i32, %arg1: i32, %arg2: i32, %arg3: memref<32x128xbf16, #tpu.memory_space<vmem>>, %arg4: memref<128x256xbf16, #tpu.memory_space<vmem>>, %arg5: memref<1x256xf32, #tpu.memory_space<vmem>>, %arg6: memref<32x128xbf16, #tpu.memory_space<vmem>>, %arg7: memref<32x256xf32, #tpu.memory_space<vmem>>) attributes {dimension_semantics = [#tpu.dimension_semantics<parallel>, #tpu.dimension_semantics<parallel>, #tpu.dimension_semantics<arbitrary>], iteration_bounds = array<i64: 1, 1, 1>, scalar_prefetch = 0 : i64, scratch_operands = 1 : i64, tpu.core_type = #tpu.core_type<tc>, window_params = [{transform_indices = @transform_0, window_bounds = array<i64: 32, 128>}, {transform_indices = @transform_1, window_bounds = array<i64: 128, 256>}, {transform_indices = @transform_2, window_bounds = array<i64: 1, 256>}, {transform_indices = @transform_3, window_bounds = array<i64: 32, 128>}]} {
    %c0_i32 = arith.constant 0 : i32
    %0 = arith.cmpi eq, %arg2, %c0_i32 : i32
    %1 = arith.extui %0 : i1 to i32
    %c0_i32_0 = arith.constant 0 : i32
    %2 = arith.cmpi ne, %1, %c0_i32_0 : i32
    scf.if %2 {
      %cst_10 = arith.constant 0.000000e+00 : f32
      %12 = vector.broadcast %cst_10 : f32 to vector<32x256xf32>
      %c0_11 = arith.constant 0 : index
      %c0_12 = arith.constant 0 : index
      %13 = vector.load %arg7[%c0_11, %c0_12] : memref<32x256xf32, #tpu.memory_space<vmem>>, vector<32x256xf32>
      tpu.vector_store %arg7[%c0_11, %c0_12], %12 {strides = array<i32>} : memref<32x256xf32, #tpu.memory_space<vmem>>, vector<32x256xf32>,
    } else {
    }
    %c0 = arith.constant 0 : index
    %c0_1 = arith.constant 0 : index
    %3 = vector.load %arg7[%c0, %c0_1] : memref<32x256xf32, #tpu.memory_space<vmem>>, vector<32x256xf32>
    %c0_2 = arith.constant 0 : index
    %c0_3 = arith.constant 0 : index
    %4 = vector.load %arg3[%c0_2, %c0_3] : memref<32x128xbf16, #tpu.memory_space<vmem>>, vector<32x128xbf16>
    %c0_4 = arith.constant 0 : index
    %c0_5 = arith.constant 0 : index
    %5 = vector.load %arg4[%c0_4, %c0_5] : memref<128x256xbf16, #tpu.memory_space<vmem>>, vector<128x256xbf16>
    %cst = arith.constant dense<0.000000e+00> : vector<32x256xf32>
    %6 = tpu.matmul %4, %5, %cst {dimension_numbers = #tpu.dot_dimension_numbers<[1], [0], [0], [1], [0, 0, 1, 1], [], []>} : vector<32x128xbf16>, vector<128x256xbf16>, vector<32x256xf32> -> vector<32x256xf32>
    %7 = arith.addf %3, %6 : vector<32x256xf32>
    %c0_6 = arith.constant 0 : index
    %c0_7 = arith.constant 0 : index
    %8 = vector.load %arg7[%c0_6, %c0_7] : memref<32x256xf32, #tpu.memory_space<vmem>>, vector<32x256xf32>
    tpu.vector_store %arg7[%c0_6, %c0_7], %7 {strides = array<i32>} : memref<32x256xf32, #tpu.memory_space<vmem>>, vector<32x256xf32>,
    %c0_i32_8 = arith.constant 0 : i32
    %9 = arith.cmpi eq, %arg2, %c0_i32_8 : i32
    %10 = arith.extui %9 : i1 to i32
    %c0_i32_9 = arith.constant 0 : i32
    %11 = arith.cmpi ne, %10, %c0_i32_9 : i32
    scf.if %11 {
      %c0_10 = arith.constant 0 : index
      %c0_11 = arith.constant 0 : index
      %12 = vector.load %arg7[%c0_10, %c0_11] : memref<32x256xf32, #tpu.memory_space<vmem>>, vector<32x256xf32>
      %c0_12 = arith.constant 0 : index
      %c0_13 = arith.constant 0 : index
      %13 = vector.load %arg5[%c0_12, %c0_13] : memref<1x256xf32, #tpu.memory_space<vmem>>, vector<1x256xf32>
      %14 = vector.broadcast %13 : vector<1x256xf32> to vector<32x256xf32>
      %15 = arith.addf %12, %14 : vector<32x256xf32>
      %16 = vector.extract_strided_slice %15 {offsets = [0, 0], sizes = [32, 128], strides = [1, 1]} : vector<32x256xf32> to vector<32x128xf32>
      %17 = vector.extract_strided_slice %15 {offsets = [0, 128], sizes = [32, 128], strides = [1, 1]} : vector<32x256xf32> to vector<32x128xf32>
      %18 = arith.negf %17 : vector<32x128xf32>
      %19 = math.exp %18 : vector<32x128xf32>
      %cst_14 = arith.constant 1.000000e+00 : f32
      %20 = vector.broadcast %cst_14 : f32 to vector<32x128xf32>
      %21 = arith.addf %20, %19 : vector<32x128xf32>
      %22 = arith.divf %20, %21 : vector<32x128xf32>
      %23 = arith.mulf %16, %22 : vector<32x128xf32>
      %24 = arith.truncf %23 : vector<32x128xf32> to vector<32x128xbf16>
      %c0_15 = arith.constant 0 : index
      %c0_16 = arith.constant 0 : index
      %25 = vector.load %arg6[%c0_15, %c0_16] : memref<32x128xbf16, #tpu.memory_space<vmem>>, vector<32x128xbf16>
      tpu.vector_store %arg6[%c0_15, %c0_16], %24 {strides = array<i32>} : memref<32x128xbf16, #tpu.memory_space<vmem>>, vector<32x128xbf16>,
    } else {
    }
    return
  }
  func.func @transform_0(%arg0: i32, %arg1: i32, %arg2: i32) -> (i32, i32) {
    %c0_i32 = arith.constant 0 : i32
    return %arg0, %arg2 : i32, i32
  }
  func.func @transform_1(%arg0: i32, %arg1: i32, %arg2: i32) -> (i32, i32) {
    %c0_i32 = arith.constant 0 : i32
    return %arg2, %arg1 : i32, i32
  }
  func.func @transform_2(%arg0: i32, %arg1: i32, %arg2: i32) -> (i32, i32) {
    %c0_i32 = arith.constant 0 : i32
    %c0_i32_0 = arith.constant 0 : i32
    return %c0_i32, %arg1 : i32, i32
  }
  func.func @transform_3(%arg0: i32, %arg1: i32, %arg2: i32) -> (i32, i32) {
    %c0_i32 = arith.constant 0 : i32
    return %arg0, %arg1 : i32, i32
  }
}

module attributes {stable_mosaic.version = 11 : i64} {
  func.func @kernel(%arg0: i32, %arg1: i32, %arg2: i32, %arg3: memref<8x128xbf16, #tpu.memory_space<vmem>>, %arg4: memref<128x128xbf16, #tpu.memory_space<vmem>>, %arg5: memref<1x128xf32, #tpu.memory_space<vmem>>, %arg6: memref<8x128xbf16, #tpu.memory_space<vmem>>, %arg7: memref<8x128xf32, #tpu.memory_space<vmem>>) attributes {dimension_semantics = [#tpu.dimension_semantics<parallel>, #tpu.dimension_semantics<parallel>, #tpu.dimension_semantics<arbitrary>], iteration_bounds = array<i64: 1, 1, 1>, scalar_prefetch = 0 : i64, scratch_operands = 1 : i64, tpu.core_type = #tpu.core_type<tc>, window_params = [{transform_indices = @transform_0, window_bounds = array<i64: 8, 128>}, {transform_indices = @transform_1, window_bounds = array<i64: 128, 128>}, {transform_indices = @transform_2, window_bounds = array<i64: 1, 128>}, {transform_indices = @transform_3, window_bounds = array<i64: 8, 128>}]} {
    %c0_i32 = arith.constant 0 : i32
    %0 = arith.cmpi eq, %arg2, %c0_i32 : i32
    %1 = arith.extui %0 : i1 to i32
    %c0_i32_0 = arith.constant 0 : i32
    %2 = arith.cmpi ne, %1, %c0_i32_0 : i32
    scf.if %2 {
      %cst_10 = arith.constant 0.000000e+00 : f32
      %12 = vector.broadcast %cst_10 : f32 to vector<8x128xf32>
      %c0_11 = arith.constant 0 : index
      %c0_12 = arith.constant 0 : index
      %13 = vector.load %arg7[%c0_11, %c0_12] : memref<8x128xf32, #tpu.memory_space<vmem>>, vector<8x128xf32>
      tpu.vector_store %arg7[%c0_11, %c0_12], %12 {strides = array<i32>} : memref<8x128xf32, #tpu.memory_space<vmem>>, vector<8x128xf32>,
    } else {
    }
    %c0 = arith.constant 0 : index
    %c0_1 = arith.constant 0 : index
    %3 = vector.load %arg7[%c0, %c0_1] : memref<8x128xf32, #tpu.memory_space<vmem>>, vector<8x128xf32>
    %c0_2 = arith.constant 0 : index
    %c0_3 = arith.constant 0 : index
    %4 = vector.load %arg3[%c0_2, %c0_3] : memref<8x128xbf16, #tpu.memory_space<vmem>>, vector<8x128xbf16>
    %c0_4 = arith.constant 0 : index
    %c0_5 = arith.constant 0 : index
    %5 = vector.load %arg4[%c0_4, %c0_5] : memref<128x128xbf16, #tpu.memory_space<vmem>>, vector<128x128xbf16>
    %cst = arith.constant dense<0.000000e+00> : vector<8x128xf32>
    %6 = tpu.matmul %4, %5, %cst {dimension_numbers = #tpu.dot_dimension_numbers<[1], [0], [0], [1], [0, 0, 1, 1], [], []>} : vector<8x128xbf16>, vector<128x128xbf16>, vector<8x128xf32> -> vector<8x128xf32>
    %7 = arith.addf %3, %6 : vector<8x128xf32>
    %c0_6 = arith.constant 0 : index
    %c0_7 = arith.constant 0 : index
    %8 = vector.load %arg7[%c0_6, %c0_7] : memref<8x128xf32, #tpu.memory_space<vmem>>, vector<8x128xf32>
    tpu.vector_store %arg7[%c0_6, %c0_7], %7 {strides = array<i32>} : memref<8x128xf32, #tpu.memory_space<vmem>>, vector<8x128xf32>,
    %c0_i32_8 = arith.constant 0 : i32
    %9 = arith.cmpi eq, %arg2, %c0_i32_8 : i32
    %10 = arith.extui %9 : i1 to i32
    %c0_i32_9 = arith.constant 0 : i32
    %11 = arith.cmpi ne, %10, %c0_i32_9 : i32
    scf.if %11 {
      %c0_10 = arith.constant 0 : index
      %c0_11 = arith.constant 0 : index
      %12 = vector.load %arg7[%c0_10, %c0_11] : memref<8x128xf32, #tpu.memory_space<vmem>>, vector<8x128xf32>
      %c0_12 = arith.constant 0 : index
      %c0_13 = arith.constant 0 : index
      %13 = vector.load %arg5[%c0_12, %c0_13] : memref<1x128xf32, #tpu.memory_space<vmem>>, vector<1x128xf32>
      %14 = vector.broadcast %13 : vector<1x128xf32> to vector<8x128xf32>
      %15 = arith.addf %12, %14 : vector<8x128xf32>
      %cst_14 = arith.constant 0.000000e+00 : f32
      %16 = vector.broadcast %cst_14 : f32 to vector<8x128xf32>
      %17 = arith.maximumf %15, %16 : vector<8x128xf32>
      %18 = arith.truncf %17 : vector<8x128xf32> to vector<8x128xbf16>
      %c0_15 = arith.constant 0 : index
      %c0_16 = arith.constant 0 : index
      %19 = vector.load %arg6[%c0_15, %c0_16] : memref<8x128xbf16, #tpu.memory_space<vmem>>, vector<8x128xbf16>
      tpu.vector_store %arg6[%c0_15, %c0_16], %18 {strides = array<i32>} : memref<8x128xbf16, #tpu.memory_space<vmem>>, vector<8x128xbf16>,
    } else {
    }
    return
  }
  func.func @transform_0(%arg0: i32, %arg1: i32, %arg2: i32) -> (i32, i32) {
    %c0_i32 = arith.constant 0 : i32
    return %arg0, %arg2 : i32, i32
  }
  func.func @transform_1(%arg0: i32, %arg1: i32, %arg2: i32) -> (i32, i32) {
    %c0_i32 = arith.constant 0 : i32
    return %arg2, %arg1 : i32, i32
  }
  func.func @transform_2(%arg0: i32, %arg1: i32, %arg2: i32) -> (i32, i32) {
    %c0_i32 = arith.constant 0 : i32
    %c0_i32_0 = arith.constant 0 : i32
    return %c0_i32, %arg1 : i32, i32
  }
  func.func @transform_3(%arg0: i32, %arg1: i32, %arg2: i32) -> (i32, i32) {
    %c0_i32 = arith.constant 0 : i32
    return %arg0, %arg1 : i32, i32
  }
}

module attributes {stable_mosaic.version = 11 : i64} {
  func.func @kernel(%arg0: i32, %arg1: i32, %arg2: i32, %arg3: memref<8x128xbf16, #tpu.memory_space<vmem>>, %arg4: memref<128x256xbf16, #tpu.memory_space<vmem>>, %arg5: memref<1x256xf32, #tpu.memory_space<vmem>>, %arg6: memref<8x128xbf16, #tpu.memory_space<vmem>>, %arg7: memref<8x256xf32, #tpu.memory_space<vmem>>) attributes {dimension_semantics = [#tpu.dimension_semantics<parallel>, #tpu.dimension_semantics<parallel>, #tpu.dimension_semantics<arbitrary>], iteration_bounds = array<i64: 1, 1, 1>, scalar_prefetch = 0 : i64, scratch_operands = 1 : i64, tpu.core_type = #tpu.core_type<tc>, window_params = [{transform_indices = @transform_0, window_bounds = array<i64: 8, 128>}, {transform_indices = @transform_1, window_bounds = array<i64: 128, 256>}, {transform_indices = @transform_2, window_bounds = array<i64: 1, 256>}, {transform_indices = @transform_3, window_bounds = array<i64: 8, 128>}]} {
    %c0_i32 = arith.constant 0 : i32
    %0 = arith.cmpi eq, %arg2, %c0_i32 : i32
    %1 = arith.extui %0 : i1 to i32
    %c0_i32_0 = arith.constant 0 : i32
    %2 = arith.cmpi ne, %1, %c0_i32_0 : i32
    scf.if %2 {
      %cst_10 = arith.constant 0.000000e+00 : f32
      %12 = vector.broadcast %cst_10 : f32 to vector<8x256xf32>
      %c0_11 = arith.constant 0 : index
      %c0_12 = arith.constant 0 : index
      %13 = vector.load %arg7[%c0_11, %c0_12] : memref<8x256xf32, #tpu.memory_space<vmem>>, vector<8x256xf32>
      tpu.vector_store %arg7[%c0_11, %c0_12], %12 {strides = array<i32>} : memref<8x256xf32, #tpu.memory_space<vmem>>, vector<8x256xf32>,
    } else {
    }
    %c0 = arith.constant 0 : index
    %c0_1 = arith.constant 0 : index
    %3 = vector.load %arg7[%c0, %c0_1] : memref<8x256xf32, #tpu.memory_space<vmem>>, vector<8x256xf32>
    %c0_2 = arith.constant 0 : index
    %c0_3 = arith.constant 0 : index
    %4 = vector.load %arg3[%c0_2, %c0_3] : memref<8x128xbf16, #tpu.memory_space<vmem>>, vector<8x128xbf16>
    %c0_4 = arith.constant 0 : index
    %c0_5 = arith.constant 0 : index
    %5 = vector.load %arg4[%c0_4, %c0_5] : memref<128x256xbf16, #tpu.memory_space<vmem>>, vector<128x256xbf16>
    %cst = arith.constant dense<0.000000e+00> : vector<8x256xf32>
    %6 = tpu.matmul %4, %5, %cst {dimension_numbers = #tpu.dot_dimension_numbers<[1], [0], [0], [1], [0, 0, 1, 1], [], []>} : vector<8x128xbf16>, vector<128x256xbf16>, vector<8x256xf32> -> vector<8x256xf32>
    %7 = arith.addf %3, %6 : vector<8x256xf32>
    %c0_6 = arith.constant 0 : index
    %c0_7 = arith.constant 0 : index
    %8 = vector.load %arg7[%c0_6, %c0_7] : memref<8x256xf32, #tpu.memory_space<vmem>>, vector<8x256xf32>
    tpu.vector_store %arg7[%c0_6, %c0_7], %7 {strides = array<i32>} : memref<8x256xf32, #tpu.memory_space<vmem>>, vector<8x256xf32>,
    %c0_i32_8 = arith.constant 0 : i32
    %9 = arith.cmpi eq, %arg2, %c0_i32_8 : i32
    %10 = arith.extui %9 : i1 to i32
    %c0_i32_9 = arith.constant 0 : i32
    %11 = arith.cmpi ne, %10, %c0_i32_9 : i32
    scf.if %11 {
      %c0_10 = arith.constant 0 : index
      %c0_11 = arith.constant 0 : index
      %12 = vector.load %arg7[%c0_10, %c0_11] : memref<8x256xf32, #tpu.memory_space<vmem>>, vector<8x256xf32>
      %c0_12 = arith.constant 0 : index
      %c0_13 = arith.constant 0 : index
      %13 = vector.load %arg5[%c0_12, %c0_13] : memref<1x256xf32, #tpu.memory_space<vmem>>, vector<1x256xf32>
      %14 = vector.broadcast %13 : vector<1x256xf32> to vector<8x256xf32>
      %15 = arith.addf %12, %14 : vector<8x256xf32>
      %16 = vector.extract_strided_slice %15 {offsets = [0, 0], sizes = [8, 128], strides = [1, 1]} : vector<8x256xf32> to vector<8x128xf32>
      %17 = vector.extract_strided_slice %15 {offsets = [0, 128], sizes = [8, 128], strides = [1, 1]} : vector<8x256xf32> to vector<8x128xf32>
      %18 = arith.negf %17 : vector<8x128xf32>
      %19 = math.exp %18 : vector<8x128xf32>
      %cst_14 = arith.constant 1.000000e+00 : f32
      %20 = vector.broadcast %cst_14 : f32 to vector<8x128xf32>
      %21 = arith.addf %20, %19 : vector<8x128xf32>
      %22 = arith.divf %20, %21 : vector<8x128xf32>
      %23 = arith.mulf %16, %22 : vector<8x128xf32>
      %24 = arith.truncf %23 : vector<8x128xf32> to vector<8x128xbf16>
      %c0_15 = arith.constant 0 : index
      %c0_16 = arith.constant 0 : index
      %25 = vector.load %arg6[%c0_15, %c0_16] : memref<8x128xbf16, #tpu.memory_space<vmem>>, vector<8x128xbf16>
      tpu.vector_store %arg6[%c0_15, %c0_16], %24 {strides = array<i32>} : memref<8x128xbf16, #tpu.memory_space<vmem>>, vector<8x128xbf16>,
    } else {
    }
    return
  }
  func.func @transform_0(%arg0: i32, %arg1: i32, %arg2: i32) -> (i32, i32) {
    %c0_i32 = arith.constant 0 : i32
    return %arg0, %arg2 : i32, i32
  }
  func.func @transform_1(%arg0: i32, %arg1: i32, %arg2: i32) -> (i32, i32) {
    %c0_i32 = arith.constant 0 : i32
    return %arg2, %arg1 : i32, i32
  }
  func.func @transform_2(%arg0: i32, %arg1: i32, %arg2: i32) -> (i32, i32) {
    %c0_i32 = arith.constant 0 : i32
    %c0_i32_0 = arith.constant 0 : i32
    return %c0_i32, %arg1 : i32, i32
  }
  func.func @transform_3(%arg0: i32, %arg1: i32, %arg2: i32) -> (i32, i32) {
    %c0_i32 = arith.constant 0 : i32
    return %arg0, %arg1 : i32, i32
  }
}

module attributes {stable_mosaic.version = 11 : i64} {
  func.func @kernel(%arg0: i32, %arg1: i32, %arg2: i32, %arg3: memref<8x128xbf16, #tpu.memory_space<vmem>>, %arg4: memref<128x128xbf16, #tpu.memory_space<vmem>>, %arg5: memref<1x128xf32, #tpu.memory_space<vmem>>, %arg6: memref<8x128xbf16, #tpu.memory_space<vmem>>, %arg7: memref<8x128xf32, #tpu.memory_space<vmem>>) attributes {dimension_semantics = [#tpu.dimension_semantics<parallel>, #tpu.dimension_semantics<parallel>, #tpu.dimension_semantics<arbitrary>], iteration_bounds = array<i64: 1, 1, 1>, scalar_prefetch = 0 : i64, scratch_operands = 1 : i64, tpu.core_type = #tpu.core_type<tc>, window_params = [{transform_indices = @transform_0, window_bounds = array<i64: 8, 128>}, {transform_indices = @transform_1, window_bounds = array<i64: 128, 128>}, {transform_indices = @transform_2, window_bounds = array<i64: 1, 128>}, {transform_indices = @transform_3, window_bounds = array<i64: 8, 128>}]} {
    %c0_i32 = arith.constant 0 : i32
    %0 = arith.cmpi eq, %arg2, %c0_i32 : i32
    %1 = arith.extui %0 : i1 to i32
    %c0_i32_0 = arith.constant 0 : i32
    %2 = arith.cmpi ne, %1, %c0_i32_0 : i32
    scf.if %2 {
      %cst_10 = arith.constant 0.000000e+00 : f32
      %12 = vector.broadcast %cst_10 : f32 to vector<8x128xf32>
      %c0_11 = arith.constant 0 : index
      %c0_12 = arith.constant 0 : index
      %13 = vector.load %arg7[%c0_11, %c0_12] : memref<8x128xf32, #tpu.memory_space<vmem>>, vector<8x128xf32>
      tpu.vector_store %arg7[%c0_11, %c0_12], %12 {strides = array<i32>} : memref<8x128xf32, #tpu.memory_space<vmem>>, vector<8x128xf32>,
    } else {
    }
    %c0 = arith.constant 0 : index
    %c0_1 = arith.constant 0 : index
    %3 = vector.load %arg7[%c0, %c0_1] : memref<8x128xf32, #tpu.memory_space<vmem>>, vector<8x128xf32>
    %c0_2 = arith.constant 0 : index
    %c0_3 = arith.constant 0 : index
    %4 = vector.load %arg3[%c0_2, %c0_3] : memref<8x128xbf16, #tpu.memory_space<vmem>>, vector<8x128xbf16>
    %c0_4 = arith.constant 0 : index
    %c0_5 = arith.constant 0 : index
    %5 = vector.load %arg4[%c0_4, %c0_5] : memref<128x128xbf16, #tpu.memory_space<vmem>>, vector<128x128xbf16>
    %cst = arith.constant dense<0.000000e+00> : vector<8x128xf32>
    %6 = tpu.matmul %4, %5, %cst {dimension_numbers = #tpu.dot_dimension_numbers<[1], [0], [0], [1], [0, 0, 1, 1], [], []>} : vector<8x128xbf16>, vector<128x128xbf16>, vector<8x128xf32> -> vector<8x128xf32>
    %7 = arith.addf %3, %6 : vector<8x128xf32>
    %c0_6 = arith.constant 0 : index
    %c0_7 = arith.constant 0 : index
    %8 = vector.load %arg7[%c0_6, %c0_7] : memref<8x128xf32, #tpu.memory_space<vmem>>, vector<8x128xf32>
    tpu.vector_store %arg7[%c0_6, %c0_7], %7 {strides = array<i32>} : memref<8x128xf32, #tpu.memory_space<vmem>>, vector<8x128xf32>,
    %c0_i32_8 = arith.constant 0 : i32
    %9 = arith.cmpi eq, %arg2, %c0_i32_8 : i32
    %10 = arith.extui %9 : i1 to i32
    %c0_i32_9 = arith.constant 0 : i32
    %11 = arith.cmpi ne, %10, %c0_i32_9 : i32
    scf.if %11 {
      %c0_10 = arith.constant 0 : index
      %c0_11 = arith.constant 0 : index
      %12 = vector.load %arg7[%c0_10, %c0_11] : memref<8x128xf32, #tpu.memory_space<vmem>>, vector<8x128xf32>
      %c0_12 = arith.constant 0 : index
      %c0_13 = arith.constant 0 : index
      %13 = vector.load %arg5[%c0_12, %c0_13] : memref<1x128xf32, #tpu.memory_space<vmem>>, vector<1x128xf32>
      %14 = vector.broadcast %13 : vector<1x128xf32> to vector<8x128xf32>
      %15 = arith.addf %12, %14 : vector<8x128xf32>
      %16 = arith.truncf %15 : vector<8x128xf32> to vector<8x128xbf16>
      %c0_14 = arith.constant 0 : index
      %c0_15 = arith.constant 0 : index
      %17 = vector.load %arg6[%c0_14, %c0_15] : memref<8x128xbf16, #tpu.memory_space<vmem>>, vector<8x128xbf16>
      tpu.vector_store %arg6[%c0_14, %c0_15], %16 {strides = array<i32>} : memref<8x128xbf16, #tpu.memory_space<vmem>>, vector<8x128xbf16>,
    } else {
    }
    return
  }
  func.func @transform_0(%arg0: i32, %arg1: i32, %arg2: i32) -> (i32, i32) {
    %c0_i32 = arith.constant 0 : i32
    return %arg0, %arg2 : i32, i32
  }
  func.func @transform_1(%arg0: i32, %arg1: i32, %arg2: i32) -> (i32, i32) {
    %c0_i32 = arith.constant 0 : i32
    return %arg2, %arg1 : i32, i32
  }
  func.func @transform_2(%arg0: i32, %arg1: i32, %arg2: i32) -> (i32, i32) {
    %c0_i32 = arith.constant 0 : i32
    %c0_i32_0 = arith.constant 0 : i32
    return %c0_i32, %arg1 : i32, i32
  }
  func.func @transform_3(%arg0: i32, %arg1: i32, %arg2: i32) -> (i32, i32) {
    %c0_i32 = arith.constant 0 : i32
    return %arg0, %arg1 : i32, i32
  }
}

module attributes {stable_mosaic.version = 11 : i64} {
  func.func @kernel(%arg0: i32, %arg1: i32, %arg2: i32, %arg3: memref<8x8x128xbf16, #tpu.memory_space<vmem>>, %arg4: memref<8x8x128xbf16, #tpu.memory_space<vmem>>, %arg5: memref<8x8x128xbf16, #tpu.memory_space<vmem>>, %arg6: memref<8x8x128xbf16, #tpu.memory_space<vmem>>, %arg7: memref<8x8x1xf32, #tpu.memory_space<vmem>>, %arg8: memref<8x8x1xf32, #tpu.memory_space<vmem>>, %arg9: memref<8x8x128xf32, #tpu.memory_space<vmem>>) attributes {dimension_semantics = [#tpu.dimension_semantics<parallel>, #tpu.dimension_semantics<parallel>, #tpu.dimension_semantics<arbitrary>], iteration_bounds = array<i64: 1, 1, 1>, scalar_prefetch = 0 : i64, scratch_operands = 3 : i64, tpu.core_type = #tpu.core_type<tc>, window_params = [{transform_indices = @transform_0, window_bounds = array<i64: 8, 8, 128>}, {transform_indices = @transform_1, window_bounds = array<i64: 8, 8, 128>}, {transform_indices = @transform_2, window_bounds = array<i64: 8, 8, 128>}, {transform_indices = @transform_3, window_bounds = array<i64: 8, 8, 128>}]} {
    %c0_i32 = arith.constant 0 : i32
    %0 = arith.cmpi eq, %arg2, %c0_i32 : i32
    %1 = arith.extui %0 : i1 to i32
    %c0_i32_0 = arith.constant 0 : i32
    %2 = arith.cmpi ne, %1, %c0_i32_0 : i32
    scf.if %2 {
      %cst = arith.constant 0xFF800000 : f32
      %13 = vector.broadcast %cst : f32 to vector<8x8x1xf32>
      %c0 = arith.constant 0 : index
      %c0_6 = arith.constant 0 : index
      %c0_7 = arith.constant 0 : index
      %14 = vector.load %arg7[%c0, %c0_6, %c0_7] : memref<8x8x1xf32, #tpu.memory_space<vmem>>, vector<8x8x1xf32>
      tpu.vector_store %arg7[%c0, %c0_6, %c0_7], %13 {strides = array<i32>} : memref<8x8x1xf32, #tpu.memory_space<vmem>>, vector<8x8x1xf32>,
      %cst_8 = arith.constant 0.000000e+00 : f32
      %15 = vector.broadcast %cst_8 : f32 to vector<8x8x1xf32>
      %c0_9 = arith.constant 0 : index
      %c0_10 = arith.constant 0 : index
      %c0_11 = arith.constant 0 : index
      %16 = vector.load %arg8[%c0_9, %c0_10, %c0_11] : memref<8x8x1xf32, #tpu.memory_space<vmem>>, vector<8x8x1xf32>
      tpu.vector_store %arg8[%c0_9, %c0_10, %c0_11], %15 {strides = array<i32>} : memref<8x8x1xf32, #tpu.memory_space<vmem>>, vector<8x8x1xf32>,
      %cst_12 = arith.constant 0.000000e+00 : f32
      %17 = vector.broadcast %cst_12 : f32 to vector<8x8x128xf32>
      %c0_13 = arith.constant 0 : index
      %c0_14 = arith.constant 0 : index
      %c0_15 = arith.constant 0 : index
      %18 = vector.load %arg9[%c0_13, %c0_14, %c0_15] : memref<8x8x128xf32, #tpu.memory_space<vmem>>, vector<8x8x128xf32>
      tpu.vector_store %arg9[%c0_13, %c0_14, %c0_15], %17 {strides = array<i32>} : memref<8x8x128xf32, #tpu.memory_space<vmem>>, vector<8x8x128xf32>,
    } else {
    }
    %c8_i32 = arith.constant 8 : i32
    %3 = arith.muli %arg2, %c8_i32 : i32
    %c8_i32_1 = arith.constant 8 : i32
    %4 = arith.muli %arg1, %c8_i32_1 : i32
    %c8_i32_2 = arith.constant 8 : i32
    %5 = arith.addi %4, %c8_i32_2 : i32
    %c1_i32 = arith.constant 1 : i32
    %6 = arith.subi %5, %c1_i32 : i32
    %7 = arith.cmpi sle, %3, %6 : i32
    %8 = arith.extui %7 : i1 to i32
    %c0_i32_3 = arith.constant 0 : i32
    %9 = arith.cmpi ne, %8, %c0_i32_3 : i32
    scf.if %9 {
      %c0 = arith.constant 0 : index
      %c0_6 = arith.constant 0 : index
      %c0_7 = arith.constant 0 : index
      %13 = vector.load %arg3[%c0, %c0_6, %c0_7] : memref<8x8x128xbf16, #tpu.memory_space<vmem>>, vector<8x8x128xbf16>
      %c0_8 = arith.constant 0 : index
      %c0_9 = arith.constant 0 : index
      %c0_10 = arith.constant 0 : index
      %14 = vector.load %arg4[%c0_8, %c0_9, %c0_10] : memref<8x8x128xbf16, #tpu.memory_space<vmem>>, vector<8x8x128xbf16>
      %cst = arith.constant dense<0.000000e+00> : vector<8x8x8xf32>
      %15 = tpu.matmul %13, %14, %cst {dimension_numbers = #tpu.dot_dimension_numbers<[2], [2], [1], [1], [0, 0, 0, 1, 1, 1], [0], [0]>} : vector<8x8x128xbf16>, vector<8x8x128xbf16>, vector<8x8x8xf32> -> vector<8x8x8xf32>
      %cst_11 = arith.constant 5.000000e-01 : f32
      %16 = vector.broadcast %cst_11 : f32 to vector<8x8x8xf32>
      %17 = arith.mulf %15, %16 : vector<8x8x8xf32>
      %c8_i32_12 = arith.constant 8 : i32
      %18 = arith.muli %arg1, %c8_i32_12 : i32
      %19 = tpu.iota {dimensions = array<i32: 0>} : vector<8x8xi32>
      %20 = vector.broadcast %18 : i32 to vector<8x8xi32>
      %21 = arith.addi %20, %19 : vector<8x8xi32>
      %c8_i32_13 = arith.constant 8 : i32
      %22 = arith.muli %arg2, %c8_i32_13 : i32
      %23 = tpu.iota {dimensions = array<i32: 1>} : vector<8x8xi32>
      %24 = vector.broadcast %22 : i32 to vector<8x8xi32>
      %25 = arith.addi %24, %23 : vector<8x8xi32>
      %26 = arith.cmpi sle, %25, %21 : vector<8x8xi32>
      %c3_i32 = arith.constant 3 : i32
      %27 = vector.broadcast %c3_i32 : i32 to vector<8x8xi32>
      %28 = arith.cmpi slt, %25, %27 : vector<8x8xi32>
      %29 = arith.andi %26, %28 : vector<8x8xi1>
      %30 = vector.shape_cast %29 : vector<8x8xi1> to vector<1x8x8xi1>
      %cst_14 = arith.constant -1.000000e+30 : f32
      %31 = vector.shape_cast %30 : vector<1x8x8xi1> to vector<1x8x8xi1>
      %32 = vector.broadcast %31 : vector<1x8x8xi1> to vector<8x8x8xi1>
      %33 = vector.broadcast %cst_14 : f32 to vector<8x8x8xf32>
      %34 = arith.select %32, %17, %33 : vector<8x8x8xi1>, vector<8x8x8xf32>
      %c0_15 = arith.constant 0 : index
      %c0_16 = arith.constant 0 : index
      %c0_17 = arith.constant 0 : index
      %35 = vector.load %arg7[%c0_15, %c0_16, %c0_17] : memref<8x8x1xf32, #tpu.memory_space<vmem>>, vector<8x8x1xf32>
      %cst_18 = arith.constant dense<0xFF800000> : vector<8x8xf32>
      %36 = vector.multi_reduction <maximumf>, %34, %cst_18 [2] : vector<8x8x8xf32> to vector<8x8xf32>
      %37 = vector.shape_cast %36 : vector<8x8xf32> to vector<8x8x1xf32>
      %38 = arith.maximumf %35, %37 : vector<8x8x1xf32>
      %39 = arith.subf %35, %38 : vector<8x8x1xf32>
      %40 = math.exp %39 : vector<8x8x1xf32>
      %41 = vector.broadcast %38 : vector<8x8x1xf32> to vector<8x8x8xf32>
      %42 = arith.subf %34, %41 : vector<8x8x8xf32>
      %43 = math.exp %42 : vector<8x8x8xf32>
      %c0_19 = arith.constant 0 : index
      %c0_20 = arith.constant 0 : index
      %c0_21 = arith.constant 0 : index
      %44 = vector.load %arg8[%c0_19, %c0_20, %c0_21] : memref<8x8x1xf32, #tpu.memory_space<vmem>>, vector<8x8x1xf32>
      %45 = arith.mulf %40, %44 : vector<8x8x1xf32>
      %cst_22 = arith.constant dense<0.000000e+00> : vector<8x8xf32>
      %46 = vector.multi_reduction <add>, %43, %cst_22 [2] : vector<8x8x8xf32> to vector<8x8xf32>
      %47 = vector.shape_cast %46 : vector<8x8xf32> to vector<8x8x1xf32>
      %48 = arith.addf %45, %47 : vector<8x8x1xf32>
      %c0_23 = arith.constant 0 : index
      %c0_24 = arith.constant 0 : index
      %c0_25 = arith.constant 0 : index
      %49 = vector.load %arg8[%c0_23, %c0_24, %c0_25] : memref<8x8x1xf32, #tpu.memory_space<vmem>>, vector<8x8x1xf32>
      tpu.vector_store %arg8[%c0_23, %c0_24, %c0_25], %48 {strides = array<i32>} : memref<8x8x1xf32, #tpu.memory_space<vmem>>, vector<8x8x1xf32>,
      %c0_26 = arith.constant 0 : index
      %c0_27 = arith.constant 0 : index
      %c0_28 = arith.constant 0 : index
      %50 = vector.load %arg9[%c0_26, %c0_27, %c0_28] : memref<8x8x128xf32, #tpu.memory_space<vmem>>, vector<8x8x128xf32>
      %51 = vector.broadcast %40 : vector<8x8x1xf32> to vector<8x8x128xf32>
      %52 = arith.mulf %51, %50 : vector<8x8x128xf32>
      %53 = arith.truncf %43 : vector<8x8x8xf32> to vector<8x8x8xbf16>
      %c0_29 = arith.constant 0 : index
      %c0_30 = arith.constant 0 : index
      %c0_31 = arith.constant 0 : index
      %54 = vector.load %arg5[%c0_29, %c0_30, %c0_31] : memref<8x8x128xbf16, #tpu.memory_space<vmem>>, vector<8x8x128xbf16>
      %cst_32 = arith.constant dense<0.000000e+00> : vector<8x8x128xf32>
      %55 = tpu.matmul %53, %54, %cst_32 {dimension_numbers = #tpu.dot_dimension_numbers<[2], [1], [1], [2], [0, 0, 0, 1, 1, 2], [0], [0]>} : vector<8x8x8xbf16>, vector<8x8x128xbf16>, vector<8x8x128xf32> -> vector<8x8x128xf32>
      %56 = arith.addf %52, %55 : vector<8x8x128xf32>
      %c0_33 = arith.constant 0 : index
      %c0_34 = arith.constant 0 : index
      %c0_35 = arith.constant 0 : index
      %57 = vector.load %arg9[%c0_33, %c0_34, %c0_35] : memref<8x8x128xf32, #tpu.memory_space<vmem>>, vector<8x8x128xf32>
      tpu.vector_store %arg9[%c0_33, %c0_34, %c0_35], %56 {strides = array<i32>} : memref<8x8x128xf32, #tpu.memory_space<vmem>>, vector<8x8x128xf32>,
      %c0_36 = arith.constant 0 : index
      %c0_37 = arith.constant 0 : index
      %c0_38 = arith.constant 0 : index
      %58 = vector.load %arg7[%c0_36, %c0_37, %c0_38] : memref<8x8x1xf32, #tpu.memory_space<vmem>>, vector<8x8x1xf32>
      tpu.vector_store %arg7[%c0_36, %c0_37, %c0_38], %38 {strides = array<i32>} : memref<8x8x1xf32, #tpu.memory_space<vmem>>, vector<8x8x1xf32>,
    } else {
    }
    %c0_i32_4 = arith.constant 0 : i32
    %10 = arith.cmpi eq, %arg2, %c0_i32_4 : i32
    %11 = arith.extui %10 : i1 to i32
    %c0_i32_5 = arith.constant 0 : i32
    %12 = arith.cmpi ne, %11, %c0_i32_5 : i32
    scf.if %12 {
      %c0 = arith.constant 0 : index
      %c0_6 = arith.constant 0 : index
      %c0_7 = arith.constant 0 : index
      %13 = vector.load %arg9[%c0, %c0_6, %c0_7] : memref<8x8x128xf32, #tpu.memory_space<vmem>>, vector<8x8x128xf32>
      %c0_8 = arith.constant 0 : index
      %c0_9 = arith.constant 0 : index
      %c0_10 = arith.constant 0 : index
      %14 = vector.load %arg8[%c0_8, %c0_9, %c0_10] : memref<8x8x1xf32, #tpu.memory_space<vmem>>, vector<8x8x1xf32>
      %15 = vector.broadcast %14 : vector<8x8x1xf32> to vector<8x8x128xf32>
      %16 = arith.divf %13, %15 : vector<8x8x128xf32>
      %17 = arith.truncf %16 : vector<8x8x128xf32> to vector<8x8x128xbf16>
      %c0_11 = arith.constant 0 : index
      %c0_12 = arith.constant 0 : index
      %c0_13 = arith.constant 0 : index
      %18 = vector.load %arg6[%c0_11, %c0_12, %c0_13] : memref<8x8x128xbf16, #tpu.memory_space<vmem>>, vector<8x8x128xbf16>
      tpu.vector_store %arg6[%c0_11, %c0_12, %c0_13], %17 {strides = array<i32>} : memref<8x8x128xbf16, #tpu.memory_space<vmem>>, vector<8x8x128xbf16>,
    } else {
    }
    return
  }
  func.func @transform_0(%arg0: i32, %arg1: i32, %arg2: i32) -> (i32, i32, i32) {
    %c0_i32 = arith.constant 0 : i32
    %c0_i32_0 = arith.constant 0 : i32
    return %arg0, %arg1, %c0_i32 : i32, i32, i32
  }
  func.func @transform_1(%arg0: i32, %arg1: i32, %arg2: i32) -> (i32, i32, i32) {
    %c0_i32 = arith.constant 0 : i32
    %c0_i32_0 = arith.constant 0 : i32
    return %arg0, %arg2, %c0_i32 : i32, i32, i32
  }
  func.func @transform_2(%arg0: i32, %arg1: i32, %arg2: i32) -> (i32, i32, i32) {
    %c0_i32 = arith.constant 0 : i32
    %c0_i32_0 = arith.constant 0 : i32
    return %arg0, %arg2, %c0_i32 : i32, i32, i32
  }
  func.func @transform_3(%arg0: i32, %arg1: i32, %arg2: i32) -> (i32, i32, i32) {
    %c0_i32 = arith.constant 0 : i32
    %c0_i32_0 = arith.constant 0 : i32
    return %arg0, %arg1, %c0_i32 : i32, i32, i32
  }
}

module attributes {stable_mosaic.version = 11 : i64} {
  func.func @kernel(%arg0: i32, %arg1: memref<8x16xbf16, #tpu.memory_space<vmem>>, %arg2: memref<8x16xbf16, #tpu.memory_space<vmem>>, %arg3: memref<1x16xf32, #tpu.memory_space<vmem>>, %arg4: memref<1x16xf32, #tpu.memory_space<vmem>>, %arg5: memref<8x16xbf16, #tpu.memory_space<vmem>>) attributes {dimension_semantics = [#tpu.dimension_semantics<parallel>], iteration_bounds = array<i64: 1>, scalar_prefetch = 0 : i64, scratch_operands = 0 : i64, tpu.core_type = #tpu.core_type<tc>, window_params = [{transform_indices = @transform_0, window_bounds = array<i64: 8, 16>}, {transform_indices = @transform_1, window_bounds = array<i64: 8, 16>}, {pipeline_mode = #tpu.pipeline_mode<synchronous>, transform_indices = @transform_2, window_bounds = array<i64: 1, 16>}, {pipeline_mode = #tpu.pipeline_mode<synchronous>, transform_indices = @transform_3, window_bounds = array<i64: 1, 16>}, {transform_indices = @transform_4, window_bounds = array<i64: 8, 16>}]} {
    %c0 = arith.constant 0 : index
    %c0_0 = arith.constant 0 : index
    %0 = vector.load %arg1[%c0, %c0_0] : memref<8x16xbf16, #tpu.memory_space<vmem>>, vector<8x16xbf16>
    %1 = arith.extf %0 : vector<8x16xbf16> to vector<8x16xf32>
    %c0_1 = arith.constant 0 : index
    %c0_2 = arith.constant 0 : index
    %2 = vector.load %arg2[%c0_1, %c0_2] : memref<8x16xbf16, #tpu.memory_space<vmem>>, vector<8x16xbf16>
    %3 = arith.extf %2 : vector<8x16xbf16> to vector<8x16xf32>
    %4 = arith.addf %1, %3 : vector<8x16xf32>
    %cst = arith.constant dense<0.000000e+00> : vector<8xf32>
    %5 = vector.multi_reduction <add>, %4, %cst [1] : vector<8x16xf32> to vector<8xf32>
    %6 = vector.shape_cast %5 : vector<8xf32> to vector<8x1xf32>
    %cst_3 = arith.constant 1.600000e+01 : f32
    %7 = vector.broadcast %cst_3 : f32 to vector<8x1xf32>
    %8 = arith.divf %6, %7 : vector<8x1xf32>
    %9 = vector.broadcast %8 : vector<8x1xf32> to vector<8x16xf32>
    %10 = arith.subf %4, %9 : vector<8x16xf32>
    %11 = arith.mulf %10, %10 : vector<8x16xf32>
    %cst_4 = arith.constant dense<0.000000e+00> : vector<8xf32>
    %12 = vector.multi_reduction <add>, %11, %cst_4 [1] : vector<8x16xf32> to vector<8xf32>
    %13 = vector.shape_cast %12 : vector<8xf32> to vector<8x1xf32>
    %cst_5 = arith.constant 1.600000e+01 : f32
    %14 = vector.broadcast %cst_5 : f32 to vector<8x1xf32>
    %15 = arith.divf %13, %14 : vector<8x1xf32>
    %cst_6 = arith.constant 9.99999974E-6 : f32
    %16 = vector.broadcast %cst_6 : f32 to vector<8x1xf32>
    %17 = arith.addf %15, %16 : vector<8x1xf32>
    %18 = math.rsqrt %17 : vector<8x1xf32>
    %19 = vector.broadcast %18 : vector<8x1xf32> to vector<8x16xf32>
    %20 = arith.mulf %10, %19 : vector<8x16xf32>
    %c0_7 = arith.constant 0 : index
    %c0_8 = arith.constant 0 : index
    %21 = vector.load %arg3[%c0_7, %c0_8] : memref<1x16xf32, #tpu.memory_space<vmem>>, vector<1x16xf32>
    %22 = vector.broadcast %21 : vector<1x16xf32> to vector<8x16xf32>
    %23 = arith.mulf %20, %22 : vector<8x16xf32>
    %c0_9 = arith.constant 0 : index
    %c0_10 = arith.constant 0 : index
    %24 = vector.load %arg4[%c0_9, %c0_10] : memref<1x16xf32, #tpu.memory_space<vmem>>, vector<1x16xf32>
    %25 = vector.broadcast %24 : vector<1x16xf32> to vector<8x16xf32>
    %26 = arith.addf %23, %25 : vector<8x16xf32>
    %27 = arith.truncf %26 : vector<8x16xf32> to vector<8x16xbf16>
    %c0_11 = arith.constant 0 : index
    %c0_12 = arith.constant 0 : index
    %28 = vector.load %arg5[%c0_11, %c0_12] : memref<8x16xbf16, #tpu.memory_space<vmem>>, vector<8x16xbf16>
    tpu.vector_store %arg5[%c0_11, %c0_12], %27 {strides = array<i32>} : memref<8x16xbf16, #tpu.memory_space<vmem>>, vector<8x16xbf16>,
    return
  }
  func.func @transform_0(%arg0: i32) -> (i32, i32) {
    %c0_i32 = arith.constant 0 : i32
    %c0_i32_0 = arith.constant 0 : i32
    return %arg0, %c0_i32 : i32, i32
  }
  func.func @transform_1(%arg0: i32) -> (i32, i32) {
    %c0_i32 = arith.constant 0 : i32
    %c0_i32_0 = arith.constant 0 : i32
    return %arg0, %c0_i32 : i32, i32
  }
  func.func @transform_2(%arg0: i32) -> (i32, i32) {
    %c0_i32 = arith.constant 0 : i32
    %c0_i32_0 = arith.constant 0 : i32
    %c0_i32_1 = arith.constant 0 : i32
    return %c0_i32, %c0_i32_0 : i32, i32
  }
  func.func @transform_3(%arg0: i32) -> (i32, i32) {
    %c0_i32 = arith.constant 0 : i32
    %c0_i32_0 = arith.constant 0 : i32
    %c0_i32_1 = arith.constant 0 : i32
    return %c0_i32, %c0_i32_0 : i32, i32
  }
  func.func @transform_4(%arg0: i32) -> (i32, i32) {
    %c0_i32 = arith.constant 0 : i32
    %c0_i32_0 = arith.constant 0 : i32
    return %arg0, %c0_i32 : i32, i32
  }
}

module attributes {stable_mosaic.version = 11 : i64} {
  func.func @kernel(%arg0: i32, %arg1: i32, %arg2: i32, %arg3: memref<32x128xbf16, #tpu.memory_space<vmem>>, %arg4: memref<128x128xbf16, #tpu.memory_space<vmem>>, %arg5: memref<1x128xf32, #tpu.memory_space<vmem>>, %arg6: memref<32x128xbf16, #tpu.memory_space<vmem>>, %arg7: memref<32x128xf32, #tpu.memory_space<vmem>>) attributes {dimension_semantics = [#tpu.dimension_semantics<parallel>, #tpu.dimension_semantics<parallel>, #tpu.dimension_semantics<arbitrary>], iteration_bounds = array<i64: 1, 1, 1>, scalar_prefetch = 0 : i64, scratch_operands = 1 : i64, tpu.core_type = #tpu.core_type<tc>, window_params = [{transform_indices = @transform_0, window_bounds = array<i64: 32, 128>}, {transform_indices = @transform_1, window_bounds = array<i64: 128, 128>}, {transform_indices = @transform_2, window_bounds = array<i64: 1, 128>}, {transform_indices = @transform_3, window_bounds = array<i64: 32, 128>}]} {
    %c0_i32 = arith.constant 0 : i32
    %0 = arith.cmpi eq, %arg2, %c0_i32 : i32
    %1 = arith.extui %0 : i1 to i32
    %c0_i32_0 = arith.constant 0 : i32
    %2 = arith.cmpi ne, %1, %c0_i32_0 : i32
    scf.if %2 {
      %cst_10 = arith.constant 0.000000e+00 : f32
      %12 = vector.broadcast %cst_10 : f32 to vector<32x128xf32>
      %c0_11 = arith.constant 0 : index
      %c0_12 = arith.constant 0 : index
      %13 = vector.load %arg7[%c0_11, %c0_12] : memref<32x128xf32, #tpu.memory_space<vmem>>, vector<32x128xf32>
      tpu.vector_store %arg7[%c0_11, %c0_12], %12 {strides = array<i32>} : memref<32x128xf32, #tpu.memory_space<vmem>>, vector<32x128xf32>,
    } else {
    }
    %c0 = arith.constant 0 : index
    %c0_1 = arith.constant 0 : index
    %3 = vector.load %arg7[%c0, %c0_1] : memref<32x128xf32, #tpu.memory_space<vmem>>, vector<32x128xf32>
    %c0_2 = arith.constant 0 : index
    %c0_3 = arith.constant 0 : index
    %4 = vector.load %arg3[%c0_2, %c0_3] : memref<32x128xbf16, #tpu.memory_space<vmem>>, vector<32x128xbf16>
    %c0_4 = arith.constant 0 : index
    %c0_5 = arith.constant 0 : index
    %5 = vector.load %arg4[%c0_4, %c0_5] : memref<128x128xbf16, #tpu.memory_space<vmem>>, vector<128x128xbf16>
    %cst = arith.constant dense<0.000000e+00> : vector<32x128xf32>
    %6 = tpu.matmul %4, %5, %cst {dimension_numbers = #tpu.dot_dimension_numbers<[1], [0], [0], [1], [0, 0, 1, 1], [], []>} : vector<32x128xbf16>, vector<128x128xbf16>, vector<32x128xf32> -> vector<32x128xf32>
    %7 = arith.addf %3, %6 : vector<32x128xf32>
    %c0_6 = arith.constant 0 : index
    %c0_7 = arith.constant 0 : index
    %8 = vector.load %arg7[%c0_6, %c0_7] : memref<32x128xf32, #tpu.memory_space<vmem>>, vector<32x128xf32>
    tpu.vector_store %arg7[%c0_6, %c0_7], %7 {strides = array<i32>} : memref<32x128xf32, #tpu.memory_space<vmem>>, vector<32x128xf32>,
    %c0_i32_8 = arith.constant 0 : i32
    %9 = arith.cmpi eq, %arg2, %c0_i32_8 : i32
    %10 = arith.extui %9 : i1 to i32
    %c0_i32_9 = arith.constant 0 : i32
    %11 = arith.cmpi ne, %10, %c0_i32_9 : i32
    scf.if %11 {
      %c0_10 = arith.constant 0 : index
      %c0_11 = arith.constant 0 : index
      %12 = vector.load %arg7[%c0_10, %c0_11] : memref<32x128xf32, #tpu.memory_space<vmem>>, vector<32x128xf32>
      %c0_12 = arith.constant 0 : index
      %c0_13 = arith.constant 0 : index
      %13 = vector.load %arg5[%c0_12, %c0_13] : memref<1x128xf32, #tpu.memory_space<vmem>>, vector<1x128xf32>
      %14 = vector.broadcast %13 : vector<1x128xf32> to vector<32x128xf32>
      %15 = arith.addf %12, %14 : vector<32x128xf32>
      %16 = arith.truncf %15 : vector<32x128xf32> to vector<32x128xbf16>
      %c0_14 = arith.constant 0 : index
      %c0_15 = arith.constant 0 : index
      %17 = vector.load %arg6[%c0_14, %c0_15] : memref<32x128xbf16, #tpu.memory_space<vmem>>, vector<32x128xbf16>
      tpu.vector_store %arg6[%c0_14, %c0_15], %16 {strides = array<i32>} : memref<32x128xbf16, #tpu.memory_space<vmem>>, vector<32x128xbf16>,
    } else {
    }
    return
  }
  func.func @transform_0(%arg0: i32, %arg1: i32, %arg2: i32) -> (i32, i32) {
    %c0_i32 = arith.constant 0 : i32
    return %arg0, %arg2 : i32, i32
  }
  func.func @transform_1(%arg0: i32, %arg1: i32, %arg2: i32) -> (i32, i32) {
    %c0_i32 = arith.constant 0 : i32
    return %arg2, %arg1 : i32, i32
  }
  func.func @transform_2(%arg0: i32, %arg1: i32, %arg2: i32) -> (i32, i32) {
    %c0_i32 = arith.constant 0 : i32
    %c0_i32_0 = arith.constant 0 : i32
    return %c0_i32, %arg1 : i32, i32
  }
  func.func @transform_3(%arg0: i32, %arg1: i32, %arg2: i32) -> (i32, i32) {
    %c0_i32 = arith.constant 0 : i32
    return %arg0, %arg1 : i32, i32
  }
}

</mosaic_0001>

<llo_original>
// kernel: _lambda_.36
$region0: #{_lambda_.36}
  #allocation0 [shape = 'u32[]', space=smem, size = 0x4, offset = 0x4, fixed_abs, tag = 'smem constant byte address 0x4 - core index']
  #allocation1 [shape = 'u32[144,128]{1,0:T(1,128)}', space=vmem, size = 0x12000, scoped, tag = 'internal scratch']
  #allocation2 [shape = 'f32[32,128]{1,0:T(8,128)}', space=vmem, size = 0x4000, scoped, tag = 'scratch operand']
  %s0 = inlined_call_operand.vmem [shape: bf16[32,128], index: 0, kind: input, shape index: {}]
  %s1 = inlined_call_operand.vmem [shape: bf16[128,128], index: 1, kind: input, shape index: {}]
  %s2 = inlined_call_operand.vmem [shape: f32[1,128], index: 2, kind: input, shape index: {}]
  %s3 = inlined_call_operand.vmem [shape: bf16[32,128], index: 3, kind: output, shape index: {}]
  %s4 = sld [smem:[#allocation0]]
  $region30: #{_lambda_.36} parent=0
    _
  %s6 = ssub.s32 1, %s4
  %s7 = scalar_select 0, %s6, %s4
  // Predicated region
  $region2: #{_lambda_.36} parent=0 // pred_check
    _
  $region3: #{_lambda_.36} parent=0 // pred_check_branch
    %9 = sbr.rel (0) target = $region5
  $region4: #{_lambda_.36} parent=0 // pred_region
    _
  $region5: #{_lambda_.36} parent=0 // pred_fallthru
    _
  // Predicated region
  $region6: #{_lambda_.36} parent=0 // pred_check
    _
  $region7: #{_lambda_.36} parent=0 // pred_check_branch
    %11 = sbr.rel (0) target = $region9
  $region8: #{_lambda_.36} parent=0 // pred_region
    _
  $region9: #{_lambda_.36} parent=0 // pred_fallthru
    _
  // Predicated region
  $region10: #{_lambda_.36} parent=0 // pred_check
    _
  $region11: #{_lambda_.36} parent=0 // pred_check_branch
    %13 = sbr.rel (0) target = $region13
  $region12: #{_lambda_.36} parent=0 // pred_region
    _
  $region13: #{_lambda_.36} parent=0 // pred_fallthru
    _
  %p15 = scmp.eq.s32.totalorder 0, 0
  // Predicated region
  $region14: #{_lambda_.36} parent=0 // pred_check
    %p16 = pneg %p15
  $region15: #{_lambda_.36} parent=0 // pred_check_branch
    %18 = sbr.rel (%p16) target = $region17
  $region16: #{_lambda_.36} parent=0 // pred_region
    %19 = vst [vmem:[#allocation2] sm:$0xff] 0.0
    %20 = vst [vmem:[#allocation2 + $0x8] sm:$0xff] 0.0
    %21 = vst [vmem:[#allocation2 + $0x10] sm:$0xff] 0.0
    %22 = vst [vmem:[#allocation2 + $0x18] sm:$0xff] 0.0
  $region17: #{_lambda_.36} parent=0 // pred_fallthru
    _
  %v23 = vld [vmem:[#allocation2] sm:$0xff]
  %v24 = vld [vmem:[#allocation2 + $0x8] sm:$0xff]
  %v25 = vld [vmem:[#allocation2 + $0x10] sm:$0xff]
  %v26 = vld [vmem:[#allocation2 + $0x18] sm:$0xff]
  %v27 = vld [vmem:[%s0] sm:$0xf]
  %v28 = vld [vmem:[%s0 + $0x4] sm:$0xf]
  %v29 = vld [vmem:[%s0 + $0x8] sm:$0xf]
  %v30 = vld [vmem:[%s0 + $0xc] sm:$0xf]
  %v31 = vld [vmem:[%s1] sm:$0xf]
  %v32 = vld [vmem:[%s1 + $0x4] sm:$0xf]
  %v33 = vld [vmem:[%s1 + $0x8] sm:$0xf]
  %v34 = vld [vmem:[%s1 + $0xc] sm:$0xf]
  %v35 = vld [vmem:[%s1 + $0x10] sm:$0xf]
  %v36 = vld [vmem:[%s1 + $0x14] sm:$0xf]
  %v37 = vld [vmem:[%s1 + $0x18] sm:$0xf]
  %v38 = vld [vmem:[%s1 + $0x1c] sm:$0xf]
  %v39 = vld [vmem:[%s1 + $0x20] sm:$0xf]
  %v40 = vld [vmem:[%s1 + $0x24] sm:$0xf]
  %v41 = vld [vmem:[%s1 + $0x28] sm:$0xf]
  %v42 = vld [vmem:[%s1 + $0x2c] sm:$0xf]
  %v43 = vld [vmem:[%s1 + $0x30] sm:$0xf]
  %v44 = vld [vmem:[%s1 + $0x34] sm:$0xf]
  %v45 = vld [vmem:[%s1 + $0x38] sm:$0xf]
  %v46 = vld [vmem:[%s1 + $0x3c] sm:$0xf]
  %v51 = vunpack.c.l.b16 %v27
  %v52 = vunpack.c.l.b16 %v28
  %v53 = vunpack.c.l.b16 %v29
  %v54 = vunpack.c.l.b16 %v30
  %v55 = vpack.c.b16 %v52, %v51
  %v56 = vpack.c.b16 %v54, %v53
  %v75 = vunpack.c.l.b16 %v31
  %v76 = vunpack.c.l.b16 %v32
  %v77 = vunpack.c.l.b16 %v33
  %v78 = vunpack.c.l.b16 %v34
  %v79 = vunpack.c.l.b16 %v35
  %v80 = vunpack.c.l.b16 %v36
  %v81 = vunpack.c.l.b16 %v37
  %v82 = vunpack.c.l.b16 %v38
  %v83 = vunpack.c.l.b16 %v39
  %v84 = vunpack.c.l.b16 %v40
  %v85 = vunpack.c.l.b16 %v41
  %v86 = vunpack.c.l.b16 %v42
  %v87 = vunpack.c.l.b16 %v43
  %v88 = vunpack.c.l.b16 %v44
  %v89 = vunpack.c.l.b16 %v45
  %v90 = vunpack.c.l.b16 %v46
  %v91 = vpack.c.b16 %v76, %v75
  %v92 = vpack.c.b16 %v78, %v77
  %v93 = vpack.c.b16 %v80, %v79
  %v94 = vpack.c.b16 %v82, %v81
  %v95 = vpack.c.b16 %v84, %v83
  %v96 = vpack.c.b16 %v86, %v85
  %v97 = vpack.c.b16 %v88, %v87
  %v98 = vpack.c.b16 %v90, %v89
  %107 = vmatprep.subr.bf16.mxu0 0
  %108 = vmatpush1.bf16.msra.mxu0 %v98
  %109 = vmatprep.subr.bf16.mxu0 0
  %110 = vmatpush1.bf16.msra.mxu0 %v97
  %111 = vmatprep.subr.bf16.mxu0 0
  %112 = vmatpush1.bf16.msra.mxu0 %v96
  %113 = vmatprep.subr.bf16.mxu0 0
  %114 = vmatpush1.bf16.msra.mxu0 %v95
  %115 = vmatprep.subr.bf16.mxu0 0
  %116 = vmatpush1.bf16.msra.mxu0 %v94
  %117 = vmatprep.subr.bf16.mxu0 0
  %118 = vmatpush1.bf16.msra.mxu0 %v93
  %119 = vmatprep.subr.bf16.mxu0 0
  %120 = vmatpush1.bf16.msra.mxu0 %v92
  %121 = vmatprep.subr.bf16.mxu0 0
  %122 = vmatpush1.bf16.msra.mxu0 %v91
  %123 = vmatprep.subr.bf16.mxu0 0
  %124 = vmatpush2.bf16.msra.mxu0 0
  %125 = vmatprep.subr.bf16.mxu0 0
  %126 = vmatpush2.bf16.msra.mxu0 0
  %127 = vmatprep.subr.bf16.mxu0 0
  %128 = vmatpush2.bf16.msra.mxu0 0
  %129 = vmatprep.subr.bf16.mxu0 0
  %130 = vmatpush2.bf16.msra.mxu0 0
  %131 = vmatprep.subr.bf16.mxu0 0
  %132 = vmatpush2.bf16.msra.mxu0 0
  %133 = vmatprep.subr.bf16.mxu0 0
  %134 = vmatpush2.bf16.msra.mxu0 0
  %135 = vmatprep.subr.bf16.mxu0 0
  %136 = vmatpush2.bf16.msra.mxu0 0
  %137 = vmatprep.subr.bf16.mxu0 0
  %138 = vmatpush2.bf16.msra.mxu0 0
  %139 = vmatprep.mubr.bf16.mxu0 0
  %140 = vmatmul.mubr.bf16.gmra.mxu0 %v55
  %v141 = vpop.f32.mrf.mxu0
  %v142 = vadd.f32 0.0, %v141
  %v143 = vpop.f32.mrf.mxu0
  %v144 = vpop.f32.mrf.mxu0
  %v145 = vadd.f32 0.0, %v144
  %v146 = vpop.f32.mrf.mxu0
  %147 = vmatprep.mubr.bf16.mxu0 0
  %148 = vmatmul.mubr.bf16.gmra.mxu0 %v56
  %v149 = vpop.f32.mrf.mxu0
  %v150 = vadd.f32 0.0, %v149
  %v151 = vpop.f32.mrf.mxu0
  %v152 = vpop.f32.mrf.mxu0
  %v153 = vadd.f32 0.0, %v152
  %v154 = vpop.f32.mrf.mxu0
  %155 = vdwg.mxu0
  %v156 = vadd.f32 %v23, %v142
  %v157 = vadd.f32 %v24, %v145
  %v158 = vadd.f32 %v25, %v150
  %v159 = vadd.f32 %v26, %v153
  %160 = vst [vmem:[#allocation2] sm:$0xff] %v156
  %161 = vst [vmem:[#allocation2 + $0x8] sm:$0xff] %v157
  %162 = vst [vmem:[#allocation2 + $0x10] sm:$0xff] %v158
  %163 = vst [vmem:[#allocation2 + $0x18] sm:$0xff] %v159
  // Predicated region
  $region18: #{_lambda_.36} parent=0 // pred_check
    %p164 = pneg %p15
  $region19: #{_lambda_.36} parent=0 // pred_check_branch
    %166 = sbr.rel (%p164) target = $region21
  $region20: #{_lambda_.36} parent=0 // pred_region
    %v167 = vld [vmem:[#allocation2] sm:$0xff]
    %v168 = vld [vmem:[#allocation2 + $0x8] sm:$0xff]
    %v169 = vld [vmem:[#allocation2 + $0x10] sm:$0xff]
    %v170 = vld [vmem:[#allocation2 + $0x18] sm:$0xff]
    %v171 = vld [vmem:[%s2] sm:$0x1]
    %v173 = vlaneseq
    %v174 = vshrl.u32 %v173, 7
    %v175 = vsub.s32 0, %v174
    %v176 = vrot.slane %v171, %v175
    %v178 = vadd.f32 %v167, %v176
    %v179 = vadd.f32 %v168, %v176
    %v180 = vadd.f32 %v169, %v176
    %v181 = vadd.f32 %v170, %v176
    %v182 = vmax.f32 %v178, 0.0
    %v183 = vmax.f32 %v179, 0.0
    %v184 = vmax.f32 %v180, 0.0
    %v185 = vmax.f32 %v181, 0.0
    %v186 = vpack.c.bf16 %v183, %v182
    %v187 = vpack.c.bf16 %v185, %v184
    %v190 = vunpack.c.l.b16 %v186
    %v191 = vunpack.c.h.b16 %v186
    %v192 = vunpack.c.l.b16 %v187
    %v193 = vunpack.c.h.b16 %v187
    %v194 = vpack.c.b16 %v190, %v190
    %v195 = vpack.c.b16 %v191, %v191
    %v196 = vpack.c.b16 %v192, %v192
    %v197 = vpack.c.b16 %v193, %v193
    %202 = vst [vmem:[%s3] sm:$0xf] %v194
    %203 = vst [vmem:[%s3 + $0x4] sm:$0xf] %v195
    %204 = vst [vmem:[%s3 + $0x8] sm:$0xf] %v196
    %205 = vst [vmem:[%s3 + $0xc] sm:$0xf] %v197
  $region21: #{_lambda_.36} parent=0 // pred_fallthru
    _
  // Predicated region
  $region22: #{_lambda_.36} parent=0 // pred_check
    _
  $region23: #{_lambda_.36} parent=0 // pred_check_branch
    %207 = sbr.rel (0) target = $region25
  $region24: #{_lambda_.36} parent=0 // pred_region
    _
  $region25: #{_lambda_.36} parent=0 // pred_fallthru
    _
  // Predicated region
  $region26: #{_lambda_.36} parent=0 // pred_check
    _
  $region27: #{_lambda_.36} parent=0 // pred_check_branch
    %209 = sbr.rel (0) target = $region29
  $region28: #{_lambda_.36} parent=0 // pred_region
    _
  $region29: #{_lambda_.36} parent=0 // pred_fallthru
    _

// kernel: _lambda_.37
$region0: #{_lambda_.37}
  #allocation0 [shape = 'u32[]', space=smem, size = 0x4, offset = 0x4, fixed_abs, tag = 'smem constant byte address 0x4 - core index']
  #allocation1 [shape = 'u32[144,128]{1,0:T(1,128)}', space=vmem, size = 0x12000, scoped, tag = 'internal scratch']
  #allocation2 [shape = 'f32[32,256]{1,0:T(8,128)}', space=vmem, size = 0x8000, scoped, tag = 'scratch operand']
  %s0 = inlined_call_operand.vmem [shape: bf16[32,128], index: 0, kind: input, shape index: {}]
  %s1 = inlined_call_operand.vmem [shape: bf16[128,256], index: 1, kind: input, shape index: {}]
  %s2 = inlined_call_operand.vmem [shape: f32[1,256], index: 2, kind: input, shape index: {}]
  %s3 = inlined_call_operand.vmem [shape: bf16[32,128], index: 3, kind: output, shape index: {}]
  %s4 = sld [smem:[#allocation0]]
  $region30: #{_lambda_.37} parent=0
    _
  %s6 = ssub.s32 1, %s4
  %s7 = scalar_select 0, %s6, %s4
  // Predicated region
  $region2: #{_lambda_.37} parent=0 // pred_check
    _
  $region3: #{_lambda_.37} parent=0 // pred_check_branch
    %9 = sbr.rel (0) target = $region5
  $region4: #{_lambda_.37} parent=0 // pred_region
    _
  $region5: #{_lambda_.37} parent=0 // pred_fallthru
    _
  // Predicated region
  $region6: #{_lambda_.37} parent=0 // pred_check
    _
  $region7: #{_lambda_.37} parent=0 // pred_check_branch
    %11 = sbr.rel (0) target = $region9
  $region8: #{_lambda_.37} parent=0 // pred_region
    _
  $region9: #{_lambda_.37} parent=0 // pred_fallthru
    _
  // Predicated region
  $region10: #{_lambda_.37} parent=0 // pred_check
    _
  $region11: #{_lambda_.37} parent=0 // pred_check_branch
    %13 = sbr.rel (0) target = $region13
  $region12: #{_lambda_.37} parent=0 // pred_region
    _
  $region13: #{_lambda_.37} parent=0 // pred_fallthru
    _
  %p15 = scmp.eq.s32.totalorder 0, 0
  // Predicated region
  $region14: #{_lambda_.37} parent=0 // pred_check
    %p16 = pneg %p15
  $region15: #{_lambda_.37} parent=0 // pred_check_branch
    %18 = sbr.rel (%p16) target = $region17
  $region16: #{_lambda_.37} parent=0 // pred_region
    %19 = vst [vmem:[#allocation2] sm:$0xff] 0.0
    %20 = vst [vmem:[#allocation2 + $0x8] sm:$0xff] 0.0
    %21 = vst [vmem:[#allocation2 + $0x10] sm:$0xff] 0.0
    %22 = vst [vmem:[#allocation2 + $0x18] sm:$0xff] 0.0
    %23 = vst [vmem:[#allocation2 + $0x20] sm:$0xff] 0.0
    %24 = vst [vmem:[#allocation2 + $0x28] sm:$0xff] 0.0
    %25 = vst [vmem:[#allocation2 + $0x30] sm:$0xff] 0.0
    %26 = vst [vmem:[#allocation2 + $0x38] sm:$0xff] 0.0
  $region17: #{_lambda_.37} parent=0 // pred_fallthru
    _
  %v27 = vld [vmem:[#allocation2] sm:$0xff]
  %v28 = vld [vmem:[#allocation2 + $0x8] sm:$0xff]
  %v29 = vld [vmem:[#allocation2 + $0x10] sm:$0xff]
  %v30 = vld [vmem:[#allocation2 + $0x18] sm:$0xff]
  %v31 = vld [vmem:[#allocation2 + $0x20] sm:$0xff]
  %v32 = vld [vmem:[#allocation2 + $0x28] sm:$0xff]
  %v33 = vld [vmem:[#allocation2 + $0x30] sm:$0xff]
  %v34 = vld [vmem:[#allocation2 + $0x38] sm:$0xff]
  %v35 = vld [vmem:[%s0] sm:$0xf]
  %v36 = vld [vmem:[%s0 + $0x4] sm:$0xf]
  %v37 = vld [vmem:[%s0 + $0x8] sm:$0xf]
  %v38 = vld [vmem:[%s0 + $0xc] sm:$0xf]
  %v39 = vld [vmem:[%s1] sm:$0xff]
  %v40 = vld [vmem:[%s1 + $0x8] sm:$0xff]
  %v41 = vld [vmem:[%s1 + $0x10] sm:$0xff]
  %v42 = vld [vmem:[%s1 + $0x18] sm:$0xff]
  %v43 = vld [vmem:[%s1 + $0x20] sm:$0xff]
  %v44 = vld [vmem:[%s1 + $0x28] sm:$0xff]
  %v45 = vld [vmem:[%s1 + $0x30] sm:$0xff]
  %v46 = vld [vmem:[%s1 + $0x38] sm:$0xff]
  %v47 = vld [vmem:[%s1 + $0x40] sm:$0xff]
  %v48 = vld [vmem:[%s1 + $0x48] sm:$0xff]
  %v49 = vld [vmem:[%s1 + $0x50] sm:$0xff]
  %v50 = vld [vmem:[%s1 + $0x58] sm:$0xff]
  %v51 = vld [vmem:[%s1 + $0x60] sm:$0xff]
  %v52 = vld [vmem:[%s1 + $0x68] sm:$0xff]
  %v53 = vld [vmem:[%s1 + $0x70] sm:$0xff]
  %v54 = vld [vmem:[%s1 + $0x78] sm:$0xff]
  %v59 = vunpack.c.l.b16 %v35
  %v60 = vunpack.c.l.b16 %v36
  %v61 = vunpack.c.l.b16 %v37
  %v62 = vunpack.c.l.b16 %v38
  %v63 = vpack.c.b16 %v60, %v59
  %v64 = vpack.c.b16 %v62, %v61
  %v83 = vunpack.c.l.b16 %v39
  %v84 = vunpack.c.h.b16 %v39
  %v85 = vunpack.c.l.b16 %v40
  %v86 = vunpack.c.h.b16 %v40
  %v87 = vunpack.c.l.b16 %v41
  %v88 = vunpack.c.h.b16 %v41
  %v89 = vunpack.c.l.b16 %v42
  %v90 = vunpack.c.h.b16 %v42
  %v91 = vunpack.c.l.b16 %v43
  %v92 = vunpack.c.h.b16 %v43
  %v93 = vunpack.c.l.b16 %v44
  %v94 = vunpack.c.h.b16 %v44
  %v95 = vunpack.c.l.b16 %v45
  %v96 = vunpack.c.h.b16 %v45
  %v97 = vunpack.c.l.b16 %v46
  %v98 = vunpack.c.h.b16 %v46
  %v99 = vunpack.c.l.b16 %v47
  %v100 = vunpack.c.h.b16 %v47
  %v101 = vunpack.c.l.b16 %v48
  %v102 = vunpack.c.h.b16 %v48
  %v103 = vunpack.c.l.b16 %v49
  %v104 = vunpack.c.h.b16 %v49
  %v105 = vunpack.c.l.b16 %v50
  %v106 = vunpack.c.h.b16 %v50
  %v107 = vunpack.c.l.b16 %v51
  %v108 = vunpack.c.h.b16 %v51
  %v109 = vunpack.c.l.b16 %v52
  %v110 = vunpack.c.h.b16 %v52
  %v111 = vunpack.c.l.b16 %v53
  %v112 = vunpack.c.h.b16 %v53
  %v113 = vunpack.c.l.b16 %v54
  %v114 = vunpack.c.h.b16 %v54
  %v115 = vpack.c.b16 %v85, %v83
  %v116 = vpack.c.b16 %v86, %v84
  %v117 = vpack.c.b16 %v89, %v87
  %v118 = vpack.c.b16 %v90, %v88
  %v119 = vpack.c.b16 %v93, %v91
  %v120 = vpack.c.b16 %v94, %v92
  %v121 = vpack.c.b16 %v97, %v95
  %v122 = vpack.c.b16 %v98, %v96
  %v123 = vpack.c.b16 %v101, %v99
  %v124 = vpack.c.b16 %v102, %v100
  %v125 = vpack.c.b16 %v105, %v103
  %v126 = vpack.c.b16 %v106, %v104
  %v127 = vpack.c.b16 %v109, %v107
  %v128 = vpack.c.b16 %v110, %v108
  %v129 = vpack.c.b16 %v113, %v111
  %v130 = vpack.c.b16 %v114, %v112
  %147 = vmatprep.subr.bf16.mxu0 %v130
  %148 = vmatpush1.bf16.msra.mxu0 %v129
  %149 = vmatprep.subr.bf16.mxu0 %v128
  %150 = vmatpush1.bf16.msra.mxu0 %v127
  %151 = vmatprep.subr.bf16.mxu0 %v126
  %152 = vmatpush1.bf16.msra.mxu0 %v125
  %153 = vmatprep.subr.bf16.mxu0 %v124
  %154 = vmatpush1.bf16.msra.mxu0 %v123
  %155 = vmatprep.subr.bf16.mxu0 %v122
  %156 = vmatpush1.bf16.msra.mxu0 %v121
  %157 = vmatprep.subr.bf16.mxu0 %v120
  %158 = vmatpush1.bf16.msra.mxu0 %v119
  %159 = vmatprep.subr.bf16.mxu0 %v118
  %160 = vmatpush1.bf16.msra.mxu0 %v117
  %161 = vmatprep.subr.bf16.mxu0 %v116
  %162 = vmatpush1.bf16.msra.mxu0 %v115
  %163 = vmatprep.subr.bf16.mxu0 0
  %164 = vmatpush2.bf16.msra.mxu0 0
  %165 = vmatprep.subr.bf16.mxu0 0
  %166 = vmatpush2.bf16.msra.mxu0 0
  %167 = vmatprep.subr.bf16.mxu0 0
  %168 = vmatpush2.bf16.msra.mxu0 0
  %169 = vmatprep.subr.bf16.mxu0 0
  %170 = vmatpush2.bf16.msra.mxu0 0
  %171 = vmatprep.subr.bf16.mxu0 0
  %172 = vmatpush2.bf16.msra.mxu0 0
  %173 = vmatprep.subr.bf16.mxu0 0
  %174 = vmatpush2.bf16.msra.mxu0 0
  %175 = vmatprep.subr.bf16.mxu0 0
  %176 = vmatpush2.bf16.msra.mxu0 0
  %177 = vmatprep.subr.bf16.mxu0 0
  %178 = vmatpush2.bf16.msra.mxu0 0
  %179 = vmatprep.mubr.bf16.mxu0 0
  %180 = vmatmul.mubr.bf16.gmra.mxu0 %v63
  %v181 = vpop.f32.mrf.mxu0
  %v182 = vadd.f32 0.0, %v181
  %v183 = vpop.f32.mrf.mxu0
  %v184 = vadd.f32 0.0, %v183
  %v185 = vpop.f32.mrf.mxu0
  %v186 = vadd.f32 0.0, %v185
  %v187 = vpop.f32.mrf.mxu0
  %v188 = vadd.f32 0.0, %v187
  %189 = vmatprep.mubr.bf16.mxu0 0
  %190 = vmatmul.mubr.bf16.gmra.mxu0 %v64
  %v191 = vpop.f32.mrf.mxu0
  %v192 = vadd.f32 0.0, %v191
  %v193 = vpop.f32.mrf.mxu0
  %v194 = vadd.f32 0.0, %v193
  %v195 = vpop.f32.mrf.mxu0
  %v196 = vadd.f32 0.0, %v195
  %v197 = vpop.f32.mrf.mxu0
  %v198 = vadd.f32 0.0, %v197
  %199 = vdwg.mxu0
  %v200 = vadd.f32 %v27, %v182
  %v201 = vadd.f32 %v28, %v184
  %v202 = vadd.f32 %v29, %v186
  %v203 = vadd.f32 %v30, %v188
  %v204 = vadd.f32 %v31, %v192
  %v205 = vadd.f32 %v32, %v194
  %v206 = vadd.f32 %v33, %v196
  %v207 = vadd.f32 %v34, %v198
  %208 = vst [vmem:[#allocation2] sm:$0xff] %v200
  %209 = vst [vmem:[#allocation2 + $0x8] sm:$0xff] %v201
  %210 = vst [vmem:[#allocation2 + $0x10] sm:$0xff] %v202
  %211 = vst [vmem:[#allocation2 + $0x18] sm:$0xff] %v203
  %212 = vst [vmem:[#allocation2 + $0x20] sm:$0xff] %v204
  %213 = vst [vmem:[#allocation2 + $0x28] sm:$0xff] %v205
  %214 = vst [vmem:[#allocation2 + $0x30] sm:$0xff] %v206
  %215 = vst [vmem:[#allocation2 + $0x38] sm:$0xff] %v207
  // Predicated region
  $region18: #{_lambda_.37} parent=0 // pred_check
    %p216 = pneg %p15
  $region19: #{_lambda_.37} parent=0 // pred_check_branch
    %218 = sbr.rel (%p216) target = $region21
  $region20: #{_lambda_.37} parent=0 // pred_region
    %v219 = vld [vmem:[#allocation2] sm:$0xff]
    %v220 = vld [vmem:[#allocation2 + $0x8] sm:$0xff]
    %v221 = vld [vmem:[#allocation2 + $0x10] sm:$0xff]
    %v222 = vld [vmem:[#allocation2 + $0x18] sm:$0xff]
    %v223 = vld [vmem:[#allocation2 + $0x20] sm:$0xff]
    %v224 = vld [vmem:[#allocation2 + $0x28] sm:$0xff]
    %v225 = vld [vmem:[#allocation2 + $0x30] sm:$0xff]
    %v226 = vld [vmem:[#allocation2 + $0x38] sm:$0xff]
    %v227 = vld [vmem:[%s2] sm:$0x3]
    %v229 = vlaneseq
    %v230 = vshrl.u32 %v229, 7
    %v231 = vsub.s32 0, %v230
    %v232 = vrot.slane %v227, %v231
    %v233 = vlaneseq
    %v234 = vshrl.u32 %v233, 7
    %v235 = vsub.s32 1, %v234
    %v236 = vrot.slane %v227, %v235
    %v239 = vadd.f32 %v219, %v232
    %v240 = vadd.f32 %v220, %v236
    %v241 = vadd.f32 %v221, %v232
    %v242 = vadd.f32 %v222, %v236
    %v243 = vadd.f32 %v223, %v232
    %v244 = vadd.f32 %v224, %v236
    %v245 = vadd.f32 %v225, %v232
    %v246 = vadd.f32 %v226, %v236
    %v247 = vxor.u32 %v240, 2147483648
    %v248 = vxor.u32 %v242, 2147483648
    %v249 = vxor.u32 %v244, 2147483648
    %v250 = vxor.u32 %v246, 2147483648
    %v251 = vmul.f32 %v247, 1.442695
    %v252 = vpow.pop %v251
    %v253 = vmul.f32 %v248, 1.442695
    %v254 = vpow.pop %v253
    %v255 = vmul.f32 %v249, 1.442695
    %v256 = vpow.pop %v255
    %v257 = vmul.f32 %v250, 1.442695
    %v258 = vpow.pop %v257
    %v259 = vadd.f32 %v252, 1.0
    %v260 = vadd.f32 %v254, 1.0
    %v261 = vadd.f32 %v256, 1.0
    %v262 = vadd.f32 %v258, 1.0
    %v263 = vrcp.pop %v259
    %v264 = vmul.f32 1.0, %v263
    %v265 = vrcp.pop %v260
    %v266 = vmul.f32 1.0, %v265
    %v267 = vrcp.pop %v261
    %v268 = vmul.f32 1.0, %v267
    %v269 = vrcp.pop %v262
    %v270 = vmul.f32 1.0, %v269
    %v271 = vmul.f32 %v239, %v264
    %v272 = vmul.f32 %v241, %v266
    %v273 = vmul.f32 %v243, %v268
    %v274 = vmul.f32 %v245, %v270
    %v275 = vpack.c.bf16 %v272, %v271
    %v276 = vpack.c.bf16 %v274, %v273
    %v279 = vunpack.c.l.b16 %v275
    %v280 = vunpack.c.h.b16 %v275
    %v281 = vunpack.c.l.b16 %v276
    %v282 = vunpack.c.h.b16 %v276
    %v283 = vpack.c.b16 %v279, %v279
    %v284 = vpack.c.b16 %v280, %v280
    %v285 = vpack.c.b16 %v281, %v281
    %v286 = vpack.c.b16 %v282, %v282
    %291 = vst [vmem:[%s3] sm:$0xf] %v283
    %292 = vst [vmem:[%s3 + $0x4] sm:$0xf] %v284
    %293 = vst [vmem:[%s3 + $0x8] sm:$0xf] %v285
    %294 = vst [vmem:[%s3 + $0xc] sm:$0xf] %v286
  $region21: #{_lambda_.37} parent=0 // pred_fallthru
    _
  // Predicated region
  $region22: #{_lambda_.37} parent=0 // pred_check
    _
  $region23: #{_lambda_.37} parent=0 // pred_check_branch
    %296 = sbr.rel (0) target = $region25
  $region24: #{_lambda_.37} parent=0 // pred_region
    _
  $region25: #{_lambda_.37} parent=0 // pred_fallthru
    _
  // Predicated region
  $region26: #{_lambda_.37} parent=0 // pred_check
    _
  $region27: #{_lambda_.37} parent=0 // pred_check_branch
    %298 = sbr.rel (0) target = $region29
  $region28: #{_lambda_.37} parent=0 // pred_region
    _
  $region29: #{_lambda_.37} parent=0 // pred_fallthru
    _

// kernel: _lambda_.38
$region0: #{_lambda_.38}
  #allocation0 [shape = 'u32[]', space=smem, size = 0x4, offset = 0x4, fixed_abs, tag = 'smem constant byte address 0x4 - core index']
  #allocation1 [shape = 'u32[144,128]{1,0:T(1,128)}', space=vmem, size = 0x12000, scoped, tag = 'internal scratch']
  #allocation2 [shape = 'f32[8,128]{1,0:T(8,128)}', space=vmem, size = 0x1000, scoped, tag = 'scratch operand']
  %s0 = inlined_call_operand.vmem [shape: bf16[8,128], index: 0, kind: input, shape index: {}]
  %s1 = inlined_call_operand.vmem [shape: bf16[128,128], index: 1, kind: input, shape index: {}]
  %s2 = inlined_call_operand.vmem [shape: f32[1,128], index: 2, kind: input, shape index: {}]
  %s3 = inlined_call_operand.vmem [shape: bf16[8,128], index: 3, kind: output, shape index: {}]
  %s4 = sld [smem:[#allocation0]]
  $region30: #{_lambda_.38} parent=0
    _
  %s6 = ssub.s32 1, %s4
  %s7 = scalar_select 0, %s6, %s4
  // Predicated region
  $region2: #{_lambda_.38} parent=0 // pred_check
    _
  $region3: #{_lambda_.38} parent=0 // pred_check_branch
    %9 = sbr.rel (0) target = $region5
  $region4: #{_lambda_.38} parent=0 // pred_region
    _
  $region5: #{_lambda_.38} parent=0 // pred_fallthru
    _
  // Predicated region
  $region6: #{_lambda_.38} parent=0 // pred_check
    _
  $region7: #{_lambda_.38} parent=0 // pred_check_branch
    %11 = sbr.rel (0) target = $region9
  $region8: #{_lambda_.38} parent=0 // pred_region
    _
  $region9: #{_lambda_.38} parent=0 // pred_fallthru
    _
  // Predicated region
  $region10: #{_lambda_.38} parent=0 // pred_check
    _
  $region11: #{_lambda_.38} parent=0 // pred_check_branch
    %13 = sbr.rel (0) target = $region13
  $region12: #{_lambda_.38} parent=0 // pred_region
    _
  $region13: #{_lambda_.38} parent=0 // pred_fallthru
    _
  %p15 = scmp.eq.s32.totalorder 0, 0
  // Predicated region
  $region14: #{_lambda_.38} parent=0 // pred_check
    %p16 = pneg %p15
  $region15: #{_lambda_.38} parent=0 // pred_check_branch
    %18 = sbr.rel (%p16) target = $region17
  $region16: #{_lambda_.38} parent=0 // pred_region
    %19 = vst [vmem:[#allocation2] sm:$0xff] 0.0
  $region17: #{_lambda_.38} parent=0 // pred_fallthru
    _
  %v20 = vld [vmem:[#allocation2] sm:$0xff]
  %v21 = vld [vmem:[%s0] sm:$0xf]
  %v22 = vld [vmem:[%s1] sm:$0xf]
  %v23 = vld [vmem:[%s1 + $0x4] sm:$0xf]
  %v24 = vld [vmem:[%s1 + $0x8] sm:$0xf]
  %v25 = vld [vmem:[%s1 + $0xc] sm:$0xf]
  %v26 = vld [vmem:[%s1 + $0x10] sm:$0xf]
  %v27 = vld [vmem:[%s1 + $0x14] sm:$0xf]
  %v28 = vld [vmem:[%s1 + $0x18] sm:$0xf]
  %v29 = vld [vmem:[%s1 + $0x1c] sm:$0xf]
  %v30 = vld [vmem:[%s1 + $0x20] sm:$0xf]
  %v31 = vld [vmem:[%s1 + $0x24] sm:$0xf]
  %v32 = vld [vmem:[%s1 + $0x28] sm:$0xf]
  %v33 = vld [vmem:[%s1 + $0x2c] sm:$0xf]
  %v34 = vld [vmem:[%s1 + $0x30] sm:$0xf]
  %v35 = vld [vmem:[%s1 + $0x34] sm:$0xf]
  %v36 = vld [vmem:[%s1 + $0x38] sm:$0xf]
  %v37 = vld [vmem:[%s1 + $0x3c] sm:$0xf]
  %v54 = vunpack.c.l.b16 %v22
  %v55 = vunpack.c.l.b16 %v23
  %v56 = vunpack.c.l.b16 %v24
  %v57 = vunpack.c.l.b16 %v25
  %v58 = vunpack.c.l.b16 %v26
  %v59 = vunpack.c.l.b16 %v27
  %v60 = vunpack.c.l.b16 %v28
  %v61 = vunpack.c.l.b16 %v29
  %v62 = vunpack.c.l.b16 %v30
  %v63 = vunpack.c.l.b16 %v31
  %v64 = vunpack.c.l.b16 %v32
  %v65 = vunpack.c.l.b16 %v33
  %v66 = vunpack.c.l.b16 %v34
  %v67 = vunpack.c.l.b16 %v35
  %v68 = vunpack.c.l.b16 %v36
  %v69 = vunpack.c.l.b16 %v37
  %v70 = vpack.c.b16 %v55, %v54
  %v71 = vpack.c.b16 %v57, %v56
  %v72 = vpack.c.b16 %v59, %v58
  %v73 = vpack.c.b16 %v61, %v60
  %v74 = vpack.c.b16 %v63, %v62
  %v75 = vpack.c.b16 %v65, %v64
  %v76 = vpack.c.b16 %v67, %v66
  %v77 = vpack.c.b16 %v69, %v68
  %86 = vmatprep.subr.bf16.mxu0 0
  %87 = vmatpush1.bf16.msra.mxu0 %v77
  %88 = vmatprep.subr.bf16.mxu0 0
  %89 = vmatpush1.bf16.msra.mxu0 %v76
  %90 = vmatprep.subr.bf16.mxu0 0
  %91 = vmatpush1.bf16.msra.mxu0 %v75
  %92 = vmatprep.subr.bf16.mxu0 0
  %93 = vmatpush1.bf16.msra.mxu0 %v74
  %94 = vmatprep.subr.bf16.mxu0 0
  %95 = vmatpush1.bf16.msra.mxu0 %v73
  %96 = vmatprep.subr.bf16.mxu0 0
  %97 = vmatpush1.bf16.msra.mxu0 %v72
  %98 = vmatprep.subr.bf16.mxu0 0
  %99 = vmatpush1.bf16.msra.mxu0 %v71
  %100 = vmatprep.subr.bf16.mxu0 0
  %101 = vmatpush1.bf16.msra.mxu0 %v70
  %102 = vmatprep.subr.bf16.mxu0 0
  %103 = vmatpush2.bf16.msra.mxu0 0
  %104 = vmatprep.subr.bf16.mxu0 0
  %105 = vmatpush2.bf16.msra.mxu0 0
  %106 = vmatprep.subr.bf16.mxu0 0
  %107 = vmatpush2.bf16.msra.mxu0 0
  %108 = vmatprep.subr.bf16.mxu0 0
  %109 = vmatpush2.bf16.msra.mxu0 0
  %110 = vmatprep.subr.bf16.mxu0 0
  %111 = vmatpush2.bf16.msra.mxu0 0
  %112 = vmatprep.subr.bf16.mxu0 0
  %113 = vmatpush2.bf16.msra.mxu0 0
  %114 = vmatprep.subr.bf16.mxu0 0
  %115 = vmatpush2.bf16.msra.mxu0 0
  %116 = vmatprep.subr.bf16.mxu0 0
  %117 = vmatpush2.bf16.msra.mxu0 0
  %118 = vmatprep.mubr.bf16.mxu0 0
  %119 = vmatmul.mubr.bf16.gmra.mxu0 %v21
  %v120 = vpop.f32.mrf.mxu0
  %v121 = vadd.f32 0.0, %v120
  %v122 = vpop.f32.mrf.mxu0
  %v123 = vpop.f32.mrf.mxu0
  %v124 = vpop.f32.mrf.mxu0
  %125 = vdwg.mxu0
  %v126 = vadd.f32 %v20, %v121
  %127 = vst [vmem:[#allocation2] sm:$0xff] %v126
  // Predicated region
  $region18: #{_lambda_.38} parent=0 // pred_check
    %p128 = pneg %p15
  $region19: #{_lambda_.38} parent=0 // pred_check_branch
    %130 = sbr.rel (%p128) target = $region21
  $region20: #{_lambda_.38} parent=0 // pred_region
    %v131 = vld [vmem:[#allocation2] sm:$0xff]
    %v132 = vld [vmem:[%s2] sm:$0x1]
    %v134 = vlaneseq
    %v135 = vshrl.u32 %v134, 7
    %v136 = vsub.s32 0, %v135
    %v137 = vrot.slane %v132, %v136
    %v139 = vadd.f32 %v131, %v137
    %v140 = vmax.f32 %v139, 0.0
    %v141 = vpack.c.bf16 %v140, %v140
    %142 = vst [vmem:[%s3] sm:$0xf] %v141
  $region21: #{_lambda_.38} parent=0 // pred_fallthru
    _
  // Predicated region
  $region22: #{_lambda_.38} parent=0 // pred_check
    _
  $region23: #{_lambda_.38} parent=0 // pred_check_branch
    %144 = sbr.rel (0) target = $region25
  $region24: #{_lambda_.38} parent=0 // pred_region
    _
  $region25: #{_lambda_.38} parent=0 // pred_fallthru
    _
  // Predicated region
  $region26: #{_lambda_.38} parent=0 // pred_check
    _
  $region27: #{_lambda_.38} parent=0 // pred_check_branch
    %146 = sbr.rel (0) target = $region29
  $region28: #{_lambda_.38} parent=0 // pred_region
    _
  $region29: #{_lambda_.38} parent=0 // pred_fallthru
    _

// kernel: _lambda_.40
$region0: #{_lambda_.40}
  #allocation0 [shape = 'u32[]', space=smem, size = 0x4, offset = 0x4, fixed_abs, tag = 'smem constant byte address 0x4 - core index']
  #allocation1 [shape = 'u32[144,128]{1,0:T(1,128)}', space=vmem, size = 0x12000, scoped, tag = 'internal scratch']
  #allocation2 [shape = 'f32[8,128]{1,0:T(8,128)}', space=vmem, size = 0x1000, scoped, tag = 'scratch operand']
  %s0 = inlined_call_operand.vmem [shape: bf16[8,128], index: 0, kind: input, shape index: {}]
  %s1 = inlined_call_operand.vmem [shape: bf16[128,128], index: 1, kind: input, shape index: {}]
  %s2 = inlined_call_operand.vmem [shape: f32[1,128], index: 2, kind: input, shape index: {}]
  %s3 = inlined_call_operand.vmem [shape: bf16[8,128], index: 3, kind: output, shape index: {}]
  %s4 = sld [smem:[#allocation0]]
  $region30: #{_lambda_.40} parent=0
    _
  %s6 = ssub.s32 1, %s4
  %s7 = scalar_select 0, %s6, %s4
  // Predicated region
  $region2: #{_lambda_.40} parent=0 // pred_check
    _
  $region3: #{_lambda_.40} parent=0 // pred_check_branch
    %9 = sbr.rel (0) target = $region5
  $region4: #{_lambda_.40} parent=0 // pred_region
    _
  $region5: #{_lambda_.40} parent=0 // pred_fallthru
    _
  // Predicated region
  $region6: #{_lambda_.40} parent=0 // pred_check
    _
  $region7: #{_lambda_.40} parent=0 // pred_check_branch
    %11 = sbr.rel (0) target = $region9
  $region8: #{_lambda_.40} parent=0 // pred_region
    _
  $region9: #{_lambda_.40} parent=0 // pred_fallthru
    _
  // Predicated region
  $region10: #{_lambda_.40} parent=0 // pred_check
    _
  $region11: #{_lambda_.40} parent=0 // pred_check_branch
    %13 = sbr.rel (0) target = $region13
  $region12: #{_lambda_.40} parent=0 // pred_region
    _
  $region13: #{_lambda_.40} parent=0 // pred_fallthru
    _
  %p15 = scmp.eq.s32.totalorder 0, 0
  // Predicated region
  $region14: #{_lambda_.40} parent=0 // pred_check
    %p16 = pneg %p15
  $region15: #{_lambda_.40} parent=0 // pred_check_branch
    %18 = sbr.rel (%p16) target = $region17
  $region16: #{_lambda_.40} parent=0 // pred_region
    %19 = vst [vmem:[#allocation2] sm:$0xff] 0.0
  $region17: #{_lambda_.40} parent=0 // pred_fallthru
    _
  %v20 = vld [vmem:[#allocation2] sm:$0xff]
  %v21 = vld [vmem:[%s0] sm:$0xf]
  %v22 = vld [vmem:[%s1] sm:$0xf]
  %v23 = vld [vmem:[%s1 + $0x4] sm:$0xf]
  %v24 = vld [vmem:[%s1 + $0x8] sm:$0xf]
  %v25 = vld [vmem:[%s1 + $0xc] sm:$0xf]
  %v26 = vld [vmem:[%s1 + $0x10] sm:$0xf]
  %v27 = vld [vmem:[%s1 + $0x14] sm:$0xf]
  %v28 = vld [vmem:[%s1 + $0x18] sm:$0xf]
  %v29 = vld [vmem:[%s1 + $0x1c] sm:$0xf]
  %v30 = vld [vmem:[%s1 + $0x20] sm:$0xf]
  %v31 = vld [vmem:[%s1 + $0x24] sm:$0xf]
  %v32 = vld [vmem:[%s1 + $0x28] sm:$0xf]
  %v33 = vld [vmem:[%s1 + $0x2c] sm:$0xf]
  %v34 = vld [vmem:[%s1 + $0x30] sm:$0xf]
  %v35 = vld [vmem:[%s1 + $0x34] sm:$0xf]
  %v36 = vld [vmem:[%s1 + $0x38] sm:$0xf]
  %v37 = vld [vmem:[%s1 + $0x3c] sm:$0xf]
  %v54 = vunpack.c.l.b16 %v22
  %v55 = vunpack.c.l.b16 %v23
  %v56 = vunpack.c.l.b16 %v24
  %v57 = vunpack.c.l.b16 %v25
  %v58 = vunpack.c.l.b16 %v26
  %v59 = vunpack.c.l.b16 %v27
  %v60 = vunpack.c.l.b16 %v28
  %v61 = vunpack.c.l.b16 %v29
  %v62 = vunpack.c.l.b16 %v30
  %v63 = vunpack.c.l.b16 %v31
  %v64 = vunpack.c.l.b16 %v32
  %v65 = vunpack.c.l.b16 %v33
  %v66 = vunpack.c.l.b16 %v34
  %v67 = vunpack.c.l.b16 %v35
  %v68 = vunpack.c.l.b16 %v36
  %v69 = vunpack.c.l.b16 %v37
  %v70 = vpack.c.b16 %v55, %v54
  %v71 = vpack.c.b16 %v57, %v56
  %v72 = vpack.c.b16 %v59, %v58
  %v73 = vpack.c.b16 %v61, %v60
  %v74 = vpack.c.b16 %v63, %v62
  %v75 = vpack.c.b16 %v65, %v64
  %v76 = vpack.c.b16 %v67, %v66
  %v77 = vpack.c.b16 %v69, %v68
  %86 = vmatprep.subr.bf16.mxu0 0
  %87 = vmatpush1.bf16.msra.mxu0 %v77
  %88 = vmatprep.subr.bf16.mxu0 0
  %89 = vmatpush1.bf16.msra.mxu0 %v76
  %90 = vmatprep.subr.bf16.mxu0 0
  %91 = vmatpush1.bf16.msra.mxu0 %v75
  %92 = vmatprep.subr.bf16.mxu0 0
  %93 = vmatpush1.bf16.msra.mxu0 %v74
  %94 = vmatprep.subr.bf16.mxu0 0
  %95 = vmatpush1.bf16.msra.mxu0 %v73
  %96 = vmatprep.subr.bf16.mxu0 0
  %97 = vmatpush1.bf16.msra.mxu0 %v72
  %98 = vmatprep.subr.bf16.mxu0 0
  %99 = vmatpush1.bf16.msra.mxu0 %v71
  %100 = vmatprep.subr.bf16.mxu0 0
  %101 = vmatpush1.bf16.msra.mxu0 %v70
  %102 = vmatprep.subr.bf16.mxu0 0
  %103 = vmatpush2.bf16.msra.mxu0 0
  %104 = vmatprep.subr.bf16.mxu0 0
  %105 = vmatpush2.bf16.msra.mxu0 0
  %106 = vmatprep.subr.bf16.mxu0 0
  %107 = vmatpush2.bf16.msra.mxu0 0
  %108 = vmatprep.subr.bf16.mxu0 0
  %109 = vmatpush2.bf16.msra.mxu0 0
  %110 = vmatprep.subr.bf16.mxu0 0
  %111 = vmatpush2.bf16.msra.mxu0 0
  %112 = vmatprep.subr.bf16.mxu0 0
  %113 = vmatpush2.bf16.msra.mxu0 0
  %114 = vmatprep.subr.bf16.mxu0 0
  %115 = vmatpush2.bf16.msra.mxu0 0
  %116 = vmatprep.subr.bf16.mxu0 0
  %117 = vmatpush2.bf16.msra.mxu0 0
  %118 = vmatprep.mubr.bf16.mxu0 0
  %119 = vmatmul.mubr.bf16.gmra.mxu0 %v21
  %v120 = vpop.f32.mrf.mxu0
  %v121 = vadd.f32 0.0, %v120
  %v122 = vpop.f32.mrf.mxu0
  %v123 = vpop.f32.mrf.mxu0
  %v124 = vpop.f32.mrf.mxu0
  %125 = vdwg.mxu0
  %v126 = vadd.f32 %v20, %v121
  %127 = vst [vmem:[#allocation2] sm:$0xff] %v126
  // Predicated region
  $region18: #{_lambda_.40} parent=0 // pred_check
    %p128 = pneg %p15
  $region19: #{_lambda_.40} parent=0 // pred_check_branch
    %130 = sbr.rel (%p128) target = $region21
  $region20: #{_lambda_.40} parent=0 // pred_region
    %v131 = vld [vmem:[#allocation2] sm:$0xff]
    %v132 = vld [vmem:[%s2] sm:$0x1]
    %v134 = vlaneseq
    %v135 = vshrl.u32 %v134, 7
    %v136 = vsub.s32 0, %v135
    %v137 = vrot.slane %v132, %v136
    %v139 = vadd.f32 %v131, %v137
    %v140 = vpack.c.bf16 %v139, %v139
    %141 = vst [vmem:[%s3] sm:$0xf] %v140
  $region21: #{_lambda_.40} parent=0 // pred_fallthru
    _
  // Predicated region
  $region22: #{_lambda_.40} parent=0 // pred_check
    _
  $region23: #{_lambda_.40} parent=0 // pred_check_branch
    %143 = sbr.rel (0) target = $region25
  $region24: #{_lambda_.40} parent=0 // pred_region
    _
  $region25: #{_lambda_.40} parent=0 // pred_fallthru
    _
  // Predicated region
  $region26: #{_lambda_.40} parent=0 // pred_check
    _
  $region27: #{_lambda_.40} parent=0 // pred_check_branch
    %145 = sbr.rel (0) target = $region29
  $region28: #{_lambda_.40} parent=0 // pred_region
    _
  $region29: #{_lambda_.40} parent=0 // pred_fallthru
    _

// kernel: _lambda_.39
$region0: #{_lambda_.39}
  #allocation0 [shape = 'u32[]', space=smem, size = 0x4, offset = 0x4, fixed_abs, tag = 'smem constant byte address 0x4 - core index']
  #allocation1 [shape = 'u32[144,128]{1,0:T(1,128)}', space=vmem, size = 0x12000, scoped, tag = 'internal scratch']
  #allocation2 [shape = 'f32[8,256]{1,0:T(8,128)}', space=vmem, size = 0x2000, scoped, tag = 'scratch operand']
  %s0 = inlined_call_operand.vmem [shape: bf16[8,128], index: 0, kind: input, shape index: {}]
  %s1 = inlined_call_operand.vmem [shape: bf16[128,256], index: 1, kind: input, shape index: {}]
  %s2 = inlined_call_operand.vmem [shape: f32[1,256], index: 2, kind: input, shape index: {}]
  %s3 = inlined_call_operand.vmem [shape: bf16[8,128], index: 3, kind: output, shape index: {}]
  %s4 = sld [smem:[#allocation0]]
  $region30: #{_lambda_.39} parent=0
    _
  %s6 = ssub.s32 1, %s4
  %s7 = scalar_select 0, %s6, %s4
  // Predicated region
  $region2: #{_lambda_.39} parent=0 // pred_check
    _
  $region3: #{_lambda_.39} parent=0 // pred_check_branch
    %9 = sbr.rel (0) target = $region5
  $region4: #{_lambda_.39} parent=0 // pred_region
    _
  $region5: #{_lambda_.39} parent=0 // pred_fallthru
    _
  // Predicated region
  $region6: #{_lambda_.39} parent=0 // pred_check
    _
  $region7: #{_lambda_.39} parent=0 // pred_check_branch
    %11 = sbr.rel (0) target = $region9
  $region8: #{_lambda_.39} parent=0 // pred_region
    _
  $region9: #{_lambda_.39} parent=0 // pred_fallthru
    _
  // Predicated region
  $region10: #{_lambda_.39} parent=0 // pred_check
    _
  $region11: #{_lambda_.39} parent=0 // pred_check_branch
    %13 = sbr.rel (0) target = $region13
  $region12: #{_lambda_.39} parent=0 // pred_region
    _
  $region13: #{_lambda_.39} parent=0 // pred_fallthru
    _
  %p15 = scmp.eq.s32.totalorder 0, 0
  // Predicated region
  $region14: #{_lambda_.39} parent=0 // pred_check
    %p16 = pneg %p15
  $region15: #{_lambda_.39} parent=0 // pred_check_branch
    %18 = sbr.rel (%p16) target = $region17
  $region16: #{_lambda_.39} parent=0 // pred_region
    %19 = vst [vmem:[#allocation2] sm:$0xff] 0.0
    %20 = vst [vmem:[#allocation2 + $0x8] sm:$0xff] 0.0
  $region17: #{_lambda_.39} parent=0 // pred_fallthru
    _
  %v21 = vld [vmem:[#allocation2] sm:$0xff]
  %v22 = vld [vmem:[#allocation2 + $0x8] sm:$0xff]
  %v23 = vld [vmem:[%s0] sm:$0xf]
  %v24 = vld [vmem:[%s1] sm:$0xff]
  %v25 = vld [vmem:[%s1 + $0x8] sm:$0xff]
  %v26 = vld [vmem:[%s1 + $0x10] sm:$0xff]
  %v27 = vld [vmem:[%s1 + $0x18] sm:$0xff]
  %v28 = vld [vmem:[%s1 + $0x20] sm:$0xff]
  %v29 = vld [vmem:[%s1 + $0x28] sm:$0xff]
  %v30 = vld [vmem:[%s1 + $0x30] sm:$0xff]
  %v31 = vld [vmem:[%s1 + $0x38] sm:$0xff]
  %v32 = vld [vmem:[%s1 + $0x40] sm:$0xff]
  %v33 = vld [vmem:[%s1 + $0x48] sm:$0xff]
  %v34 = vld [vmem:[%s1 + $0x50] sm:$0xff]
  %v35 = vld [vmem:[%s1 + $0x58] sm:$0xff]
  %v36 = vld [vmem:[%s1 + $0x60] sm:$0xff]
  %v37 = vld [vmem:[%s1 + $0x68] sm:$0xff]
  %v38 = vld [vmem:[%s1 + $0x70] sm:$0xff]
  %v39 = vld [vmem:[%s1 + $0x78] sm:$0xff]
  %v56 = vunpack.c.l.b16 %v24
  %v57 = vunpack.c.h.b16 %v24
  %v58 = vunpack.c.l.b16 %v25
  %v59 = vunpack.c.h.b16 %v25
  %v60 = vunpack.c.l.b16 %v26
  %v61 = vunpack.c.h.b16 %v26
  %v62 = vunpack.c.l.b16 %v27
  %v63 = vunpack.c.h.b16 %v27
  %v64 = vunpack.c.l.b16 %v28
  %v65 = vunpack.c.h.b16 %v28
  %v66 = vunpack.c.l.b16 %v29
  %v67 = vunpack.c.h.b16 %v29
  %v68 = vunpack.c.l.b16 %v30
  %v69 = vunpack.c.h.b16 %v30
  %v70 = vunpack.c.l.b16 %v31
  %v71 = vunpack.c.h.b16 %v31
  %v72 = vunpack.c.l.b16 %v32
  %v73 = vunpack.c.h.b16 %v32
  %v74 = vunpack.c.l.b16 %v33
  %v75 = vunpack.c.h.b16 %v33
  %v76 = vunpack.c.l.b16 %v34
  %v77 = vunpack.c.h.b16 %v34
  %v78 = vunpack.c.l.b16 %v35
  %v79 = vunpack.c.h.b16 %v35
  %v80 = vunpack.c.l.b16 %v36
  %v81 = vunpack.c.h.b16 %v36
  %v82 = vunpack.c.l.b16 %v37
  %v83 = vunpack.c.h.b16 %v37
  %v84 = vunpack.c.l.b16 %v38
  %v85 = vunpack.c.h.b16 %v38
  %v86 = vunpack.c.l.b16 %v39
  %v87 = vunpack.c.h.b16 %v39
  %v88 = vpack.c.b16 %v58, %v56
  %v89 = vpack.c.b16 %v59, %v57
  %v90 = vpack.c.b16 %v62, %v60
  %v91 = vpack.c.b16 %v63, %v61
  %v92 = vpack.c.b16 %v66, %v64
  %v93 = vpack.c.b16 %v67, %v65
  %v94 = vpack.c.b16 %v70, %v68
  %v95 = vpack.c.b16 %v71, %v69
  %v96 = vpack.c.b16 %v74, %v72
  %v97 = vpack.c.b16 %v75, %v73
  %v98 = vpack.c.b16 %v78, %v76
  %v99 = vpack.c.b16 %v79, %v77
  %v100 = vpack.c.b16 %v82, %v80
  %v101 = vpack.c.b16 %v83, %v81
  %v102 = vpack.c.b16 %v86, %v84
  %v103 = vpack.c.b16 %v87, %v85
  %120 = vmatprep.subr.bf16.mxu0 %v103
  %121 = vmatpush1.bf16.msra.mxu0 %v102
  %122 = vmatprep.subr.bf16.mxu0 %v101
  %123 = vmatpush1.bf16.msra.mxu0 %v100
  %124 = vmatprep.subr.bf16.mxu0 %v99
  %125 = vmatpush1.bf16.msra.mxu0 %v98
  %126 = vmatprep.subr.bf16.mxu0 %v97
  %127 = vmatpush1.bf16.msra.mxu0 %v96
  %128 = vmatprep.subr.bf16.mxu0 %v95
  %129 = vmatpush1.bf16.msra.mxu0 %v94
  %130 = vmatprep.subr.bf16.mxu0 %v93
  %131 = vmatpush1.bf16.msra.mxu0 %v92
  %132 = vmatprep.subr.bf16.mxu0 %v91
  %133 = vmatpush1.bf16.msra.mxu0 %v90
  %134 = vmatprep.subr.bf16.mxu0 %v89
  %135 = vmatpush1.bf16.msra.mxu0 %v88
  %136 = vmatprep.subr.bf16.mxu0 0
  %137 = vmatpush2.bf16.msra.mxu0 0
  %138 = vmatprep.subr.bf16.mxu0 0
  %139 = vmatpush2.bf16.msra.mxu0 0
  %140 = vmatprep.subr.bf16.mxu0 0
  %141 = vmatpush2.bf16.msra.mxu0 0
  %142 = vmatprep.subr.bf16.mxu0 0
  %143 = vmatpush2.bf16.msra.mxu0 0
  %144 = vmatprep.subr.bf16.mxu0 0
  %145 = vmatpush2.bf16.msra.mxu0 0
  %146 = vmatprep.subr.bf16.mxu0 0
  %147 = vmatpush2.bf16.msra.mxu0 0
  %148 = vmatprep.subr.bf16.mxu0 0
  %149 = vmatpush2.bf16.msra.mxu0 0
  %150 = vmatprep.subr.bf16.mxu0 0
  %151 = vmatpush2.bf16.msra.mxu0 0
  %152 = vmatprep.mubr.bf16.mxu0 0
  %153 = vmatmul.mubr.bf16.gmra.mxu0 %v23
  %v154 = vpop.f32.mrf.mxu0
  %v155 = vadd.f32 0.0, %v154
  %v156 = vpop.f32.mrf.mxu0
  %v157 = vadd.f32 0.0, %v156
  %v158 = vpop.f32.mrf.mxu0
  %v159 = vpop.f32.mrf.mxu0
  %160 = vdwg.mxu0
  %v161 = vadd.f32 %v21, %v155
  %v162 = vadd.f32 %v22, %v157
  %163 = vst [vmem:[#allocation2] sm:$0xff] %v161
  %164 = vst [vmem:[#allocation2 + $0x8] sm:$0xff] %v162
  // Predicated region
  $region18: #{_lambda_.39} parent=0 // pred_check
    %p165 = pneg %p15
  $region19: #{_lambda_.39} parent=0 // pred_check_branch
    %167 = sbr.rel (%p165) target = $region21
  $region20: #{_lambda_.39} parent=0 // pred_region
    %v168 = vld [vmem:[#allocation2] sm:$0xff]
    %v169 = vld [vmem:[#allocation2 + $0x8] sm:$0xff]
    %v170 = vld [vmem:[%s2] sm:$0x3]
    %v172 = vlaneseq
    %v173 = vshrl.u32 %v172, 7
    %v174 = vsub.s32 0, %v173
    %v175 = vrot.slane %v170, %v174
    %v176 = vlaneseq
    %v177 = vshrl.u32 %v176, 7
    %v178 = vsub.s32 1, %v177
    %v179 = vrot.slane %v170, %v178
    %v182 = vadd.f32 %v168, %v175
    %v183 = vadd.f32 %v169, %v179
    %v184 = vxor.u32 %v183, 2147483648
    %v185 = vmul.f32 %v184, 1.442695
    %v186 = vpow.pop %v185
    %v187 = vadd.f32 %v186, 1.0
    %v188 = vrcp.pop %v187
    %v189 = vmul.f32 1.0, %v188
    %v190 = vmul.f32 %v182, %v189
    %v191 = vpack.c.bf16 %v190, %v190
    %192 = vst [vmem:[%s3] sm:$0xf] %v191
  $region21: #{_lambda_.39} parent=0 // pred_fallthru
    _
  // Predicated region
  $region22: #{_lambda_.39} parent=0 // pred_check
    _
  $region23: #{_lambda_.39} parent=0 // pred_check_branch
    %194 = sbr.rel (0) target = $region25
  $region24: #{_lambda_.39} parent=0 // pred_region
    _
  $region25: #{_lambda_.39} parent=0 // pred_fallthru
    _
  // Predicated region
  $region26: #{_lambda_.39} parent=0 // pred_check
    _
  $region27: #{_lambda_.39} parent=0 // pred_check_branch
    %196 = sbr.rel (0) target = $region29
  $region28: #{_lambda_.39} parent=0 // pred_region
    _
  $region29: #{_lambda_.39} parent=0 // pred_fallthru
    _

// kernel: _lambda_.43
$region0: #{_lambda_.43}
  #allocation0 [shape = 'u32[]', space=smem, size = 0x4, offset = 0x4, fixed_abs, tag = 'smem constant byte address 0x4 - core index']
  #allocation1 [shape = 'u32[144,128]{1,0:T(1,128)}', space=vmem, size = 0x12000, scoped, tag = 'internal scratch']
  %s0 = inlined_call_operand.vmem [shape: bf16[8,16], index: 0, kind: input, shape index: {}]
  %s1 = inlined_call_operand.vmem [shape: bf16[8,16], index: 1, kind: input, shape index: {}]
  %s2 = inlined_call_operand.vmem [shape: f32[1,16], index: 2, kind: input, shape index: {}]
  %s3 = inlined_call_operand.vmem [shape: f32[1,16], index: 3, kind: input, shape index: {}]
  %s4 = inlined_call_operand.vmem [shape: bf16[8,16], index: 4, kind: output, shape index: {}]
  %s5 = sld [smem:[#allocation0]]
  $region26: #{_lambda_.43} parent=0
    _
  %s7 = ssub.s32 1, %s5
  %s8 = scalar_select 0, %s7, %s5
  // Predicated region
  $region2: #{_lambda_.43} parent=0 // pred_check
    _
  $region3: #{_lambda_.43} parent=0 // pred_check_branch
    %10 = sbr.rel (0) target = $region5
  $region4: #{_lambda_.43} parent=0 // pred_region
    _
  $region5: #{_lambda_.43} parent=0 // pred_fallthru
    _
  // Predicated region
  $region6: #{_lambda_.43} parent=0 // pred_check
    _
  $region7: #{_lambda_.43} parent=0 // pred_check_branch
    %12 = sbr.rel (0) target = $region9
  $region8: #{_lambda_.43} parent=0 // pred_region
    _
  $region9: #{_lambda_.43} parent=0 // pred_fallthru
    _
  // Predicated region
  $region10: #{_lambda_.43} parent=0 // pred_check
    _
  $region11: #{_lambda_.43} parent=0 // pred_check_branch
    %14 = sbr.rel (0) target = $region13
  $region12: #{_lambda_.43} parent=0 // pred_region
    _
  $region13: #{_lambda_.43} parent=0 // pred_fallthru
    _
  // Predicated region
  $region14: #{_lambda_.43} parent=0 // pred_check
    _
  $region15: #{_lambda_.43} parent=0 // pred_check_branch
    %16 = sbr.rel (0) target = $region17
  $region16: #{_lambda_.43} parent=0 // pred_region
    _
  $region17: #{_lambda_.43} parent=0 // pred_fallthru
    _
  %v17 = vld [vmem:[%s0] sm:$0xf]
  %v18 = vunpack.c.l.bf16 %v17
  %v19 = vld [vmem:[%s1] sm:$0xf]
  %v20 = vunpack.c.l.bf16 %v19
  %v21 = vadd.f32 %v18, %v20
  %vm22 = vcmask 130048
  %v23 = vsel %vm22, %v21, 0.0
  %24 = vadd.xlane.f32.xlu0 %v23
  %v25 = vpop.xlane.xlu0 %24
  %v26 = vrcp.pop 16.0
  %v27 = vmul.f32 %v25, %v26
  %v28 = vsub.f32 %v21, %v27
  %v29 = vmul.f32 %v28, %v28
  %v30 = vsel %vm22, %v29, 0.0
  %31 = vadd.xlane.f32.xlu0 %v30
  %v32 = vpop.xlane.xlu0 %31
  %v33 = vmul.f32 %v32, %v26
  %v34 = vadd.f32 %v33, 1e-05
  %v35 = vrsqrt.pop %v34
  %v36 = vmul.f32 %v28, %v35
  %v37 = vld [vmem:[%s2] sm:$0x1]
  %v39 = vlaneseq
  %v40 = vshrl.u32 %v39, 7
  %v41 = vsub.s32 0, %v40
  %v42 = vrot.slane %v37, %v41
  %v44 = vmul.f32 %v36, %v42
  %v45 = vld [vmem:[%s3] sm:$0x1]
  %v47 = vlaneseq
  %v48 = vshrl.u32 %v47, 7
  %v49 = vsub.s32 0, %v48
  %v50 = vrot.slane %v45, %v49
  %v52 = vadd.f32 %v44, %v50
  %v53 = vpack.c.bf16 %v52, %v52
  %vm54 = vcmask 125952
  %55 = vst.msk [vmem:[%s4] sm:$0xf] %vm54, %v53
  // Predicated region
  $region18: #{_lambda_.43} parent=0 // pred_check
    _
  $region19: #{_lambda_.43} parent=0 // pred_check_branch
    %57 = sbr.rel (0) target = $region21
  $region20: #{_lambda_.43} parent=0 // pred_region
    _
  $region21: #{_lambda_.43} parent=0 // pred_fallthru
    _
  // Predicated region
  $region22: #{_lambda_.43} parent=0 // pred_check
    _
  $region23: #{_lambda_.43} parent=0 // pred_check_branch
    %59 = sbr.rel (0) target = $region25
  $region24: #{_lambda_.43} parent=0 // pred_region
    _
  $region25: #{_lambda_.43} parent=0 // pred_fallthru
    _

// kernel: _lambda_.41
$region0: #{_lambda_.41}
  #allocation0 [shape = 'u32[]', space=smem, size = 0x4, offset = 0x4, fixed_abs, tag = 'smem constant byte address 0x4 - core index']
  #allocation1 [shape = 'u32[144,128]{1,0:T(1,128)}', space=vmem, size = 0x12000, scoped, tag = 'internal scratch']
  #allocation2 [shape = 'f32[8,8,1]{2,1,0:T(8,128)}', space=vmem, size = 0x8000, scoped, tag = 'scratch operand']
  #allocation3 [shape = 'f32[8,8,1]{2,1,0:T(8,128)}', space=vmem, size = 0x8000, scoped, tag = 'scratch operand']
  #allocation4 [shape = 'f32[8,8,128]{2,1,0:T(8,128)}', space=vmem, size = 0x8000, scoped, tag = 'scratch operand']
  %s0 = inlined_call_operand.vmem [shape: bf16[8,8,128], index: 0, kind: input, shape index: {}]
  %s1 = inlined_call_operand.vmem [shape: bf16[8,8,128], index: 1, kind: input, shape index: {}]
  %s2 = inlined_call_operand.vmem [shape: bf16[8,8,128], index: 2, kind: input, shape index: {}]
  %s3 = inlined_call_operand.vmem [shape: bf16[8,8,128], index: 3, kind: output, shape index: {}]
  %s4 = sld [smem:[#allocation0]]
  $region34: #{_lambda_.41} parent=0
    _
  %s6 = ssub.s32 1, %s4
  %s7 = scalar_select 0, %s6, %s4
  // Predicated region
  $region2: #{_lambda_.41} parent=0 // pred_check
    _
  $region3: #{_lambda_.41} parent=0 // pred_check_branch
    %9 = sbr.rel (0) target = $region5
  $region4: #{_lambda_.41} parent=0 // pred_region
    _
  $region5: #{_lambda_.41} parent=0 // pred_fallthru
    _
  // Predicated region
  $region6: #{_lambda_.41} parent=0 // pred_check
    _
  $region7: #{_lambda_.41} parent=0 // pred_check_branch
    %11 = sbr.rel (0) target = $region9
  $region8: #{_lambda_.41} parent=0 // pred_region
    _
  $region9: #{_lambda_.41} parent=0 // pred_fallthru
    _
  // Predicated region
  $region10: #{_lambda_.41} parent=0 // pred_check
    _
  $region11: #{_lambda_.41} parent=0 // pred_check_branch
    %13 = sbr.rel (0) target = $region13
  $region12: #{_lambda_.41} parent=0 // pred_region
    _
  $region13: #{_lambda_.41} parent=0 // pred_fallthru
    _
  %p15 = scmp.eq.s32.totalorder 0, 0
  // Predicated region
  $region14: #{_lambda_.41} parent=0 // pred_check
    %p16 = pneg %p15
  $region15: #{_lambda_.41} parent=0 // pred_check_branch
    %18 = sbr.rel (%p16) target = $region17
  $region16: #{_lambda_.41} parent=0 // pred_region
    %vm19 = vcmask 7168
    %20 = vst.msk [vmem:[#allocation2] sm:$0xff] %vm19, -inf
    %21 = vst.msk [vmem:[#allocation2 + $0x8] sm:$0xff] %vm19, -inf
    %22 = vst.msk [vmem:[#allocation2 + $0x10] sm:$0xff] %vm19, -inf
    %23 = vst.msk [vmem:[#allocation2 + $0x18] sm:$0xff] %vm19, -inf
    %24 = vst.msk [vmem:[#allocation2 + $0x20] sm:$0xff] %vm19, -inf
    %25 = vst.msk [vmem:[#allocation2 + $0x28] sm:$0xff] %vm19, -inf
    %26 = vst.msk [vmem:[#allocation2 + $0x30] sm:$0xff] %vm19, -inf
    %27 = vst.msk [vmem:[#allocation2 + $0x38] sm:$0xff] %vm19, -inf
    %28 = vst.msk [vmem:[#allocation3] sm:$0xff] %vm19, 0.0
    %29 = vst.msk [vmem:[#allocation3 + $0x8] sm:$0xff] %vm19, 0.0
    %30 = vst.msk [vmem:[#allocation3 + $0x10] sm:$0xff] %vm19, 0.0
    %31 = vst.msk [vmem:[#allocation3 + $0x18] sm:$0xff] %vm19, 0.0
    %32 = vst.msk [vmem:[#allocation3 + $0x20] sm:$0xff] %vm19, 0.0
    %33 = vst.msk [vmem:[#allocation3 + $0x28] sm:$0xff] %vm19, 0.0
    %34 = vst.msk [vmem:[#allocation3 + $0x30] sm:$0xff] %vm19, 0.0
    %35 = vst.msk [vmem:[#allocation3 + $0x38] sm:$0xff] %vm19, 0.0
    %36 = vst [vmem:[#allocation4] sm:$0xff] 0.0
    %37 = vst [vmem:[#allocation4 + $0x8] sm:$0xff] 0.0
    %38 = vst [vmem:[#allocation4 + $0x10] sm:$0xff] 0.0
    %39 = vst [vmem:[#allocation4 + $0x18] sm:$0xff] 0.0
    %40 = vst [vmem:[#allocation4 + $0x20] sm:$0xff] 0.0
    %41 = vst [vmem:[#allocation4 + $0x28] sm:$0xff] 0.0
    %42 = vst [vmem:[#allocation4 + $0x30] sm:$0xff] 0.0
    %43 = vst [vmem:[#allocation4 + $0x38] sm:$0xff] 0.0
  $region17: #{_lambda_.41} parent=0 // pred_fallthru
    _
  %s44 = smul.u32 0, 8
  %s45 = smul.u32 0, 8
  %s46 = sadd.s32 %s45, 7
  %p47 = scmp.le.s32.totalorder %s44, %s46
  // Predicated region
  $region18: #{_lambda_.41} parent=0 // pred_check
    %p48 = pneg %p47
  $region19: #{_lambda_.41} parent=0 // pred_check_branch
    %50 = sbr.rel (%p48) target = $region21
  $region20: #{_lambda_.41} parent=0 // pred_region
    %v51 = vld [vmem:[%s0] sm:$0xf]
    %v52 = vld [vmem:[%s0 + $0x4] sm:$0xf]
    %v53 = vld [vmem:[%s0 + $0x8] sm:$0xf]
    %v54 = vld [vmem:[%s0 + $0xc] sm:$0xf]
    %v55 = vld [vmem:[%s0 + $0x10] sm:$0xf]
    %v56 = vld [vmem:[%s0 + $0x14] sm:$0xf]
    %v57 = vld [vmem:[%s0 + $0x18] sm:$0xf]
    %v58 = vld [vmem:[%s0 + $0x1c] sm:$0xf]
    %v59 = vld [vmem:[%s1] sm:$0xf]
    %v60 = vld [vmem:[%s1 + $0x4] sm:$0xf]
    %v61 = vld [vmem:[%s1 + $0x8] sm:$0xf]
    %v62 = vld [vmem:[%s1 + $0xc] sm:$0xf]
    %v63 = vld [vmem:[%s1 + $0x10] sm:$0xf]
    %v64 = vld [vmem:[%s1 + $0x14] sm:$0xf]
    %v65 = vld [vmem:[%s1 + $0x18] sm:$0xf]
    %v66 = vld [vmem:[%s1 + $0x1c] sm:$0xf]
    %67 = vmatprep.subr.bf16.mxu0 0
    %68 = vmatpush1.bf16.xpose.msra.mxu0 0
    %69 = vmatprep.subr.bf16.mxu0 0
    %70 = vmatpush1.bf16.xpose.msra.mxu0 0
    %71 = vmatprep.subr.bf16.mxu0 0
    %72 = vmatpush1.bf16.xpose.msra.mxu0 0
    %73 = vmatprep.subr.bf16.mxu0 0
    %74 = vmatpush1.bf16.xpose.msra.mxu0 0
    %75 = vmatprep.subr.bf16.mxu0 0
    %76 = vmatpush1.bf16.xpose.msra.mxu0 0
    %77 = vmatprep.subr.bf16.mxu0 0
    %78 = vmatpush1.bf16.xpose.msra.mxu0 0
    %79 = vmatprep.subr.bf16.mxu0 0
    %80 = vmatpush1.bf16.xpose.msra.mxu0 0
    %81 = vmatprep.subr.bf16.mxu0 0
    %82 = vmatpush1.bf16.xpose.msra.mxu0 %v59
    %83 = vmatprep.subr.bf16.mxu0 0
    %84 = vmatpush2.bf16.xpose.msra.mxu0 0
    %85 = vmatprep.subr.bf16.mxu0 0
    %86 = vmatpush2.bf16.xpose.msra.mxu0 0
    %87 = vmatprep.subr.bf16.mxu0 0
    %88 = vmatpush2.bf16.xpose.msra.mxu0 0
    %89 = vmatprep.subr.bf16.mxu0 0
    %90 = vmatpush2.bf16.xpose.msra.mxu0 0
    %91 = vmatprep.subr.bf16.mxu0 0
    %92 = vmatpush2.bf16.xpose.msra.mxu0 0
    %93 = vmatprep.subr.bf16.mxu0 0
    %94 = vmatpush2.bf16.xpose.msra.mxu0 0
    %95 = vmatprep.subr.bf16.mxu0 0
    %96 = vmatpush2.bf16.xpose.msra.mxu0 0
    %97 = vmatprep.subr.bf16.mxu0 0
    %98 = vmatpush2.bf16.xpose.msra.mxu0 0
    %99 = vmatprep.mubr.bf16.mxu0 0
    %100 = vmatmul.mubr.bf16.gmra.mxu0 %v51
    %v101 = vpop.f32.mrf.mxu0
    %v102 = vadd.f32 0.0, %v101
    %v103 = vpop.f32.mrf.mxu0
    %v104 = vpop.f32.mrf.mxu0
    %v105 = vpop.f32.mrf.mxu0
    %106 = vdwg.mxu0
    %107 = vmatprep.subr.bf16.mxu0 0
    %108 = vmatpush1.bf16.xpose.msra.mxu0 0
    %109 = vmatprep.subr.bf16.mxu0 0
    %110 = vmatpush1.bf16.xpose.msra.mxu0 0
    %111 = vmatprep.subr.bf16.mxu0 0
    %112 = vmatpush1.bf16.xpose.msra.mxu0 0
    %113 = vmatprep.subr.bf16.mxu0 0
    %114 = vmatpush1.bf16.xpose.msra.mxu0 0
    %115 = vmatprep.subr.bf16.mxu0 0
    %116 = vmatpush1.bf16.xpose.msra.mxu0 0
    %117 = vmatprep.subr.bf16.mxu0 0
    %118 = vmatpush1.bf16.xpose.msra.mxu0 0
    %119 = vmatprep.subr.bf16.mxu0 0
    %120 = vmatpush1.bf16.xpose.msra.mxu0 0
    %121 = vmatprep.subr.bf16.mxu0 0
    %122 = vmatpush1.bf16.xpose.msra.mxu0 %v60
    %123 = vmatprep.subr.bf16.mxu0 0
    %124 = vmatpush2.bf16.xpose.msra.mxu0 0
    %125 = vmatprep.subr.bf16.mxu0 0
    %126 = vmatpush2.bf16.xpose.msra.mxu0 0
    %127 = vmatprep.subr.bf16.mxu0 0
    %128 = vmatpush2.bf16.xpose.msra.mxu0 0
    %129 = vmatprep.subr.bf16.mxu0 0
    %130 = vmatpush2.bf16.xpose.msra.mxu0 0
    %131 = vmatprep.subr.bf16.mxu0 0
    %132 = vmatpush2.bf16.xpose.msra.mxu0 0
    %133 = vmatprep.subr.bf16.mxu0 0
    %134 = vmatpush2.bf16.xpose.msra.mxu0 0
    %135 = vmatprep.subr.bf16.mxu0 0
    %136 = vmatpush2.bf16.xpose.msra.mxu0 0
    %137 = vmatprep.subr.bf16.mxu0 0
    %138 = vmatpush2.bf16.xpose.msra.mxu0 0
    %139 = vmatprep.mubr.bf16.mxu0 0
    %140 = vmatmul.mubr.bf16.gmra.mxu0 %v52
    %v141 = vpop.f32.mrf.mxu0
    %v142 = vadd.f32 0.0, %v141
    %v143 = vpop.f32.mrf.mxu0
    %v144 = vpop.f32.mrf.mxu0
    %v145 = vpop.f32.mrf.mxu0
    %146 = vdwg.mxu0
    %147 = vmatprep.subr.bf16.mxu0 0
    %148 = vmatpush1.bf16.xpose.msra.mxu0 0
    %149 = vmatprep.subr.bf16.mxu0 0
    %150 = vmatpush1.bf16.xpose.msra.mxu0 0
    %151 = vmatprep.subr.bf16.mxu0 0
    %152 = vmatpush1.bf16.xpose.msra.mxu0 0
    %153 = vmatprep.subr.bf16.mxu0 0
    %154 = vmatpush1.bf16.xpose.msra.mxu0 0
    %155 = vmatprep.subr.bf16.mxu0 0
    %156 = vmatpush1.bf16.xpose.msra.mxu0 0
    %157 = vmatprep.subr.bf16.mxu0 0
    %158 = vmatpush1.bf16.xpose.msra.mxu0 0
    %159 = vmatprep.subr.bf16.mxu0 0
    %160 = vmatpush1.bf16.xpose.msra.mxu0 0
    %161 = vmatprep.subr.bf16.mxu0 0
    %162 = vmatpush1.bf16.xpose.msra.mxu0 %v61
    %163 = vmatprep.subr.bf16.mxu0 0
    %164 = vmatpush2.bf16.xpose.msra.mxu0 0
    %165 = vmatprep.subr.bf16.mxu0 0
    %166 = vmatpush2.bf16.xpose.msra.mxu0 0
    %167 = vmatprep.subr.bf16.mxu0 0
    %168 = vmatpush2.bf16.xpose.msra.mxu0 0
    %169 = vmatprep.subr.bf16.mxu0 0
    %170 = vmatpush2.bf16.xpose.msra.mxu0 0
    %171 = vmatprep.subr.bf16.mxu0 0
    %172 = vmatpush2.bf16.xpose.msra.mxu0 0
    %173 = vmatprep.subr.bf16.mxu0 0
    %174 = vmatpush2.bf16.xpose.msra.mxu0 0
    %175 = vmatprep.subr.bf16.mxu0 0
    %176 = vmatpush2.bf16.xpose.msra.mxu0 0
    %177 = vmatprep.subr.bf16.mxu0 0
    %178 = vmatpush2.bf16.xpose.msra.mxu0 0
    %179 = vmatprep.mubr.bf16.mxu0 0
    %180 = vmatmul.mubr.bf16.gmra.mxu0 %v53
    %v181 = vpop.f32.mrf.mxu0
    %v182 = vadd.f32 0.0, %v181
    %v183 = vpop.f32.mrf.mxu0
    %v184 = vpop.f32.mrf.mxu0
    %v185 = vpop.f32.mrf.mxu0
    %186 = vdwg.mxu0
    %187 = vmatprep.subr.bf16.mxu0 0
    %188 = vmatpush1.bf16.xpose.msra.mxu0 0
    %189 = vmatprep.subr.bf16.mxu0 0
    %190 = vmatpush1.bf16.xpose.msra.mxu0 0
    %191 = vmatprep.subr.bf16.mxu0 0
    %192 = vmatpush1.bf16.xpose.msra.mxu0 0
    %193 = vmatprep.subr.bf16.mxu0 0
    %194 = vmatpush1.bf16.xpose.msra.mxu0 0
    %195 = vmatprep.subr.bf16.mxu0 0
    %196 = vmatpush1.bf16.xpose.msra.mxu0 0
    %197 = vmatprep.subr.bf16.mxu0 0
    %198 = vmatpush1.bf16.xpose.msra.mxu0 0
    %199 = vmatprep.subr.bf16.mxu0 0
    %200 = vmatpush1.bf16.xpose.msra.mxu0 0
    %201 = vmatprep.subr.bf16.mxu0 0
    %202 = vmatpush1.bf16.xpose.msra.mxu0 %v62
    %203 = vmatprep.subr.bf16.mxu0 0
    %204 = vmatpush2.bf16.xpose.msra.mxu0 0
    %205 = vmatprep.subr.bf16.mxu0 0
    %206 = vmatpush2.bf16.xpose.msra.mxu0 0
    %207 = vmatprep.subr.bf16.mxu0 0
    %208 = vmatpush2.bf16.xpose.msra.mxu0 0
    %209 = vmatprep.subr.bf16.mxu0 0
    %210 = vmatpush2.bf16.xpose.msra.mxu0 0
    %211 = vmatprep.subr.bf16.mxu0 0
    %212 = vmatpush2.bf16.xpose.msra.mxu0 0
    %213 = vmatprep.subr.bf16.mxu0 0
    %214 = vmatpush2.bf16.xpose.msra.mxu0 0
    %215 = vmatprep.subr.bf16.mxu0 0
    %216 = vmatpush2.bf16.xpose.msra.mxu0 0
    %217 = vmatprep.subr.bf16.mxu0 0
    %218 = vmatpush2.bf16.xpose.msra.mxu0 0
    %219 = vmatprep.mubr.bf16.mxu0 0
    %220 = vmatmul.mubr.bf16.gmra.mxu0 %v54
    %v221 = vpop.f32.mrf.mxu0
    %v222 = vadd.f32 0.0, %v221
    %v223 = vpop.f32.mrf.mxu0
    %v224 = vpop.f32.mrf.mxu0
    %v225 = vpop.f32.mrf.mxu0
    %226 = vdwg.mxu0
    %227 = vmatprep.subr.bf16.mxu0 0
    %228 = vmatpush1.bf16.xpose.msra.mxu0 0
    %229 = vmatprep.subr.bf16.mxu0 0
    %230 = vmatpush1.bf16.xpose.msra.mxu0 0
    %231 = vmatprep.subr.bf16.mxu0 0
    %232 = vmatpush1.bf16.xpose.msra.mxu0 0
    %233 = vmatprep.subr.bf16.mxu0 0
    %234 = vmatpush1.bf16.xpose.msra.mxu0 0
    %235 = vmatprep.subr.bf16.mxu0 0
    %236 = vmatpush1.bf16.xpose.msra.mxu0 0
    %237 = vmatprep.subr.bf16.mxu0 0
    %238 = vmatpush1.bf16.xpose.msra.mxu0 0
    %239 = vmatprep.subr.bf16.mxu0 0
    %240 = vmatpush1.bf16.xpose.msra.mxu0 0
    %241 = vmatprep.subr.bf16.mxu0 0
    %242 = vmatpush1.bf16.xpose.msra.mxu0 %v63
    %243 = vmatprep.subr.bf16.mxu0 0
    %244 = vmatpush2.bf16.xpose.msra.mxu0 0
    %245 = vmatprep.subr.bf16.mxu0 0
    %246 = vmatpush2.bf16.xpose.msra.mxu0 0
    %247 = vmatprep.subr.bf16.mxu0 0
    %248 = vmatpush2.bf16.xpose.msra.mxu0 0
    %249 = vmatprep.subr.bf16.mxu0 0
    %250 = vmatpush2.bf16.xpose.msra.mxu0 0
    %251 = vmatprep.subr.bf16.mxu0 0
    %252 = vmatpush2.bf16.xpose.msra.mxu0 0
    %253 = vmatprep.subr.bf16.mxu0 0
    %254 = vmatpush2.bf16.xpose.msra.mxu0 0
    %255 = vmatprep.subr.bf16.mxu0 0
    %256 = vmatpush2.bf16.xpose.msra.mxu0 0
    %257 = vmatprep.subr.bf16.mxu0 0
    %258 = vmatpush2.bf16.xpose.msra.mxu0 0
    %259 = vmatprep.mubr.bf16.mxu0 0
    %260 = vmatmul.mubr.bf16.gmra.mxu0 %v55
    %v261 = vpop.f32.mrf.mxu0
    %v262 = vadd.f32 0.0, %v261
    %v263 = vpop.f32.mrf.mxu0
    %v264 = vpop.f32.mrf.mxu0
    %v265 = vpop.f32.mrf.mxu0
    %266 = vdwg.mxu0
    %267 = vmatprep.subr.bf16.mxu0 0
    %268 = vmatpush1.bf16.xpose.msra.mxu0 0
    %269 = vmatprep.subr.bf16.mxu0 0
    %270 = vmatpush1.bf16.xpose.msra.mxu0 0
    %271 = vmatprep.subr.bf16.mxu0 0
    %272 = vmatpush1.bf16.xpose.msra.mxu0 0
    %273 = vmatprep.subr.bf16.mxu0 0
    %274 = vmatpush1.bf16.xpose.msra.mxu0 0
    %275 = vmatprep.subr.bf16.mxu0 0
    %276 = vmatpush1.bf16.xpose.msra.mxu0 0
    %277 = vmatprep.subr.bf16.mxu0 0
    %278 = vmatpush1.bf16.xpose.msra.mxu0 0
    %279 = vmatprep.subr.bf16.mxu0 0
    %280 = vmatpush1.bf16.xpose.msra.mxu0 0
    %281 = vmatprep.subr.bf16.mxu0 0
    %282 = vmatpush1.bf16.xpose.msra.mxu0 %v64
    %283 = vmatprep.subr.bf16.mxu0 0
    %284 = vmatpush2.bf16.xpose.msra.mxu0 0
    %285 = vmatprep.subr.bf16.mxu0 0
    %286 = vmatpush2.bf16.xpose.msra.mxu0 0
    %287 = vmatprep.subr.bf16.mxu0 0
    %288 = vmatpush2.bf16.xpose.msra.mxu0 0
    %289 = vmatprep.subr.bf16.mxu0 0
    %290 = vmatpush2.bf16.xpose.msra.mxu0 0
    %291 = vmatprep.subr.bf16.mxu0 0
    %292 = vmatpush2.bf16.xpose.msra.mxu0 0
    %293 = vmatprep.subr.bf16.mxu0 0
    %294 = vmatpush2.bf16.xpose.msra.mxu0 0
    %295 = vmatprep.subr.bf16.mxu0 0
    %296 = vmatpush2.bf16.xpose.msra.mxu0 0
    %297 = vmatprep.subr.bf16.mxu0 0
    %298 = vmatpush2.bf16.xpose.msra.mxu0 0
    %299 = vmatprep.mubr.bf16.mxu0 0
    %300 = vmatmul.mubr.bf16.gmra.mxu0 %v56
    %v301 = vpop.f32.mrf.mxu0
    %v302 = vadd.f32 0.0, %v301
    %v303 = vpop.f32.mrf.mxu0
    %v304 = vpop.f32.mrf.mxu0
    %v305 = vpop.f32.mrf.mxu0
    %306 = vdwg.mxu0
    %307 = vmatprep.subr.bf16.mxu0 0
    %308 = vmatpush1.bf16.xpose.msra.mxu0 0
    %309 = vmatprep.subr.bf16.mxu0 0
    %310 = vmatpush1.bf16.xpose.msra.mxu0 0
    %311 = vmatprep.subr.bf16.mxu0 0
    %312 = vmatpush1.bf16.xpose.msra.mxu0 0
    %313 = vmatprep.subr.bf16.mxu0 0
    %314 = vmatpush1.bf16.xpose.msra.mxu0 0
    %315 = vmatprep.subr.bf16.mxu0 0
    %316 = vmatpush1.bf16.xpose.msra.mxu0 0
    %317 = vmatprep.subr.bf16.mxu0 0
    %318 = vmatpush1.bf16.xpose.msra.mxu0 0
    %319 = vmatprep.subr.bf16.mxu0 0
    %320 = vmatpush1.bf16.xpose.msra.mxu0 0
    %321 = vmatprep.subr.bf16.mxu0 0
    %322 = vmatpush1.bf16.xpose.msra.mxu0 %v65
    %323 = vmatprep.subr.bf16.mxu0 0
    %324 = vmatpush2.bf16.xpose.msra.mxu0 0
    %325 = vmatprep.subr.bf16.mxu0 0
    %326 = vmatpush2.bf16.xpose.msra.mxu0 0
    %327 = vmatprep.subr.bf16.mxu0 0
    %328 = vmatpush2.bf16.xpose.msra.mxu0 0
    %329 = vmatprep.subr.bf16.mxu0 0
    %330 = vmatpush2.bf16.xpose.msra.mxu0 0
    %331 = vmatprep.subr.bf16.mxu0 0
    %332 = vmatpush2.bf16.xpose.msra.mxu0 0
    %333 = vmatprep.subr.bf16.mxu0 0
    %334 = vmatpush2.bf16.xpose.msra.mxu0 0
    %335 = vmatprep.subr.bf16.mxu0 0
    %336 = vmatpush2.bf16.xpose.msra.mxu0 0
    %337 = vmatprep.subr.bf16.mxu0 0
    %338 = vmatpush2.bf16.xpose.msra.mxu0 0
    %339 = vmatprep.mubr.bf16.mxu0 0
    %340 = vmatmul.mubr.bf16.gmra.mxu0 %v57
    %v341 = vpop.f32.mrf.mxu0
    %v342 = vadd.f32 0.0, %v341
    %v343 = vpop.f32.mrf.mxu0
    %v344 = vpop.f32.mrf.mxu0
    %v345 = vpop.f32.mrf.mxu0
    %346 = vdwg.mxu0
    %347 = vmatprep.subr.bf16.mxu0 0
    %348 = vmatpush1.bf16.xpose.msra.mxu0 0
    %349 = vmatprep.subr.bf16.mxu0 0
    %350 = vmatpush1.bf16.xpose.msra.mxu0 0
    %351 = vmatprep.subr.bf16.mxu0 0
    %352 = vmatpush1.bf16.xpose.msra.mxu0 0
    %353 = vmatprep.subr.bf16.mxu0 0
    %354 = vmatpush1.bf16.xpose.msra.mxu0 0
    %355 = vmatprep.subr.bf16.mxu0 0
    %356 = vmatpush1.bf16.xpose.msra.mxu0 0
    %357 = vmatprep.subr.bf16.mxu0 0
    %358 = vmatpush1.bf16.xpose.msra.mxu0 0
    %359 = vmatprep.subr.bf16.mxu0 0
    %360 = vmatpush1.bf16.xpose.msra.mxu0 0
    %361 = vmatprep.subr.bf16.mxu0 0
    %362 = vmatpush1.bf16.xpose.msra.mxu0 %v66
    %363 = vmatprep.subr.bf16.mxu0 0
    %364 = vmatpush2.bf16.xpose.msra.mxu0 0
    %365 = vmatprep.subr.bf16.mxu0 0
    %366 = vmatpush2.bf16.xpose.msra.mxu0 0
    %367 = vmatprep.subr.bf16.mxu0 0
    %368 = vmatpush2.bf16.xpose.msra.mxu0 0
    %369 = vmatprep.subr.bf16.mxu0 0
    %370 = vmatpush2.bf16.xpose.msra.mxu0 0
    %371 = vmatprep.subr.bf16.mxu0 0
    %372 = vmatpush2.bf16.xpose.msra.mxu0 0
    %373 = vmatprep.subr.bf16.mxu0 0
    %374 = vmatpush2.bf16.xpose.msra.mxu0 0
    %375 = vmatprep.subr.bf16.mxu0 0
    %376 = vmatpush2.bf16.xpose.msra.mxu0 0
    %377 = vmatprep.subr.bf16.mxu0 0
    %378 = vmatpush2.bf16.xpose.msra.mxu0 0
    %379 = vmatprep.mubr.bf16.mxu0 0
    %380 = vmatmul.mubr.bf16.gmra.mxu0 %v58
    %v381 = vpop.f32.mrf.mxu0
    %v382 = vadd.f32 0.0, %v381
    %v383 = vpop.f32.mrf.mxu0
    %v384 = vpop.f32.mrf.mxu0
    %v385 = vpop.f32.mrf.mxu0
    %386 = vdwg.mxu0
    %v387 = vmul.f32 %v102, 0.5
    %v388 = vmul.f32 %v142, 0.5
    %v389 = vmul.f32 %v182, 0.5
    %v390 = vmul.f32 %v222, 0.5
    %v391 = vmul.f32 %v262, 0.5
    %v392 = vmul.f32 %v302, 0.5
    %v393 = vmul.f32 %v342, 0.5
    %v394 = vmul.f32 %v382, 0.5
    %v395 = vlaneseq
    %v396 = vshrl.u32 %v395, 7
    %v397 = vstv %s45
    %v398 = vadd.s32 %v397, %v396
    %v399 = vlaneseq
    %v400 = vand.u32 %v399, 127
    %v401 = vstv %s44
    %v402 = vadd.s32 %v401, %v400
    %vm403 = vcmp.le.s32.totalorder %v402, %v398
    %vm404 = vcmp.lt.s32.totalorder %v402, 3
    %vm405 = vmand %vm403, %vm404
    %v406 = vsel %vm405, 1, 0
    %vm407 = vcmp.eq.s32.totalorder %v406, 1
    %v408 = vsel %vm407, %v387, -1e+30
    %v409 = vsel %vm407, %v388, -1e+30
    %v410 = vsel %vm407, %v389, -1e+30
    %v411 = vsel %vm407, %v390, -1e+30
    %v412 = vsel %vm407, %v391, -1e+30
    %v413 = vsel %vm407, %v392, -1e+30
    %v414 = vsel %vm407, %v393, -1e+30
    %v415 = vsel %vm407, %v394, -1e+30
    %v416 = vld [vmem:[#allocation2] sm:$0xff]
    %v417 = vld [vmem:[#allocation2 + $0x8] sm:$0xff]
    %v418 = vld [vmem:[#allocation2 + $0x10] sm:$0xff]
    %v419 = vld [vmem:[#allocation2 + $0x18] sm:$0xff]
    %v420 = vld [vmem:[#allocation2 + $0x20] sm:$0xff]
    %v421 = vld [vmem:[#allocation2 + $0x28] sm:$0xff]
    %v422 = vld [vmem:[#allocation2 + $0x30] sm:$0xff]
    %v423 = vld [vmem:[#allocation2 + $0x38] sm:$0xff]
    %vm424 = vcmask 64512
    %v425 = vsel %vm424, %v408, -inf
    %426 = vmax.xlane.f32.xlu0 %v425
    %v427 = vpop.xlane.xlu0 %426
    %v428 = vsel %vm424, %v409, -inf
    %429 = vmax.xlane.f32.xlu0 %v428
    %v430 = vpop.xlane.xlu0 %429
    %v431 = vsel %vm424, %v410, -inf
    %432 = vmax.xlane.f32.xlu0 %v431
    %v433 = vpop.xlane.xlu0 %432
    %v434 = vsel %vm424, %v411, -inf
    %435 = vmax.xlane.f32.xlu0 %v434
    %v436 = vpop.xlane.xlu0 %435
    %v437 = vsel %vm424, %v412, -inf
    %438 = vmax.xlane.f32.xlu0 %v437
    %v439 = vpop.xlane.xlu0 %438
    %v440 = vsel %vm424, %v413, -inf
    %441 = vmax.xlane.f32.xlu0 %v440
    %v442 = vpop.xlane.xlu0 %441
    %v443 = vsel %vm424, %v414, -inf
    %444 = vmax.xlane.f32.xlu0 %v443
    %v445 = vpop.xlane.xlu0 %444
    %v446 = vsel %vm424, %v415, -inf
    %447 = vmax.xlane.f32.xlu0 %v446
    %v448 = vpop.xlane.xlu0 %447
    %v449 = vmax.f32 %v416, %v427
    %v450 = vmax.f32 %v417, %v430
    %v451 = vmax.f32 %v418, %v433
    %v452 = vmax.f32 %v419, %v436
    %v453 = vmax.f32 %v420, %v439
    %v454 = vmax.f32 %v421, %v442
    %v455 = vmax.f32 %v422, %v445
    %v456 = vmax.f32 %v423, %v448
    %v457 = vsub.f32 %v416, %v449
    %v458 = vsub.f32 %v417, %v450
    %v459 = vsub.f32 %v418, %v451
    %v460 = vsub.f32 %v419, %v452
    %v461 = vsub.f32 %v420, %v453
    %v462 = vsub.f32 %v421, %v454
    %v463 = vsub.f32 %v422, %v455
    %v464 = vsub.f32 %v423, %v456
    %v465 = vmul.f32 %v457, 1.442695
    %v466 = vpow.pop %v465
    %v467 = vmul.f32 %v458, 1.442695
    %v468 = vpow.pop %v467
    %v469 = vmul.f32 %v459, 1.442695
    %v470 = vpow.pop %v469
    %v471 = vmul.f32 %v460, 1.442695
    %v472 = vpow.pop %v471
    %v473 = vmul.f32 %v461, 1.442695
    %v474 = vpow.pop %v473
    %v475 = vmul.f32 %v462, 1.442695
    %v476 = vpow.pop %v475
    %v477 = vmul.f32 %v463, 1.442695
    %v478 = vpow.pop %v477
    %v479 = vmul.f32 %v464, 1.442695
    %v480 = vpow.pop %v479
    %482 = vset.pattern.permute.xlu0 0
    %483 = vperm.xlu0 %482, %v449
    %v484 = vpop.permute.xlu0 %483
    %487 = vset.pattern.permute.xlu0 0
    %488 = vperm.xlu0 %487, %v450
    %v489 = vpop.permute.xlu0 %488
    %492 = vset.pattern.permute.xlu0 0
    %493 = vperm.xlu0 %492, %v451
    %v494 = vpop.permute.xlu0 %493
    %497 = vset.pattern.permute.xlu0 0
    %498 = vperm.xlu0 %497, %v452
    %v499 = vpop.permute.xlu0 %498
    %502 = vset.pattern.permute.xlu0 0
    %503 = vperm.xlu0 %502, %v453
    %v504 = vpop.permute.xlu0 %503
    %507 = vset.pattern.permute.xlu0 0
    %508 = vperm.xlu0 %507, %v454
    %v509 = vpop.permute.xlu0 %508
    %512 = vset.pattern.permute.xlu0 0
    %513 = vperm.xlu0 %512, %v455
    %v514 = vpop.permute.xlu0 %513
    %517 = vset.pattern.permute.xlu0 0
    %518 = vperm.xlu0 %517, %v456
    %v519 = vpop.permute.xlu0 %518
    %v521 = vsub.f32 %v408, %v484
    %v522 = vsub.f32 %v409, %v489
    %v523 = vsub.f32 %v410, %v494
    %v524 = vsub.f32 %v411, %v499
    %v525 = vsub.f32 %v412, %v504
    %v526 = vsub.f32 %v413, %v509
    %v527 = vsub.f32 %v414, %v514
    %v528 = vsub.f32 %v415, %v519
    %v529 = vmul.f32 %v521, 1.442695
    %v530 = vpow.pop %v529
    %v531 = vmul.f32 %v522, 1.442695
    %v532 = vpow.pop %v531
    %v533 = vmul.f32 %v523, 1.442695
    %v534 = vpow.pop %v533
    %v535 = vmul.f32 %v524, 1.442695
    %v536 = vpow.pop %v535
    %v537 = vmul.f32 %v525, 1.442695
    %v538 = vpow.pop %v537
    %v539 = vmul.f32 %v526, 1.442695
    %v540 = vpow.pop %v539
    %v541 = vmul.f32 %v527, 1.442695
    %v542 = vpow.pop %v541
    %v543 = vmul.f32 %v528, 1.442695
    %v544 = vpow.pop %v543
    %v545 = vld [vmem:[#allocation3] sm:$0xff]
    %v546 = vld [vmem:[#allocation3 + $0x8] sm:$0xff]
    %v547 = vld [vmem:[#allocation3 + $0x10] sm:$0xff]
    %v548 = vld [vmem:[#allocation3 + $0x18] sm:$0xff]
    %v549 = vld [vmem:[#allocation3 + $0x20] sm:$0xff]
    %v550 = vld [vmem:[#allocation3 + $0x28] sm:$0xff]
    %v551 = vld [vmem:[#allocation3 + $0x30] sm:$0xff]
    %v552 = vld [vmem:[#allocation3 + $0x38] sm:$0xff]
    %v553 = vmul.f32 %v466, %v545
    %v554 = vmul.f32 %v468, %v546
    %v555 = vmul.f32 %v470, %v547
    %v556 = vmul.f32 %v472, %v548
    %v557 = vmul.f32 %v474, %v549
    %v558 = vmul.f32 %v476, %v550
    %v559 = vmul.f32 %v478, %v551
    %v560 = vmul.f32 %v480, %v552
    %v561 = vsel %vm424, %v530, 0.0
    %562 = vadd.xlane.f32.xlu0 %v561
    %v563 = vpop.xlane.xlu0 %562
    %v564 = vsel %vm424, %v532, 0.0
    %565 = vadd.xlane.f32.xlu0 %v564
    %v566 = vpop.xlane.xlu0 %565
    %v567 = vsel %vm424, %v534, 0.0
    %568 = vadd.xlane.f32.xlu0 %v567
    %v569 = vpop.xlane.xlu0 %568
    %v570 = vsel %vm424, %v536, 0.0
    %571 = vadd.xlane.f32.xlu0 %v570
    %v572 = vpop.xlane.xlu0 %571
    %v573 = vsel %vm424, %v538, 0.0
    %574 = vadd.xlane.f32.xlu0 %v573
    %v575 = vpop.xlane.xlu0 %574
    %v576 = vsel %vm424, %v540, 0.0
    %577 = vadd.xlane.f32.xlu0 %v576
    %v578 = vpop.xlane.xlu0 %577
    %v579 = vsel %vm424, %v542, 0.0
    %580 = vadd.xlane.f32.xlu0 %v579
    %v581 = vpop.xlane.xlu0 %580
    %v582 = vsel %vm424, %v544, 0.0
    %583 = vadd.xlane.f32.xlu0 %v582
    %v584 = vpop.xlane.xlu0 %583
    %v585 = vadd.f32 %v553, %v563
    %v586 = vadd.f32 %v554, %v566
    %v587 = vadd.f32 %v555, %v569
    %v588 = vadd.f32 %v556, %v572
    %v589 = vadd.f32 %v557, %v575
    %v590 = vadd.f32 %v558, %v578
    %v591 = vadd.f32 %v559, %v581
    %v592 = vadd.f32 %v560, %v584
    %vm593 = vcmask 7168
    %594 = vst.msk [vmem:[#allocation3] sm:$0xff] %vm593, %v585
    %595 = vst.msk [vmem:[#allocation3 + $0x8] sm:$0xff] %vm593, %v586
    %596 = vst.msk [vmem:[#allocation3 + $0x10] sm:$0xff] %vm593, %v587
    %597 = vst.msk [vmem:[#allocation3 + $0x18] sm:$0xff] %vm593, %v588
    %598 = vst.msk [vmem:[#allocation3 + $0x20] sm:$0xff] %vm593, %v589
    %599 = vst.msk [vmem:[#allocation3 + $0x28] sm:$0xff] %vm593, %v590
    %600 = vst.msk [vmem:[#allocation3 + $0x30] sm:$0xff] %vm593, %v591
    %601 = vst.msk [vmem:[#allocation3 + $0x38] sm:$0xff] %vm593, %v592
    %v602 = vld [vmem:[#allocation4] sm:$0xff]
    %v603 = vld [vmem:[#allocation4 + $0x8] sm:$0xff]
    %v604 = vld [vmem:[#allocation4 + $0x10] sm:$0xff]
    %v605 = vld [vmem:[#allocation4 + $0x18] sm:$0xff]
    %v606 = vld [vmem:[#allocation4 + $0x20] sm:$0xff]
    %v607 = vld [vmem:[#allocation4 + $0x28] sm:$0xff]
    %v608 = vld [vmem:[#allocation4 + $0x30] sm:$0xff]
    %v609 = vld [vmem:[#allocation4 + $0x38] sm:$0xff]
    %611 = vset.pattern.permute.xlu0 0
    %612 = vperm.xlu0 %611, %v466
    %v613 = vpop.permute.xlu0 %612
    %616 = vset.pattern.permute.xlu0 0
    %617 = vperm.xlu0 %616, %v468
    %v618 = vpop.permute.xlu0 %617
    %621 = vset.pattern.permute.xlu0 0
    %622 = vperm.xlu0 %621, %v470
    %v623 = vpop.permute.xlu0 %622
    %626 = vset.pattern.permute.xlu0 0
    %627 = vperm.xlu0 %626, %v472
    %v628 = vpop.permute.xlu0 %627
    %631 = vset.pattern.permute.xlu0 0
    %632 = vperm.xlu0 %631, %v474
    %v633 = vpop.permute.xlu0 %632
    %636 = vset.pattern.permute.xlu0 0
    %637 = vperm.xlu0 %636, %v476
    %v638 = vpop.permute.xlu0 %637
    %641 = vset.pattern.permute.xlu0 0
    %642 = vperm.xlu0 %641, %v478
    %v643 = vpop.permute.xlu0 %642
    %646 = vset.pattern.permute.xlu0 0
    %647 = vperm.xlu0 %646, %v480
    %v648 = vpop.permute.xlu0 %647
    %v650 = vmul.f32 %v613, %v602
    %v651 = vmul.f32 %v618, %v603
    %v652 = vmul.f32 %v623, %v604
    %v653 = vmul.f32 %v628, %v605
    %v654 = vmul.f32 %v633, %v606
    %v655 = vmul.f32 %v638, %v607
    %v656 = vmul.f32 %v643, %v608
    %v657 = vmul.f32 %v648, %v609
    %v658 = vpack.c.bf16 %v530, %v530
    %v659 = vpack.c.bf16 %v532, %v532
    %v660 = vpack.c.bf16 %v534, %v534
    %v661 = vpack.c.bf16 %v536, %v536
    %v662 = vpack.c.bf16 %v538, %v538
    %v663 = vpack.c.bf16 %v540, %v540
    %v664 = vpack.c.bf16 %v542, %v542
    %v665 = vpack.c.bf16 %v544, %v544
    %v666 = vld [vmem:[%s2] sm:$0xf]
    %v667 = vld [vmem:[%s2 + $0x4] sm:$0xf]
    %v668 = vld [vmem:[%s2 + $0x8] sm:$0xf]
    %v669 = vld [vmem:[%s2 + $0xc] sm:$0xf]
    %v670 = vld [vmem:[%s2 + $0x10] sm:$0xf]
    %v671 = vld [vmem:[%s2 + $0x14] sm:$0xf]
    %v672 = vld [vmem:[%s2 + $0x18] sm:$0xf]
    %v673 = vld [vmem:[%s2 + $0x1c] sm:$0xf]
    %v675 = vsel %vm424, %v658, 0
    %vm677 = vcmask 1043456
    %v679 = vsel %vm677, %v666, 0
    %681 = vmatprep.subr.bf16.mxu0 0
    %682 = vmatpush1.bf16.msra.mxu0 0
    %683 = vmatprep.subr.bf16.mxu0 0
    %684 = vmatpush1.bf16.msra.mxu0 0
    %685 = vmatprep.subr.bf16.mxu0 0
    %686 = vmatpush1.bf16.msra.mxu0 0
    %687 = vmatprep.subr.bf16.mxu0 0
    %688 = vmatpush1.bf16.msra.mxu0 0
    %689 = vmatprep.subr.bf16.mxu0 0
    %690 = vmatpush1.bf16.msra.mxu0 0
    %691 = vmatprep.subr.bf16.mxu0 0
    %692 = vmatpush1.bf16.msra.mxu0 0
    %693 = vmatprep.subr.bf16.mxu0 0
    %694 = vmatpush1.bf16.msra.mxu0 0
    %695 = vmatprep.subr.bf16.mxu0 0
    %696 = vmatpush1.bf16.msra.mxu0 %v679
    %697 = vmatprep.subr.bf16.mxu0 0
    %698 = vmatpush2.bf16.msra.mxu0 0
    %699 = vmatprep.subr.bf16.mxu0 0
    %700 = vmatpush2.bf16.msra.mxu0 0
    %701 = vmatprep.subr.bf16.mxu0 0
    %702 = vmatpush2.bf16.msra.mxu0 0
    %703 = vmatprep.subr.bf16.mxu0 0
    %704 = vmatpush2.bf16.msra.mxu0 0
    %705 = vmatprep.subr.bf16.mxu0 0
    %706 = vmatpush2.bf16.msra.mxu0 0
    %707 = vmatprep.subr.bf16.mxu0 0
    %708 = vmatpush2.bf16.msra.mxu0 0
    %709 = vmatprep.subr.bf16.mxu0 0
    %710 = vmatpush2.bf16.msra.mxu0 0
    %711 = vmatprep.subr.bf16.mxu0 0
    %712 = vmatpush2.bf16.msra.mxu0 0
    %713 = vmatprep.mubr.bf16.mxu0 0
    %714 = vmatmul.mubr.bf16.gmra.mxu0 %v675
    %v715 = vpop.f32.mrf.mxu0
    %v716 = vadd.f32 0.0, %v715
    %v717 = vpop.f32.mrf.mxu0
    %v718 = vpop.f32.mrf.mxu0
    %v719 = vpop.f32.mrf.mxu0
    %720 = vdwg.mxu0
    %v722 = vsel %vm424, %v659, 0
    %v725 = vsel %vm677, %v667, 0
    %727 = vmatprep.subr.bf16.mxu0 0
    %728 = vmatpush1.bf16.msra.mxu0 0
    %729 = vmatprep.subr.bf16.mxu0 0
    %730 = vmatpush1.bf16.msra.mxu0 0
    %731 = vmatprep.subr.bf16.mxu0 0
    %732 = vmatpush1.bf16.msra.mxu0 0
    %733 = vmatprep.subr.bf16.mxu0 0
    %734 = vmatpush1.bf16.msra.mxu0 0
    %735 = vmatprep.subr.bf16.mxu0 0
    %736 = vmatpush1.bf16.msra.mxu0 0
    %737 = vmatprep.subr.bf16.mxu0 0
    %738 = vmatpush1.bf16.msra.mxu0 0
    %739 = vmatprep.subr.bf16.mxu0 0
    %740 = vmatpush1.bf16.msra.mxu0 0
    %741 = vmatprep.subr.bf16.mxu0 0
    %742 = vmatpush1.bf16.msra.mxu0 %v725
    %743 = vmatprep.subr.bf16.mxu0 0
    %744 = vmatpush2.bf16.msra.mxu0 0
    %745 = vmatprep.subr.bf16.mxu0 0
    %746 = vmatpush2.bf16.msra.mxu0 0
    %747 = vmatprep.subr.bf16.mxu0 0
    %748 = vmatpush2.bf16.msra.mxu0 0
    %749 = vmatprep.subr.bf16.mxu0 0
    %750 = vmatpush2.bf16.msra.mxu0 0
    %751 = vmatprep.subr.bf16.mxu0 0
    %752 = vmatpush2.bf16.msra.mxu0 0
    %753 = vmatprep.subr.bf16.mxu0 0
    %754 = vmatpush2.bf16.msra.mxu0 0
    %755 = vmatprep.subr.bf16.mxu0 0
    %756 = vmatpush2.bf16.msra.mxu0 0
    %757 = vmatprep.subr.bf16.mxu0 0
    %758 = vmatpush2.bf16.msra.mxu0 0
    %759 = vmatprep.mubr.bf16.mxu0 0
    %760 = vmatmul.mubr.bf16.gmra.mxu0 %v722
    %v761 = vpop.f32.mrf.mxu0
    %v762 = vadd.f32 0.0, %v761
    %v763 = vpop.f32.mrf.mxu0
    %v764 = vpop.f32.mrf.mxu0
    %v765 = vpop.f32.mrf.mxu0
    %766 = vdwg.mxu0
    %v768 = vsel %vm424, %v660, 0
    %v771 = vsel %vm677, %v668, 0
    %773 = vmatprep.subr.bf16.mxu0 0
    %774 = vmatpush1.bf16.msra.mxu0 0
    %775 = vmatprep.subr.bf16.mxu0 0
    %776 = vmatpush1.bf16.msra.mxu0 0
    %777 = vmatprep.subr.bf16.mxu0 0
    %778 = vmatpush1.bf16.msra.mxu0 0
    %779 = vmatprep.subr.bf16.mxu0 0
    %780 = vmatpush1.bf16.msra.mxu0 0
    %781 = vmatprep.subr.bf16.mxu0 0
    %782 = vmatpush1.bf16.msra.mxu0 0
    %783 = vmatprep.subr.bf16.mxu0 0
    %784 = vmatpush1.bf16.msra.mxu0 0
    %785 = vmatprep.subr.bf16.mxu0 0
    %786 = vmatpush1.bf16.msra.mxu0 0
    %787 = vmatprep.subr.bf16.mxu0 0
    %788 = vmatpush1.bf16.msra.mxu0 %v771
    %789 = vmatprep.subr.bf16.mxu0 0
    %790 = vmatpush2.bf16.msra.mxu0 0
    %791 = vmatprep.subr.bf16.mxu0 0
    %792 = vmatpush2.bf16.msra.mxu0 0
    %793 = vmatprep.subr.bf16.mxu0 0
    %794 = vmatpush2.bf16.msra.mxu0 0
    %795 = vmatprep.subr.bf16.mxu0 0
    %796 = vmatpush2.bf16.msra.mxu0 0
    %797 = vmatprep.subr.bf16.mxu0 0
    %798 = vmatpush2.bf16.msra.mxu0 0
    %799 = vmatprep.subr.bf16.mxu0 0
    %800 = vmatpush2.bf16.msra.mxu0 0
    %801 = vmatprep.subr.bf16.mxu0 0
    %802 = vmatpush2.bf16.msra.mxu0 0
    %803 = vmatprep.subr.bf16.mxu0 0
    %804 = vmatpush2.bf16.msra.mxu0 0
    %805 = vmatprep.mubr.bf16.mxu0 0
    %806 = vmatmul.mubr.bf16.gmra.mxu0 %v768
    %v807 = vpop.f32.mrf.mxu0
    %v808 = vadd.f32 0.0, %v807
    %v809 = vpop.f32.mrf.mxu0
    %v810 = vpop.f32.mrf.mxu0
    %v811 = vpop.f32.mrf.mxu0
    %812 = vdwg.mxu0
    %v814 = vsel %vm424, %v661, 0
    %v817 = vsel %vm677, %v669, 0
    %819 = vmatprep.subr.bf16.mxu0 0
    %820 = vmatpush1.bf16.msra.mxu0 0
    %821 = vmatprep.subr.bf16.mxu0 0
    %822 = vmatpush1.bf16.msra.mxu0 0
    %823 = vmatprep.subr.bf16.mxu0 0
    %824 = vmatpush1.bf16.msra.mxu0 0
    %825 = vmatprep.subr.bf16.mxu0 0
    %826 = vmatpush1.bf16.msra.mxu0 0
    %827 = vmatprep.subr.bf16.mxu0 0
    %828 = vmatpush1.bf16.msra.mxu0 0
    %829 = vmatprep.subr.bf16.mxu0 0
    %830 = vmatpush1.bf16.msra.mxu0 0
    %831 = vmatprep.subr.bf16.mxu0 0
    %832 = vmatpush1.bf16.msra.mxu0 0
    %833 = vmatprep.subr.bf16.mxu0 0
    %834 = vmatpush1.bf16.msra.mxu0 %v817
    %835 = vmatprep.subr.bf16.mxu0 0
    %836 = vmatpush2.bf16.msra.mxu0 0
    %837 = vmatprep.subr.bf16.mxu0 0
    %838 = vmatpush2.bf16.msra.mxu0 0
    %839 = vmatprep.subr.bf16.mxu0 0
    %840 = vmatpush2.bf16.msra.mxu0 0
    %841 = vmatprep.subr.bf16.mxu0 0
    %842 = vmatpush2.bf16.msra.mxu0 0
    %843 = vmatprep.subr.bf16.mxu0 0
    %844 = vmatpush2.bf16.msra.mxu0 0
    %845 = vmatprep.subr.bf16.mxu0 0
    %846 = vmatpush2.bf16.msra.mxu0 0
    %847 = vmatprep.subr.bf16.mxu0 0
    %848 = vmatpush2.bf16.msra.mxu0 0
    %849 = vmatprep.subr.bf16.mxu0 0
    %850 = vmatpush2.bf16.msra.mxu0 0
    %851 = vmatprep.mubr.bf16.mxu0 0
    %852 = vmatmul.mubr.bf16.gmra.mxu0 %v814
    %v853 = vpop.f32.mrf.mxu0
    %v854 = vadd.f32 0.0, %v853
    %v855 = vpop.f32.mrf.mxu0
    %v856 = vpop.f32.mrf.mxu0
    %v857 = vpop.f32.mrf.mxu0
    %858 = vdwg.mxu0
    %v860 = vsel %vm424, %v662, 0
    %v863 = vsel %vm677, %v670, 0
    %865 = vmatprep.subr.bf16.mxu0 0
    %866 = vmatpush1.bf16.msra.mxu0 0
    %867 = vmatprep.subr.bf16.mxu0 0
    %868 = vmatpush1.bf16.msra.mxu0 0
    %869 = vmatprep.subr.bf16.mxu0 0
    %870 = vmatpush1.bf16.msra.mxu0 0
    %871 = vmatprep.subr.bf16.mxu0 0
    %872 = vmatpush1.bf16.msra.mxu0 0
    %873 = vmatprep.subr.bf16.mxu0 0
    %874 = vmatpush1.bf16.msra.mxu0 0
    %875 = vmatprep.subr.bf16.mxu0 0
    %876 = vmatpush1.bf16.msra.mxu0 0
    %877 = vmatprep.subr.bf16.mxu0 0
    %878 = vmatpush1.bf16.msra.mxu0 0
    %879 = vmatprep.subr.bf16.mxu0 0
    %880 = vmatpush1.bf16.msra.mxu0 %v863
    %881 = vmatprep.subr.bf16.mxu0 0
    %882 = vmatpush2.bf16.msra.mxu0 0
    %883 = vmatprep.subr.bf16.mxu0 0
    %884 = vmatpush2.bf16.msra.mxu0 0
    %885 = vmatprep.subr.bf16.mxu0 0
    %886 = vmatpush2.bf16.msra.mxu0 0
    %887 = vmatprep.subr.bf16.mxu0 0
    %888 = vmatpush2.bf16.msra.mxu0 0
    %889 = vmatprep.subr.bf16.mxu0 0
    %890 = vmatpush2.bf16.msra.mxu0 0
    %891 = vmatprep.subr.bf16.mxu0 0
    %892 = vmatpush2.bf16.msra.mxu0 0
    %893 = vmatprep.subr.bf16.mxu0 0
    %894 = vmatpush2.bf16.msra.mxu0 0
    %895 = vmatprep.subr.bf16.mxu0 0
    %896 = vmatpush2.bf16.msra.mxu0 0
    %897 = vmatprep.mubr.bf16.mxu0 0
    %898 = vmatmul.mubr.bf16.gmra.mxu0 %v860
    %v899 = vpop.f32.mrf.mxu0
    %v900 = vadd.f32 0.0, %v899
    %v901 = vpop.f32.mrf.mxu0
    %v902 = vpop.f32.mrf.mxu0
    %v903 = vpop.f32.mrf.mxu0
    %904 = vdwg.mxu0
    %v906 = vsel %vm424, %v663, 0
    %v909 = vsel %vm677, %v671, 0
    %911 = vmatprep.subr.bf16.mxu0 0
    %912 = vmatpush1.bf16.msra.mxu0 0
    %913 = vmatprep.subr.bf16.mxu0 0
    %914 = vmatpush1.bf16.msra.mxu0 0
    %915 = vmatprep.subr.bf16.mxu0 0
    %916 = vmatpush1.bf16.msra.mxu0 0
    %917 = vmatprep.subr.bf16.mxu0 0
    %918 = vmatpush1.bf16.msra.mxu0 0
    %919 = vmatprep.subr.bf16.mxu0 0
    %920 = vmatpush1.bf16.msra.mxu0 0
    %921 = vmatprep.subr.bf16.mxu0 0
    %922 = vmatpush1.bf16.msra.mxu0 0
    %923 = vmatprep.subr.bf16.mxu0 0
    %924 = vmatpush1.bf16.msra.mxu0 0
    %925 = vmatprep.subr.bf16.mxu0 0
    %926 = vmatpush1.bf16.msra.mxu0 %v909
    %927 = vmatprep.subr.bf16.mxu0 0
    %928 = vmatpush2.bf16.msra.mxu0 0
    %929 = vmatprep.subr.bf16.mxu0 0
    %930 = vmatpush2.bf16.msra.mxu0 0
    %931 = vmatprep.subr.bf16.mxu0 0
    %932 = vmatpush2.bf16.msra.mxu0 0
    %933 = vmatprep.subr.bf16.mxu0 0
    %934 = vmatpush2.bf16.msra.mxu0 0
    %935 = vmatprep.subr.bf16.mxu0 0
    %936 = vmatpush2.bf16.msra.mxu0 0
    %937 = vmatprep.subr.bf16.mxu0 0
    %938 = vmatpush2.bf16.msra.mxu0 0
    %939 = vmatprep.subr.bf16.mxu0 0
    %940 = vmatpush2.bf16.msra.mxu0 0
    %941 = vmatprep.subr.bf16.mxu0 0
    %942 = vmatpush2.bf16.msra.mxu0 0
    %943 = vmatprep.mubr.bf16.mxu0 0
    %944 = vmatmul.mubr.bf16.gmra.mxu0 %v906
    %v945 = vpop.f32.mrf.mxu0
    %v946 = vadd.f32 0.0, %v945
    %v947 = vpop.f32.mrf.mxu0
    %v948 = vpop.f32.mrf.mxu0
    %v949 = vpop.f32.mrf.mxu0
    %950 = vdwg.mxu0
    %v952 = vsel %vm424, %v664, 0
    %v955 = vsel %vm677, %v672, 0
    %957 = vmatprep.subr.bf16.mxu0 0
    %958 = vmatpush1.bf16.msra.mxu0 0
    %959 = vmatprep.subr.bf16.mxu0 0
    %960 = vmatpush1.bf16.msra.mxu0 0
    %961 = vmatprep.subr.bf16.mxu0 0
    %962 = vmatpush1.bf16.msra.mxu0 0
    %963 = vmatprep.subr.bf16.mxu0 0
    %964 = vmatpush1.bf16.msra.mxu0 0
    %965 = vmatprep.subr.bf16.mxu0 0
    %966 = vmatpush1.bf16.msra.mxu0 0
    %967 = vmatprep.subr.bf16.mxu0 0
    %968 = vmatpush1.bf16.msra.mxu0 0
    %969 = vmatprep.subr.bf16.mxu0 0
    %970 = vmatpush1.bf16.msra.mxu0 0
    %971 = vmatprep.subr.bf16.mxu0 0
    %972 = vmatpush1.bf16.msra.mxu0 %v955
    %973 = vmatprep.subr.bf16.mxu0 0
    %974 = vmatpush2.bf16.msra.mxu0 0
    %975 = vmatprep.subr.bf16.mxu0 0
    %976 = vmatpush2.bf16.msra.mxu0 0
    %977 = vmatprep.subr.bf16.mxu0 0
    %978 = vmatpush2.bf16.msra.mxu0 0
    %979 = vmatprep.subr.bf16.mxu0 0
    %980 = vmatpush2.bf16.msra.mxu0 0
    %981 = vmatprep.subr.bf16.mxu0 0
    %982 = vmatpush2.bf16.msra.mxu0 0
    %983 = vmatprep.subr.bf16.mxu0 0
    %984 = vmatpush2.bf16.msra.mxu0 0
    %985 = vmatprep.subr.bf16.mxu0 0
    %986 = vmatpush2.bf16.msra.mxu0 0
    %987 = vmatprep.subr.bf16.mxu0 0
    %988 = vmatpush2.bf16.msra.mxu0 0
    %989 = vmatprep.mubr.bf16.mxu0 0
    %990 = vmatmul.mubr.bf16.gmra.mxu0 %v952
    %v991 = vpop.f32.mrf.mxu0
    %v992 = vadd.f32 0.0, %v991
    %v993 = vpop.f32.mrf.mxu0
    %v994 = vpop.f32.mrf.mxu0
    %v995 = vpop.f32.mrf.mxu0
    %996 = vdwg.mxu0
    %v998 = vsel %vm424, %v665, 0
    %v1001 = vsel %vm677, %v673, 0
    %1003 = vmatprep.subr.bf16.mxu0 0
    %1004 = vmatpush1.bf16.msra.mxu0 0
    %1005 = vmatprep.subr.bf16.mxu0 0
    %1006 = vmatpush1.bf16.msra.mxu0 0
    %1007 = vmatprep.subr.bf16.mxu0 0
    %1008 = vmatpush1.bf16.msra.mxu0 0
    %1009 = vmatprep.subr.bf16.mxu0 0
    %1010 = vmatpush1.bf16.msra.mxu0 0
    %1011 = vmatprep.subr.bf16.mxu0 0
    %1012 = vmatpush1.bf16.msra.mxu0 0
    %1013 = vmatprep.subr.bf16.mxu0 0
    %1014 = vmatpush1.bf16.msra.mxu0 0
    %1015 = vmatprep.subr.bf16.mxu0 0
    %1016 = vmatpush1.bf16.msra.mxu0 0
    %1017 = vmatprep.subr.bf16.mxu0 0
    %1018 = vmatpush1.bf16.msra.mxu0 %v1001
    %1019 = vmatprep.subr.bf16.mxu0 0
    %1020 = vmatpush2.bf16.msra.mxu0 0
    %1021 = vmatprep.subr.bf16.mxu0 0
    %1022 = vmatpush2.bf16.msra.mxu0 0
    %1023 = vmatprep.subr.bf16.mxu0 0
    %1024 = vmatpush2.bf16.msra.mxu0 0
    %1025 = vmatprep.subr.bf16.mxu0 0
    %1026 = vmatpush2.bf16.msra.mxu0 0
    %1027 = vmatprep.subr.bf16.mxu0 0
    %1028 = vmatpush2.bf16.msra.mxu0 0
    %1029 = vmatprep.subr.bf16.mxu0 0
    %1030 = vmatpush2.bf16.msra.mxu0 0
    %1031 = vmatprep.subr.bf16.mxu0 0
    %1032 = vmatpush2.bf16.msra.mxu0 0
    %1033 = vmatprep.subr.bf16.mxu0 0
    %1034 = vmatpush2.bf16.msra.mxu0 0
    %1035 = vmatprep.mubr.bf16.mxu0 0
    %1036 = vmatmul.mubr.bf16.gmra.mxu0 %v998
    %v1037 = vpop.f32.mrf.mxu0
    %v1038 = vadd.f32 0.0, %v1037
    %v1039 = vpop.f32.mrf.mxu0
    %v1040 = vpop.f32.mrf.mxu0
    %v1041 = vpop.f32.mrf.mxu0
    %1042 = vdwg.mxu0
    %v1043 = vadd.f32 %v650, %v716
    %v1044 = vadd.f32 %v651, %v762
    %v1045 = vadd.f32 %v652, %v808
    %v1046 = vadd.f32 %v653, %v854
    %v1047 = vadd.f32 %v654, %v900
    %v1048 = vadd.f32 %v655, %v946
    %v1049 = vadd.f32 %v656, %v992
    %v1050 = vadd.f32 %v657, %v1038
    %1051 = vst [vmem:[#allocation4] sm:$0xff] %v1043
    %1052 = vst [vmem:[#allocation4 + $0x8] sm:$0xff] %v1044
    %1053 = vst [vmem:[#allocation4 + $0x10] sm:$0xff] %v1045
    %1054 = vst [vmem:[#allocation4 + $0x18] sm:$0xff] %v1046
    %1055 = vst [vmem:[#allocation4 + $0x20] sm:$0xff] %v1047
    %1056 = vst [vmem:[#allocation4 + $0x28] sm:$0xff] %v1048
    %1057 = vst [vmem:[#allocation4 + $0x30] sm:$0xff] %v1049
    %1058 = vst [vmem:[#allocation4 + $0x38] sm:$0xff] %v1050
    %1059 = vst.msk [vmem:[#allocation2] sm:$0xff] %vm593, %v449
    %1060 = vst.msk [vmem:[#allocation2 + $0x8] sm:$0xff] %vm593, %v450
    %1061 = vst.msk [vmem:[#allocation2 + $0x10] sm:$0xff] %vm593, %v451
    %1062 = vst.msk [vmem:[#allocation2 + $0x18] sm:$0xff] %vm593, %v452
    %1063 = vst.msk [vmem:[#allocation2 + $0x20] sm:$0xff] %vm593, %v453
    %1064 = vst.msk [vmem:[#allocation2 + $0x28] sm:$0xff] %vm593, %v454
    %1065 = vst.msk [vmem:[#allocation2 + $0x30] sm:$0xff] %vm593, %v455
    %1066 = vst.msk [vmem:[#allocation2 + $0x38] sm:$0xff] %vm593, %v456
  $region21: #{_lambda_.41} parent=0 // pred_fallthru
    _
  // Predicated region
  $region22: #{_lambda_.41} parent=0 // pred_check
    %p1067 = pneg %p15
  $region23: #{_lambda_.41} parent=0 // pred_check_branch
    %1069 = sbr.rel (%p1067) target = $region25
  $region24: #{_lambda_.41} parent=0 // pred_region
    %v1070 = vld [vmem:[#allocation4] sm:$0xff]
    %v1071 = vld [vmem:[#allocation4 + $0x8] sm:$0xff]
    %v1072 = vld [vmem:[#allocation4 + $0x10] sm:$0xff]
    %v1073 = vld [vmem:[#allocation4 + $0x18] sm:$0xff]
    %v1074 = vld [vmem:[#allocation4 + $0x20] sm:$0xff]
    %v1075 = vld [vmem:[#allocation4 + $0x28] sm:$0xff]
    %v1076 = vld [vmem:[#allocation4 + $0x30] sm:$0xff]
    %v1077 = vld [vmem:[#allocation4 + $0x38] sm:$0xff]
    %v1078 = vld [vmem:[#allocation3] sm:$0xff]
    %v1079 = vld [vmem:[#allocation3 + $0x8] sm:$0xff]
    %v1080 = vld [vmem:[#allocation3 + $0x10] sm:$0xff]
    %v1081 = vld [vmem:[#allocation3 + $0x18] sm:$0xff]
    %v1082 = vld [vmem:[#allocation3 + $0x20] sm:$0xff]
    %v1083 = vld [vmem:[#allocation3 + $0x28] sm:$0xff]
    %v1084 = vld [vmem:[#allocation3 + $0x30] sm:$0xff]
    %v1085 = vld [vmem:[#allocation3 + $0x38] sm:$0xff]
    %1087 = vset.pattern.permute.xlu0 0
    %1088 = vperm.xlu0 %1087, %v1078
    %v1089 = vpop.permute.xlu0 %1088
    %1092 = vset.pattern.permute.xlu0 0
    %1093 = vperm.xlu0 %1092, %v1079
    %v1094 = vpop.permute.xlu0 %1093
    %1097 = vset.pattern.permute.xlu0 0
    %1098 = vperm.xlu0 %1097, %v1080
    %v1099 = vpop.permute.xlu0 %1098
    %1102 = vset.pattern.permute.xlu0 0
    %1103 = vperm.xlu0 %1102, %v1081
    %v1104 = vpop.permute.xlu0 %1103
    %1107 = vset.pattern.permute.xlu0 0
    %1108 = vperm.xlu0 %1107, %v1082
    %v1109 = vpop.permute.xlu0 %1108
    %1112 = vset.pattern.permute.xlu0 0
    %1113 = vperm.xlu0 %1112, %v1083
    %v1114 = vpop.permute.xlu0 %1113
    %1117 = vset.pattern.permute.xlu0 0
    %1118 = vperm.xlu0 %1117, %v1084
    %v1119 = vpop.permute.xlu0 %1118
    %1122 = vset.pattern.permute.xlu0 0
    %1123 = vperm.xlu0 %1122, %v1085
    %v1124 = vpop.permute.xlu0 %1123
    %v1126 = vrcp.pop %v1089
    %v1127 = vmul.f32 %v1070, %v1126
    %v1128 = vrcp.pop %v1094
    %v1129 = vmul.f32 %v1071, %v1128
    %v1130 = vrcp.pop %v1099
    %v1131 = vmul.f32 %v1072, %v1130
    %v1132 = vrcp.pop %v1104
    %v1133 = vmul.f32 %v1073, %v1132
    %v1134 = vrcp.pop %v1109
    %v1135 = vmul.f32 %v1074, %v1134
    %v1136 = vrcp.pop %v1114
    %v1137 = vmul.f32 %v1075, %v1136
    %v1138 = vrcp.pop %v1119
    %v1139 = vmul.f32 %v1076, %v1138
    %v1140 = vrcp.pop %v1124
    %v1141 = vmul.f32 %v1077, %v1140
    %v1142 = vpack.c.bf16 %v1127, %v1127
    %v1143 = vpack.c.bf16 %v1129, %v1129
    %v1144 = vpack.c.bf16 %v1131, %v1131
    %v1145 = vpack.c.bf16 %v1133, %v1133
    %v1146 = vpack.c.bf16 %v1135, %v1135
    %v1147 = vpack.c.bf16 %v1137, %v1137
    %v1148 = vpack.c.bf16 %v1139, %v1139
    %v1149 = vpack.c.bf16 %v1141, %v1141
    %1150 = vst [vmem:[%s3] sm:$0xf] %v1142
    %1151 = vst [vmem:[%s3 + $0x4] sm:$0xf] %v1143
    %1152 = vst [vmem:[%s3 + $0x8] sm:$0xf] %v1144
    %1153 = vst [vmem:[%s3 + $0xc] sm:$0xf] %v1145
    %1154 = vst [vmem:[%s3 + $0x10] sm:$0xf] %v1146
    %1155 = vst [vmem:[%s3 + $0x14] sm:$0xf] %v1147
    %1156 = vst [vmem:[%s3 + $0x18] sm:$0xf] %v1148
    %1157 = vst [vmem:[%s3 + $0x1c] sm:$0xf] %v1149
  $region25: #{_lambda_.41} parent=0 // pred_fallthru
    _
  // Predicated region
  $region26: #{_lambda_.41} parent=0 // pred_check
    _
  $region27: #{_lambda_.41} parent=0 // pred_check_branch
    %1159 = sbr.rel (0) target = $region29
  $region28: #{_lambda_.41} parent=0 // pred_region
    _
  $region29: #{_lambda_.41} parent=0 // pred_fallthru
    _
  // Predicated region
  $region30: #{_lambda_.41} parent=0 // pred_check
    _
  $region31: #{_lambda_.41} parent=0 // pred_check_branch
    %1161 = sbr.rel (0) target = $region33
  $region32: #{_lambda_.41} parent=0 // pred_region
    _
  $region33: #{_lambda_.41} parent=0 // pred_fallthru
    _

// kernel: _lambda_.71
$region0: #{_lambda_.71}
  #allocation0 [shape = 'u32[]', space=smem, size = 0x4, offset = 0x4, fixed_abs, tag = 'smem constant byte address 0x4 - core index']
  #allocation1 [shape = 'u32[144,128]{1,0:T(1,128)}', space=vmem, size = 0x12000, scoped, tag = 'internal scratch']
  #allocation2 [shape = 'f32[32,128]{1,0:T(8,128)}', space=vmem, size = 0x4000, scoped, tag = 'scratch operand']
  %s0 = inlined_call_operand.vmem [shape: bf16[32,128], index: 0, kind: input, shape index: {}]
  %s1 = inlined_call_operand.vmem [shape: bf16[128,128], index: 1, kind: input, shape index: {}]
  %s2 = inlined_call_operand.vmem [shape: f32[1,128], index: 2, kind: input, shape index: {}]
  %s3 = inlined_call_operand.vmem [shape: bf16[32,128], index: 3, kind: output, shape index: {}]
  %s4 = sld [smem:[#allocation0]]
  $region30: #{_lambda_.71} parent=0
    _
  %s6 = ssub.s32 1, %s4
  %s7 = scalar_select 0, %s6, %s4
  // Predicated region
  $region2: #{_lambda_.71} parent=0 // pred_check
    _
  $region3: #{_lambda_.71} parent=0 // pred_check_branch
    %9 = sbr.rel (0) target = $region5
  $region4: #{_lambda_.71} parent=0 // pred_region
    _
  $region5: #{_lambda_.71} parent=0 // pred_fallthru
    _
  // Predicated region
  $region6: #{_lambda_.71} parent=0 // pred_check
    _
  $region7: #{_lambda_.71} parent=0 // pred_check_branch
    %11 = sbr.rel (0) target = $region9
  $region8: #{_lambda_.71} parent=0 // pred_region
    _
  $region9: #{_lambda_.71} parent=0 // pred_fallthru
    _
  // Predicated region
  $region10: #{_lambda_.71} parent=0 // pred_check
    _
  $region11: #{_lambda_.71} parent=0 // pred_check_branch
    %13 = sbr.rel (0) target = $region13
  $region12: #{_lambda_.71} parent=0 // pred_region
    _
  $region13: #{_lambda_.71} parent=0 // pred_fallthru
    _
  %p15 = scmp.eq.s32.totalorder 0, 0
  // Predicated region
  $region14: #{_lambda_.71} parent=0 // pred_check
    %p16 = pneg %p15
  $region15: #{_lambda_.71} parent=0 // pred_check_branch
    %18 = sbr.rel (%p16) target = $region17
  $region16: #{_lambda_.71} parent=0 // pred_region
    %19 = vst [vmem:[#allocation2] sm:$0xff] 0.0
    %20 = vst [vmem:[#allocation2 + $0x8] sm:$0xff] 0.0
    %21 = vst [vmem:[#allocation2 + $0x10] sm:$0xff] 0.0
    %22 = vst [vmem:[#allocation2 + $0x18] sm:$0xff] 0.0
  $region17: #{_lambda_.71} parent=0 // pred_fallthru
    _
  %v23 = vld [vmem:[#allocation2] sm:$0xff]
  %v24 = vld [vmem:[#allocation2 + $0x8] sm:$0xff]
  %v25 = vld [vmem:[#allocation2 + $0x10] sm:$0xff]
  %v26 = vld [vmem:[#allocation2 + $0x18] sm:$0xff]
  %v27 = vld [vmem:[%s0] sm:$0xf]
  %v28 = vld [vmem:[%s0 + $0x4] sm:$0xf]
  %v29 = vld [vmem:[%s0 + $0x8] sm:$0xf]
  %v30 = vld [vmem:[%s0 + $0xc] sm:$0xf]
  %v31 = vld [vmem:[%s1] sm:$0xf]
  %v32 = vld [vmem:[%s1 + $0x4] sm:$0xf]
  %v33 = vld [vmem:[%s1 + $0x8] sm:$0xf]
  %v34 = vld [vmem:[%s1 + $0xc] sm:$0xf]
  %v35 = vld [vmem:[%s1 + $0x10] sm:$0xf]
  %v36 = vld [vmem:[%s1 + $0x14] sm:$0xf]
  %v37 = vld [vmem:[%s1 + $0x18] sm:$0xf]
  %v38 = vld [vmem:[%s1 + $0x1c] sm:$0xf]
  %v39 = vld [vmem:[%s1 + $0x20] sm:$0xf]
  %v40 = vld [vmem:[%s1 + $0x24] sm:$0xf]
  %v41 = vld [vmem:[%s1 + $0x28] sm:$0xf]
  %v42 = vld [vmem:[%s1 + $0x2c] sm:$0xf]
  %v43 = vld [vmem:[%s1 + $0x30] sm:$0xf]
  %v44 = vld [vmem:[%s1 + $0x34] sm:$0xf]
  %v45 = vld [vmem:[%s1 + $0x38] sm:$0xf]
  %v46 = vld [vmem:[%s1 + $0x3c] sm:$0xf]
  %v51 = vunpack.c.l.b16 %v27
  %v52 = vunpack.c.l.b16 %v28
  %v53 = vunpack.c.l.b16 %v29
  %v54 = vunpack.c.l.b16 %v30
  %v55 = vpack.c.b16 %v52, %v51
  %v56 = vpack.c.b16 %v54, %v53
  %v75 = vunpack.c.l.b16 %v31
  %v76 = vunpack.c.l.b16 %v32
  %v77 = vunpack.c.l.b16 %v33
  %v78 = vunpack.c.l.b16 %v34
  %v79 = vunpack.c.l.b16 %v35
  %v80 = vunpack.c.l.b16 %v36
  %v81 = vunpack.c.l.b16 %v37
  %v82 = vunpack.c.l.b16 %v38
  %v83 = vunpack.c.l.b16 %v39
  %v84 = vunpack.c.l.b16 %v40
  %v85 = vunpack.c.l.b16 %v41
  %v86 = vunpack.c.l.b16 %v42
  %v87 = vunpack.c.l.b16 %v43
  %v88 = vunpack.c.l.b16 %v44
  %v89 = vunpack.c.l.b16 %v45
  %v90 = vunpack.c.l.b16 %v46
  %v91 = vpack.c.b16 %v76, %v75
  %v92 = vpack.c.b16 %v78, %v77
  %v93 = vpack.c.b16 %v80, %v79
  %v94 = vpack.c.b16 %v82, %v81
  %v95 = vpack.c.b16 %v84, %v83
  %v96 = vpack.c.b16 %v86, %v85
  %v97 = vpack.c.b16 %v88, %v87
  %v98 = vpack.c.b16 %v90, %v89
  %107 = vmatprep.subr.bf16.mxu0 0
  %108 = vmatpush1.bf16.msra.mxu0 %v98
  %109 = vmatprep.subr.bf16.mxu0 0
  %110 = vmatpush1.bf16.msra.mxu0 %v97
  %111 = vmatprep.subr.bf16.mxu0 0
  %112 = vmatpush1.bf16.msra.mxu0 %v96
  %113 = vmatprep.subr.bf16.mxu0 0
  %114 = vmatpush1.bf16.msra.mxu0 %v95
  %115 = vmatprep.subr.bf16.mxu0 0
  %116 = vmatpush1.bf16.msra.mxu0 %v94
  %117 = vmatprep.subr.bf16.mxu0 0
  %118 = vmatpush1.bf16.msra.mxu0 %v93
  %119 = vmatprep.subr.bf16.mxu0 0
  %120 = vmatpush1.bf16.msra.mxu0 %v92
  %121 = vmatprep.subr.bf16.mxu0 0
  %122 = vmatpush1.bf16.msra.mxu0 %v91
  %123 = vmatprep.subr.bf16.mxu0 0
  %124 = vmatpush2.bf16.msra.mxu0 0
  %125 = vmatprep.subr.bf16.mxu0 0
  %126 = vmatpush2.bf16.msra.mxu0 0
  %127 = vmatprep.subr.bf16.mxu0 0
  %128 = vmatpush2.bf16.msra.mxu0 0
  %129 = vmatprep.subr.bf16.mxu0 0
  %130 = vmatpush2.bf16.msra.mxu0 0
  %131 = vmatprep.subr.bf16.mxu0 0
  %132 = vmatpush2.bf16.msra.mxu0 0
  %133 = vmatprep.subr.bf16.mxu0 0
  %134 = vmatpush2.bf16.msra.mxu0 0
  %135 = vmatprep.subr.bf16.mxu0 0
  %136 = vmatpush2.bf16.msra.mxu0 0
  %137 = vmatprep.subr.bf16.mxu0 0
  %138 = vmatpush2.bf16.msra.mxu0 0
  %139 = vmatprep.mubr.bf16.mxu0 0
  %140 = vmatmul.mubr.bf16.gmra.mxu0 %v55
  %v141 = vpop.f32.mrf.mxu0
  %v142 = vadd.f32 0.0, %v141
  %v143 = vpop.f32.mrf.mxu0
  %v144 = vpop.f32.mrf.mxu0
  %v145 = vadd.f32 0.0, %v144
  %v146 = vpop.f32.mrf.mxu0
  %147 = vmatprep.mubr.bf16.mxu0 0
  %148 = vmatmul.mubr.bf16.gmra.mxu0 %v56
  %v149 = vpop.f32.mrf.mxu0
  %v150 = vadd.f32 0.0, %v149
  %v151 = vpop.f32.mrf.mxu0
  %v152 = vpop.f32.mrf.mxu0
  %v153 = vadd.f32 0.0, %v152
  %v154 = vpop.f32.mrf.mxu0
  %155 = vdwg.mxu0
  %v156 = vadd.f32 %v23, %v142
  %v157 = vadd.f32 %v24, %v145
  %v158 = vadd.f32 %v25, %v150
  %v159 = vadd.f32 %v26, %v153
  %160 = vst [vmem:[#allocation2] sm:$0xff] %v156
  %161 = vst [vmem:[#allocation2 + $0x8] sm:$0xff] %v157
  %162 = vst [vmem:[#allocation2 + $0x10] sm:$0xff] %v158
  %163 = vst [vmem:[#allocation2 + $0x18] sm:$0xff] %v159
  // Predicated region
  $region18: #{_lambda_.71} parent=0 // pred_check
    %p164 = pneg %p15
  $region19: #{_lambda_.71} parent=0 // pred_check_branch
    %166 = sbr.rel (%p164) target = $region21
  $region20: #{_lambda_.71} parent=0 // pred_region
    %v167 = vld [vmem:[#allocation2] sm:$0xff]
    %v168 = vld [vmem:[#allocation2 + $0x8] sm:$0xff]
    %v169 = vld [vmem:[#allocation2 + $0x10] sm:$0xff]
    %v170 = vld [vmem:[#allocation2 + $0x18] sm:$0xff]
    %v171 = vld [vmem:[%s2] sm:$0x1]
    %v173 = vlaneseq
    %v174 = vshrl.u32 %v173, 7
    %v175 = vsub.s32 0, %v174
    %v176 = vrot.slane %v171, %v175
    %v178 = vadd.f32 %v167, %v176
    %v179 = vadd.f32 %v168, %v176
    %v180 = vadd.f32 %v169, %v176
    %v181 = vadd.f32 %v170, %v176
    %v182 = vpack.c.bf16 %v179, %v178
    %v183 = vpack.c.bf16 %v181, %v180
    %v186 = vunpack.c.l.b16 %v182
    %v187 = vunpack.c.h.b16 %v182
    %v188 = vunpack.c.l.b16 %v183
    %v189 = vunpack.c.h.b16 %v183
    %v190 = vpack.c.b16 %v186, %v186
    %v191 = vpack.c.b16 %v187, %v187
    %v192 = vpack.c.b16 %v188, %v188
    %v193 = vpack.c.b16 %v189, %v189
    %198 = vst [vmem:[%s3] sm:$0xf] %v190
    %199 = vst [vmem:[%s3 + $0x4] sm:$0xf] %v191
    %200 = vst [vmem:[%s3 + $0x8] sm:$0xf] %v192
    %201 = vst [vmem:[%s3 + $0xc] sm:$0xf] %v193
  $region21: #{_lambda_.71} parent=0 // pred_fallthru
    _
  // Predicated region
  $region22: #{_lambda_.71} parent=0 // pred_check
    _
  $region23: #{_lambda_.71} parent=0 // pred_check_branch
    %203 = sbr.rel (0) target = $region25
  $region24: #{_lambda_.71} parent=0 // pred_region
    _
  $region25: #{_lambda_.71} parent=0 // pred_fallthru
    _
  // Predicated region
  $region26: #{_lambda_.71} parent=0 // pred_check
    _
  $region27: #{_lambda_.71} parent=0 // pred_check_branch
    %205 = sbr.rel (0) target = $region29
  $region28: #{_lambda_.71} parent=0 // pred_region
    _
  $region29: #{_lambda_.71} parent=0 // pred_fallthru
    _

</llo_original>
